<compile_context>
chip_gen: v7x
topology: tpu7x:2x2x1
jax: 0.10.0
libtpu: 0.0.40
codegen_flags: <defaults>
</compile_context>

<pallas_src>
import functools

import jax
import jax.numpy as jnp
from jax import lax
from jax.experimental import pallas as pl
from jax.experimental.pallas import tpu as pltpu

EPS = 1e-5  # nn.LayerNorm default eps


# --------------------------------------------------------------------------------------- #
# Kernel A: LayerNorm1 + per-direction LSTM input projection (tiled over T rows, parallel). #
# --------------------------------------------------------------------------------------- #
def ln_inproj_kernel(x_ref, g1_ref, b1_ref, wih_ref, bih_ref, xn_ref, xg_ref):
    x = x_ref[...]                                               # (rows, C), rows = Tt*B
    mu = jnp.mean(x, axis=-1, keepdims=True)
    var = jnp.mean(jnp.square(x - mu), axis=-1, keepdims=True)
    xn = (x - mu) * lax.rsqrt(var + EPS) * g1_ref[...] + b1_ref[...]
    xn_ref[...] = xn.astype(xn_ref.dtype)
    # Two (rows, C) @ (C, 4H) dots, one per direction; bias = b_ih + b_hh folded in.
    xg_ref[0] = (jnp.dot(xn, wih_ref[0], preferred_element_type=jnp.float32)
                 + bih_ref[0]).astype(xg_ref.dtype)
    xg_ref[1] = (jnp.dot(xn, wih_ref[1], preferred_element_type=jnp.float32)
                 + bih_ref[1]).astype(xg_ref.dtype)


# --------------------------------------------------------------------------------------- #
# Kernel B: per-direction LSTM recurrence.  grid = (2, nT):                                #
#   axis 0 = direction ("parallel" -> one TensorCore each on v7x),                         #
#   axis 1 = T chunks ("arbitrary", (h, c) carry lives in VMEM scratch across chunks).     #
# --------------------------------------------------------------------------------------- #
def birnn_kernel(xg_ref, whh_ref, h_ref, h_sc, c_sc, *, hid, t_tile, unroll):
    d = pl.program_id(0)                          # 0 = forward, 1 = backward
    H = hid

    @pl.when(pl.program_id(1) == 0)
    def _():
        h_sc[...] = jnp.zeros_like(h_sc)
        c_sc[...] = jnp.zeros_like(c_sc)

    whh = whh_ref[...]                            # (H, 4H) this direction's recurrent weight

    def step(s, carry):
        h, c = carry                              # (B, H) f32
        # The BlockSpec already delivers chunks in processing order per direction; inside the
        # chunk the backward direction walks local rows Tt-1-s (== global time T-1-step).
        idx = (1 - d) * s + d * (t_tile - 1 - s)
        gates = (xg_ref[idx].astype(jnp.float32)
                 + jnp.dot(h, whh, preferred_element_type=jnp.float32))   # (B, 4H)
        sig = jax.nn.sigmoid(gates[:, :3 * H])    # [i | f | o]
        g = jnp.tanh(gates[:, 3 * H:])            # g
        i = sig[:, :H]
        f = sig[:, H:2 * H]
        o = sig[:, 2 * H:3 * H]
        c_new = f * c + i * g
        h_new = o * jnp.tanh(c_new)
        h_ref[idx] = h_new.astype(h_ref.dtype)
        return h_new, c_new

    h_fin, c_fin = lax.fori_loop(0, t_tile, step, (h_sc[...], c_sc[...]), unroll=unroll)
    h_sc[...] = h_fin                             # carry to the next T chunk
    c_sc[...] = c_fin


# --------------------------------------------------------------------------------------- #
# Kernel C: PReLU + Linear(2H->C) + LayerNorm2 + residuals (tiled over T rows, parallel).   #
# --------------------------------------------------------------------------------------- #
def proj_ln_out_kernel(h_ref, xn_ref, x_ref, alpha_ref, wp_ref, bp_ref,
                       g2_ref, b2_ref, out_ref):
    a = alpha_ref[...]                            # (1, 1) PReLU slope
    hf = h_ref[0].astype(jnp.float32)             # (rows, H)
    hb = h_ref[1].astype(jnp.float32)
    pre = jnp.concatenate([hf, hb], axis=-1)      # (rows, 2H) matches wproj column order
    pre = jnp.where(pre >= 0, pre, a * pre)       # PReLU (single shared slope)
    # TODO(synk): the two nn.Dropout layers are identity (eval mode); training parity is out of scope.
    proj = jnp.dot(pre, wp_ref[...], preferred_element_type=jnp.float32) + bp_ref[...]
    y = proj + xn_ref[...]                        # inner residual (post-LN1 input)
    mu = jnp.mean(y, axis=-1, keepdims=True)
    var = jnp.mean(jnp.square(y - mu), axis=-1, keepdims=True)
    yn = (y - mu) * lax.rsqrt(var + EPS) * g2_ref[...] + b2_ref[...]
    out_ref[...] = yn + x_ref[...]                # outer residual (raw input)


# --------------------------------------------------------------------------------------- #
# Wrapper-side weight prep, VMEM-aware tiling, and the three pallas_calls.                  #
# --------------------------------------------------------------------------------------- #
def _prep_dir_weights(wih, whh, bias):
    """PyTorch gate order [i,f,g,o] -> [i,f,o,g], pre-transposed for (M,K)@(K,N) MXU dots."""
    i, f, g, o = jnp.split(wih, 4, axis=0)                       # each (H, C)
    wih_t = jnp.concatenate([i, f, o, g], axis=0).T              # (C, 4H)
    hi, hf, hg, ho = jnp.split(whh, 4, axis=0)                   # each (H, H)
    whh_t = jnp.concatenate([hi, hf, ho, hg], axis=0).T          # (H, 4H)
    bi, bf, bg, bo = jnp.split(bias, 4, axis=1)                  # each (1, H); b_ih+b_hh fused
    b = jnp.concatenate([bi, bf, bo, bg], axis=1)                # (1, 4H)
    return wih_t, whh_t, b


def _vmem_budget_bytes():
    try:
        return int(pltpu.get_tpu_info().vmem_capacity_bytes)
    except Exception:
        return 64 << 20            # conservative default: v7x per-TensorCore VMEM


def _divisors(n):
    return [d for d in range(1, n + 1) if n % d == 0]


def _pick_t_tile(T, B, per_t_bytes, fixed_bytes, budget, need_row8):
    """Largest divisor of T whose double-buffered streaming footprint fits the VMEM budget."""
    cap = 0.55 * budget - fixed_bytes
    best = None
    for t in _divisors(T):
        if need_row8 and (t * B) % 8 != 0 and t != T:
            continue                                             # (8,128) rule on (Tt*B, .) blocks
        if 2 * per_t_bytes * t <= cap:
            best = t
    if best is None:                                             # fall back to smallest legal tile
        for t in _divisors(T):
            if (not need_row8) or (t * B) % 8 == 0 or t == T:
                best = t
                break
    return best if best is not None else T


def _compiler_params(semantics, stream_bytes, fixed_bytes, budget):
    limit = 2 * stream_bytes + fixed_bytes + (8 << 20)           # double-buffered streams + slack
    limit = int(min(max(limit, 32 << 20), 0.9 * budget))
    return pltpu.CompilerParams(dimension_semantics=semantics, vmem_limit_bytes=limit)


def global_attention_rnn(x, params, t_tile=None, stream_dtype=jnp.float32):
    """x: (B, C, T) float32 -> (B, C, T) float32 (GlobalAttentionRNN forward, eval mode)."""
    B, C, T = x.shape
    H = params['whh_f'].shape[1]
    f32 = jnp.float32
    isz = jnp.dtype(stream_dtype).itemsize
    budget = _vmem_budget_bytes()

    # ---- trace-time layout plumbing (free relative to the kernels) -------------------------
    x_flat = jnp.transpose(x, (2, 0, 1)).reshape(T * B, C)       # time-major dense rows
    wih_f, whh_f, b_f = _prep_dir_weights(params['wih_f'], params['whh_f'], params['bias_f'])
    wih_b, whh_b, b_b = _prep_dir_weights(params['wih_b'], params['whh_b'], params['bias_b'])
    wih_s = jnp.stack([wih_f, wih_b])                            # (2, C, 4H)
    bih_s = jnp.stack([b_f, b_b])                                # (2, 1, 4H)
    whh_s = jnp.stack([whh_f, whh_b])                            # (2, H, 4H)
    wp_t = params['wproj'].T                                     # (2H, C): rows [:H]=fwd, [H:]=bwd

    # ---- per-kernel T tiling from the actual per-time-step footprints ----------------------
    Bp = -(-B // 8) * 8                                          # sublane-padded batch (kernel B)
    per_t_a = 4 * (2 * B * C) + isz * (2 * B * 4 * H)            # x + xn + xg per time step
    fixed_a = 4 * (2 * C * 4 * H + 2 * 4 * H + 2 * C)
    per_t_b = isz * (Bp * 4 * H + Bp * H)                        # xg in + h out per time step
    fixed_b = 4 * (2 * H * 4 * H + 2 * Bp * H)
    per_t_c = isz * (2 * B * H) + 4 * (3 * B * C)                # h in + xn + x + out per step
    fixed_c = 4 * (2 * H * C + 4 * C + 1)

    if t_tile is not None:
        tt_a = tt_b = tt_c = t_tile
    else:
        tt_a = _pick_t_tile(T, B, per_t_a, fixed_a, budget, need_row8=True)
        tt_b = _pick_t_tile(T, B, per_t_b, fixed_b, budget, need_row8=False)
        tt_c = _pick_t_tile(T, B, per_t_c, fixed_c, budget, need_row8=True)
    for tt in (tt_a, tt_b, tt_c):
        assert T % tt == 0, (T, tt)
    n_a, n_b, n_c = T // tt_a, T // tt_b, T // tt_c

    def rep(arr):                                                # replicated, fetched once
        zeros = (0,) * arr.ndim
        return pl.BlockSpec(arr.shape, lambda *_: zeros)

    # ---- A) LN1 + per-direction input projection -------------------------------------------
    xn_flat, xg_flat = pl.pallas_call(
        ln_inproj_kernel,
        out_shape=(jax.ShapeDtypeStruct((T * B, C), f32),
                   jax.ShapeDtypeStruct((2, T * B, 4 * H), stream_dtype)),
        grid=(n_a,),
        in_specs=[pl.BlockSpec((tt_a * B, C), lambda i: (i, 0)),
                  rep(params['g1']), rep(params['b1']), rep(wih_s), rep(bih_s)],
        out_specs=(pl.BlockSpec((tt_a * B, C), lambda i: (i, 0)),
                   pl.BlockSpec((2, tt_a * B, 4 * H), lambda i: (0, i, 0))),
        compiler_params=_compiler_params(("parallel",), per_t_a * tt_a, fixed_a, budget),
    )(x_flat, params['g1'], params['b1'], wih_s, bih_s)

    # ---- B) per-direction LSTM recurrence (fwd stream forward, bwd stream reversed) --------
    xg4 = xg_flat.reshape(2, T, B, 4 * H)                        # free (splits a row axis)

    step_vregs = -(-B // 8) * ((4 * H + 127) // 128 + 2 * ((H + 127) // 128))
    unroll = max(1, min(8, tt_b, 32 // max(1, step_vregs)))      # keep live gates under 64 vregs

    def dir_time(d, t):
        # forward consumes chunks 0..nT-1 in order; backward consumes them reversed.
        return (1 - d) * t + d * (n_b - 1 - t)

    h4 = pl.pallas_call(
        functools.partial(birnn_kernel, hid=H, t_tile=tt_b, unroll=unroll),
        out_shape=jax.ShapeDtypeStruct((2, T, B, H), stream_dtype),
        grid=(2, n_b),
        in_specs=[pl.BlockSpec((None, tt_b, B, 4 * H),
                               lambda d, t: (d, dir_time(d, t), 0, 0)),
                  pl.BlockSpec((None, H, 4 * H), lambda d, t: (d, 0, 0))],
        out_specs=pl.BlockSpec((None, tt_b, B, H),
                               lambda d, t: (d, dir_time(d, t), 0, 0)),
        scratch_shapes=[pltpu.VMEM((B, H), f32),                 # h carry (per core / direction)
                        pltpu.VMEM((B, H), f32)],                # c carry
        compiler_params=_compiler_params(("parallel", "arbitrary"),
                                         per_t_b * tt_b, fixed_b, budget),
    )(xg4, whh_s)

    # ---- C) PReLU + fused Linear(2H->C) + LN2 + residuals -----------------------------------
    h_flat = h4.reshape(2, T * B, H)                             # free (merges row axes)

    y_flat = pl.pallas_call(
        proj_ln_out_kernel,
        out_shape=jax.ShapeDtypeStruct((T * B, C), f32),
        grid=(n_c,),
        in_specs=[pl.BlockSpec((2, tt_c * B, H), lambda i: (0, i, 0)),
                  pl.BlockSpec((tt_c * B, C), lambda i: (i, 0)),
                  pl.BlockSpec((tt_c * B, C), lambda i: (i, 0)),
                  rep(params['prelu']), rep(wp_t), rep(params['bproj']),
                  rep(params['g2']), rep(params['b2'])],
        out_specs=pl.BlockSpec((tt_c * B, C), lambda i: (i, 0)),
        compiler_params=_compiler_params(("parallel",), per_t_c * tt_c, fixed_c, budget),
    )(h_flat, xn_flat, x_flat, params['prelu'], wp_t, params['bproj'],
      params['g2'], params['b2'])

    return jnp.transpose(y_flat.reshape(T, B, C), (1, 2, 0))     # (B, C, T)


# --------------------------------------------------------------------------------------- #
# Parameter init (PyTorch-layout shapes) and a pure-JAX reference for verification.         #
# --------------------------------------------------------------------------------------- #
def init_params(key, C, H):
    ks = jax.random.split(key, 8)
    s_rnn = 1.0 / float(jnp.sqrt(H))
    s_lin = 1.0 / float(jnp.sqrt(2 * H))

    def u(k, shape, scale):
        return jax.random.uniform(k, shape, jnp.float32, -scale, scale)

    return dict(
        g1=jnp.ones((1, C), jnp.float32), b1=jnp.zeros((1, C), jnp.float32),
        wih_f=u(ks[0], (4 * H, C), s_rnn),
        whh_f=u(ks[1], (4 * H, H), s_rnn),
        bias_f=u(ks[2], (1, 4 * H), s_rnn),          # NOTE: b_ih + b_hh pre-summed
        wih_b=u(ks[3], (4 * H, C), s_rnn),
        whh_b=u(ks[4], (4 * H, H), s_rnn),
        bias_b=u(ks[5], (1, 4 * H), s_rnn),          # NOTE: b_ih + b_hh pre-summed
        prelu=jnp.full((1, 1), 0.25, jnp.float32),
        wproj=u(ks[6], (C, 2 * H), s_lin),
        bproj=u(ks[7], (1, C), s_lin),
        g2=jnp.ones((1, C), jnp.float32), b2=jnp.zeros((1, C), jnp.float32),
    )


def _reference(x, params):
    """Pure-JAX mirror of the PyTorch module (eval mode)."""
    B, C, T = x.shape
    H = params['whh_f'].shape[1]
    hp = jax.lax.Precision.HIGHEST
    xt = jnp.transpose(x, (2, 0, 1))
    mu = xt.mean(-1, keepdims=True)
    var = ((xt - mu) ** 2).mean(-1, keepdims=True)
    xn = (xt - mu) / jnp.sqrt(var + EPS) * params['g1'] + params['b1']

    def lstm_scan(wih, whh, bias, seq):
        def step(carry, x_t):
            h, c = carry
            gates = (jnp.dot(x_t, wih.T, precision=hp)
                     + jnp.dot(h, whh.T, precision=hp) + bias)
            i = jax.nn.sigmoid(gates[:, :H])
            f = jax.nn.sigmoid(gates[:, H:2 * H])
            g = jnp.tanh(gates[:, 2 * H:3 * H])
            o = jax.nn.sigmoid(gates[:, 3 * H:])
            c = f * c + i * g
            h = o * jnp.tanh(c)
            return (h, c), h
        z = jnp.zeros((B, H), jnp.float32)
        _, hs = lax.scan(step, (z, z), seq)
        return hs

    hf = lstm_scan(params['wih_f'], params['whh_f'], params['bias_f'], xn)
    hb = lstm_scan(params['wih_b'], params['whh_b'], params['bias_b'], xn[::-1])[::-1]
    h = jnp.concatenate([hf, hb], axis=-1)
    a = params['prelu'][0, 0]
    pre = jnp.where(h >= 0, h, a * h)
    proj = jnp.dot(pre, params['wproj'].T, precision=hp) + params['bproj']
    y = proj + xn
    mu2 = y.mean(-1, keepdims=True)
    var2 = ((y - mu2) ** 2).mean(-1, keepdims=True)
    yn = (y - mu2) / jnp.sqrt(var2 + EPS) * params['g2'] + params['b2']
    return jnp.transpose(yn + xt, (1, 2, 0))


if __name__ == "__main__":
    key = jax.random.PRNGKey(0)
    B, C, T, H = 2, 16, 16, 32          # batch, in_chan, time, hid_chan (demo scale)
    kx, kp = jax.random.split(key)
    x = jax.random.normal(kx, (B, C, T), jnp.float32)
    params = init_params(kp, C, H)

    # t_tile=8 -> 2 time chunks per kernel so the carried (h, c) state and the reversed
    # backward streaming across chunks are both exercised.
    fn = jax.jit(functools.partial(global_attention_rnn, t_tile=8))
    out = fn(x, params)
    jax.block_until_ready(out)

    assert out.shape == (B, C, T), out.shape
    assert bool(jnp.all(jnp.isfinite(out)))

    ref = _reference(x, params)
    max_err = float(jnp.max(jnp.abs(out - ref)))
    assert max_err < 1e-3, f"mismatch vs pure-JAX reference: {max_err}"

    print("KERNEL_OK")
</pallas_src>

<mosaic_0001>
module attributes {stable_mosaic.version = 11 : i64} {
  func.func @ln_inproj_kernel(%arg0: i32, %arg1: memref<16x16xf32, #tpu.memory_space<vmem>>, %arg2: memref<1x16xf32, #tpu.memory_space<vmem>>, %arg3: memref<1x16xf32, #tpu.memory_space<vmem>>, %arg4: memref<2x16x128xf32, #tpu.memory_space<vmem>>, %arg5: memref<2x1x128xf32, #tpu.memory_space<vmem>>, %arg6: memref<16x16xf32, #tpu.memory_space<vmem>>, %arg7: memref<2x16x128xf32, #tpu.memory_space<vmem>>) attributes {dimension_semantics = [#tpu.dimension_semantics<parallel>], iteration_bounds = array<i64: 2>, scalar_prefetch = 0 : i64, scratch_operands = 0 : i64, tpu.core_type = #tpu.core_type<tc>, window_params = [{transform_indices = @transform_0, window_bounds = array<i64: 16, 16>}, {pipeline_mode = #tpu.pipeline_mode<synchronous>, transform_indices = @transform_1, window_bounds = array<i64: 1, 16>}, {pipeline_mode = #tpu.pipeline_mode<synchronous>, transform_indices = @transform_2, window_bounds = array<i64: 1, 16>}, {pipeline_mode = #tpu.pipeline_mode<synchronous>, transform_indices = @transform_3, window_bounds = array<i64: 2, 16, 128>}, {pipeline_mode = #tpu.pipeline_mode<synchronous>, transform_indices = @transform_4, window_bounds = array<i64: 2, 1, 128>}, {transform_indices = @transform_5, window_bounds = array<i64: 16, 16>}, {transform_indices = @transform_6, window_bounds = array<i64: 2, 16, 128>}]} {
    %c0 = arith.constant 0 : index
    %c0_0 = arith.constant 0 : index
    %0 = vector.load %arg1[%c0, %c0_0] : memref<16x16xf32, #tpu.memory_space<vmem>>, vector<16x16xf32>
    %cst = arith.constant dense<0.000000e+00> : vector<16xf32>
    %1 = vector.multi_reduction <add>, %0, %cst [1] : vector<16x16xf32> to vector<16xf32>
    %2 = vector.shape_cast %1 : vector<16xf32> to vector<16x1xf32>
    %cst_1 = arith.constant 1.600000e+01 : f32
    %3 = vector.broadcast %cst_1 : f32 to vector<16x1xf32>
    %4 = arith.divf %2, %3 : vector<16x1xf32>
    %5 = vector.broadcast %4 : vector<16x1xf32> to vector<16x16xf32>
    %6 = arith.subf %0, %5 : vector<16x16xf32>
    %7 = arith.mulf %6, %6 : vector<16x16xf32>
    %cst_2 = arith.constant dense<0.000000e+00> : vector<16xf32>
    %8 = vector.multi_reduction <add>, %7, %cst_2 [1] : vector<16x16xf32> to vector<16xf32>
    %9 = vector.shape_cast %8 : vector<16xf32> to vector<16x1xf32>
    %cst_3 = arith.constant 1.600000e+01 : f32
    %10 = vector.broadcast %cst_3 : f32 to vector<16x1xf32>
    %11 = arith.divf %9, %10 : vector<16x1xf32>
    %12 = vector.broadcast %4 : vector<16x1xf32> to vector<16x16xf32>
    %13 = arith.subf %0, %12 : vector<16x16xf32>
    %cst_4 = arith.constant 9.99999974E-6 : f32
    %14 = vector.broadcast %cst_4 : f32 to vector<16x1xf32>
    %15 = arith.addf %11, %14 : vector<16x1xf32>
    %16 = math.rsqrt %15 : vector<16x1xf32>
    %17 = vector.broadcast %16 : vector<16x1xf32> to vector<16x16xf32>
    %18 = arith.mulf %13, %17 : vector<16x16xf32>
    %c0_5 = arith.constant 0 : index
    %c0_6 = arith.constant 0 : index
    %19 = vector.load %arg2[%c0_5, %c0_6] : memref<1x16xf32, #tpu.memory_space<vmem>>, vector<1x16xf32>
    %20 = vector.broadcast %19 : vector<1x16xf32> to vector<16x16xf32>
    %21 = arith.mulf %18, %20 : vector<16x16xf32>
    %c0_7 = arith.constant 0 : index
    %c0_8 = arith.constant 0 : index
    %22 = vector.load %arg3[%c0_7, %c0_8] : memref<1x16xf32, #tpu.memory_space<vmem>>, vector<1x16xf32>
    %23 = vector.broadcast %22 : vector<1x16xf32> to vector<16x16xf32>
    %24 = arith.addf %21, %23 : vector<16x16xf32>
    %c0_9 = arith.constant 0 : index
    %c0_10 = arith.constant 0 : index
    %25 = vector.load %arg6[%c0_9, %c0_10] : memref<16x16xf32, #tpu.memory_space<vmem>>, vector<16x16xf32>
    tpu.vector_store %arg6[%c0_9, %c0_10], %24 {strides = array<i32>} : memref<16x16xf32, #tpu.memory_space<vmem>>, vector<16x16xf32>,
    %c0_11 = arith.constant 0 : index
    %c0_12 = arith.constant 0 : index
    %c0_13 = arith.constant 0 : index
    %26 = vector.load %arg4[%c0_11, %c0_12, %c0_13] : memref<2x16x128xf32, #tpu.memory_space<vmem>>, vector<1x16x128xf32>
    %27 = vector.shape_cast %26 : vector<1x16x128xf32> to vector<16x128xf32>
    %cst_14 = arith.constant dense<0.000000e+00> : vector<16x128xf32>
    %28 = tpu.matmul %24, %27, %cst_14 {dimension_numbers = #tpu.dot_dimension_numbers<[1], [0], [0], [1], [0, 0, 1, 1], [], []>} : vector<16x16xf32>, vector<16x128xf32>, vector<16x128xf32> -> vector<16x128xf32>
    %c0_15 = arith.constant 0 : index
    %c0_16 = arith.constant 0 : index
    %c0_17 = arith.constant 0 : index
    %29 = vector.load %arg5[%c0_15, %c0_16, %c0_17] : memref<2x1x128xf32, #tpu.memory_space<vmem>>, vector<1x1x128xf32>
    %30 = vector.shape_cast %29 : vector<1x1x128xf32> to vector<1x128xf32>
    %31 = vector.broadcast %30 : vector<1x128xf32> to vector<16x128xf32>
    %32 = arith.addf %28, %31 : vector<16x128xf32>
    %c0_18 = arith.constant 0 : index
    %c0_19 = arith.constant 0 : index
    %c0_20 = arith.constant 0 : index
    %33 = vector.load %arg7[%c0_18, %c0_19, %c0_20] : memref<2x16x128xf32, #tpu.memory_space<vmem>>, vector<1x16x128xf32>
    %34 = vector.shape_cast %33 : vector<1x16x128xf32> to vector<16x128xf32>
    %35 = vector.shape_cast %32 : vector<16x128xf32> to vector<1x16x128xf32>
    tpu.vector_store %arg7[%c0_18, %c0_19, %c0_20], %35 {strides = array<i32>} : memref<2x16x128xf32, #tpu.memory_space<vmem>>, vector<1x16x128xf32>,
    %c1 = arith.constant 1 : index
    %c0_21 = arith.constant 0 : index
    %c0_22 = arith.constant 0 : index
    %36 = vector.load %arg4[%c1, %c0_21, %c0_22] : memref<2x16x128xf32, #tpu.memory_space<vmem>>, vector<1x16x128xf32>
    %37 = vector.shape_cast %36 : vector<1x16x128xf32> to vector<16x128xf32>
    %cst_23 = arith.constant dense<0.000000e+00> : vector<16x128xf32>
    %38 = tpu.matmul %24, %37, %cst_23 {dimension_numbers = #tpu.dot_dimension_numbers<[1], [0], [0], [1], [0, 0, 1, 1], [], []>} : vector<16x16xf32>, vector<16x128xf32>, vector<16x128xf32> -> vector<16x128xf32>
    %c1_24 = arith.constant 1 : index
    %c0_25 = arith.constant 0 : index
    %c0_26 = arith.constant 0 : index
    %39 = vector.load %arg5[%c1_24, %c0_25, %c0_26] : memref<2x1x128xf32, #tpu.memory_space<vmem>>, vector<1x1x128xf32>
    %40 = vector.shape_cast %39 : vector<1x1x128xf32> to vector<1x128xf32>
    %41 = vector.broadcast %40 : vector<1x128xf32> to vector<16x128xf32>
    %42 = arith.addf %38, %41 : vector<16x128xf32>
    %c1_27 = arith.constant 1 : index
    %c0_28 = arith.constant 0 : index
    %c0_29 = arith.constant 0 : index
    %43 = vector.load %arg7[%c1_27, %c0_28, %c0_29] : memref<2x16x128xf32, #tpu.memory_space<vmem>>, vector<1x16x128xf32>
    %44 = vector.shape_cast %43 : vector<1x16x128xf32> to vector<16x128xf32>
    %45 = vector.shape_cast %42 : vector<16x128xf32> to vector<1x16x128xf32>
    tpu.vector_store %arg7[%c1_27, %c0_28, %c0_29], %45 {strides = array<i32>} : memref<2x16x128xf32, #tpu.memory_space<vmem>>, vector<1x16x128xf32>,
    return
  }
  func.func @transform_0(%arg0: i32) -> (i32, i32) {
    %c0_i32 = arith.constant 0 : i32
    %c0_i32_0 = arith.constant 0 : i32
    return %arg0, %c0_i32 : i32, i32
  }
  func.func @transform_1(%arg0: i32) -> (i32, i32) {
    %c0_i32 = arith.constant 0 : i32
    %c0_i32_0 = arith.constant 0 : i32
    %c0_i32_1 = arith.constant 0 : i32
    return %c0_i32, %c0_i32_0 : i32, i32
  }
  func.func @transform_2(%arg0: i32) -> (i32, i32) {
    %c0_i32 = arith.constant 0 : i32
    %c0_i32_0 = arith.constant 0 : i32
    %c0_i32_1 = arith.constant 0 : i32
    return %c0_i32, %c0_i32_0 : i32, i32
  }
  func.func @transform_3(%arg0: i32) -> (i32, i32, i32) {
    %c0_i32 = arith.constant 0 : i32
    %c0_i32_0 = arith.constant 0 : i32
    %c0_i32_1 = arith.constant 0 : i32
    %c0_i32_2 = arith.constant 0 : i32
    return %c0_i32, %c0_i32_0, %c0_i32_1 : i32, i32, i32
  }
  func.func @transform_4(%arg0: i32) -> (i32, i32, i32) {
    %c0_i32 = arith.constant 0 : i32
    %c0_i32_0 = arith.constant 0 : i32
    %c0_i32_1 = arith.constant 0 : i32
    %c0_i32_2 = arith.constant 0 : i32
    return %c0_i32, %c0_i32_0, %c0_i32_1 : i32, i32, i32
  }
  func.func @transform_5(%arg0: i32) -> (i32, i32) {
    %c0_i32 = arith.constant 0 : i32
    %c0_i32_0 = arith.constant 0 : i32
    return %arg0, %c0_i32 : i32, i32
  }
  func.func @transform_6(%arg0: i32) -> (i32, i32, i32) {
    %c0_i32 = arith.constant 0 : i32
    %c0_i32_0 = arith.constant 0 : i32
    %c0_i32_1 = arith.constant 0 : i32
    return %c0_i32, %arg0, %c0_i32_0 : i32, i32, i32
  }
}

module attributes {stable_mosaic.version = 11 : i64} {
  func.func @birnn_kernel(%arg0: i32, %arg1: i32, %arg2: memref<1x8x2x128xf32, #tpu.memory_space<vmem>>, %arg3: memref<1x32x128xf32, #tpu.memory_space<vmem>>, %arg4: memref<1x8x2x32xf32, #tpu.memory_space<vmem>>, %arg5: memref<2x32xf32, #tpu.memory_space<vmem>>, %arg6: memref<2x32xf32, #tpu.memory_space<vmem>>) attributes {dimension_semantics = [#tpu.dimension_semantics<parallel>, #tpu.dimension_semantics<arbitrary>], iteration_bounds = array<i64: 2, 2>, scalar_prefetch = 0 : i64, scratch_operands = 2 : i64, tpu.core_type = #tpu.core_type<tc>, window_params = [{transform_indices = @transform_0, window_bounds = array<i64: 1, 8, 2, 128>}, {transform_indices = @transform_1, window_bounds = array<i64: 1, 32, 128>}, {transform_indices = @transform_2, window_bounds = array<i64: 1, 8, 2, 32>}]} {
    %c0_i32 = arith.constant 0 : i32
    %0 = arith.cmpi eq, %arg1, %c0_i32 : i32
    %1 = arith.extui %0 : i1 to i32
    %c0_i32_0 = arith.constant 0 : i32
    %2 = arith.cmpi ne, %1, %c0_i32_0 : i32
    scf.if %2 {
      %cst_91 = arith.constant 0.000000e+00 : f32
      %249 = vector.broadcast %cst_91 : f32 to vector<2x32xf32>
      %c0_92 = arith.constant 0 : index
      %c0_93 = arith.constant 0 : index
      %250 = vector.load %arg5[%c0_92, %c0_93] : memref<2x32xf32, #tpu.memory_space<vmem>>, vector<2x32xf32>
      tpu.vector_store %arg5[%c0_92, %c0_93], %249 {strides = array<i32>} : memref<2x32xf32, #tpu.memory_space<vmem>>, vector<2x32xf32>,
      %cst_94 = arith.constant 0.000000e+00 : f32
      %251 = vector.broadcast %cst_94 : f32 to vector<2x32xf32>
      %c0_95 = arith.constant 0 : index
      %c0_96 = arith.constant 0 : index
      %252 = vector.load %arg6[%c0_95, %c0_96] : memref<2x32xf32, #tpu.memory_space<vmem>>, vector<2x32xf32>
      tpu.vector_store %arg6[%c0_95, %c0_96], %251 {strides = array<i32>} : memref<2x32xf32, #tpu.memory_space<vmem>>, vector<2x32xf32>,
    } else {
    }
    %c0 = arith.constant 0 : index
    %c0_1 = arith.constant 0 : index
    %c0_2 = arith.constant 0 : index
    %3 = vector.load %arg3[%c0, %c0_1, %c0_2] : memref<1x32x128xf32, #tpu.memory_space<vmem>>, vector<1x32x128xf32>
    %4 = vector.shape_cast %3 : vector<1x32x128xf32> to vector<32x128xf32>
    %c0_3 = arith.constant 0 : index
    %c0_4 = arith.constant 0 : index
    %5 = vector.load %arg5[%c0_3, %c0_4] : memref<2x32xf32, #tpu.memory_space<vmem>>, vector<2x32xf32>
    %c0_5 = arith.constant 0 : index
    %c0_6 = arith.constant 0 : index
    %6 = vector.load %arg6[%c0_5, %c0_6] : memref<2x32xf32, #tpu.memory_space<vmem>>, vector<2x32xf32>
    %c0_i32_7 = arith.constant 0 : i32
    %c1_i32 = arith.constant 1 : i32
    %7 = arith.subi %c1_i32, %arg0 : i32
    %8 = arith.muli %7, %c0_i32_7 : i32
    %c7_i32 = arith.constant 7 : i32
    %9 = arith.subi %c7_i32, %c0_i32_7 : i32
    %10 = arith.muli %arg0, %9 : i32
    %11 = arith.addi %8, %10 : i32
    %c0_8 = arith.constant 0 : index
    %12 = arith.index_cast %11 : i32 to index
    %c0_9 = arith.constant 0 : index
    %c0_10 = arith.constant 0 : index
    %13 = vector.load %arg2[%c0_8, %12, %c0_9, %c0_10] : memref<1x8x2x128xf32, #tpu.memory_space<vmem>>, vector<1x1x2x128xf32>
    %14 = vector.shape_cast %13 : vector<1x1x2x128xf32> to vector<2x128xf32>
    %cst = arith.constant dense<0.000000e+00> : vector<2x128xf32>
    %15 = tpu.matmul %5, %4, %cst {dimension_numbers = #tpu.dot_dimension_numbers<[1], [0], [0], [1], [0, 0, 1, 1], [], []>} : vector<2x32xf32>, vector<32x128xf32>, vector<2x128xf32> -> vector<2x128xf32>
    %16 = arith.addf %14, %15 : vector<2x128xf32>
    %17 = vector.extract_strided_slice %16 {offsets = [0, 0], sizes = [2, 96], strides = [1, 1]} : vector<2x128xf32> to vector<2x96xf32>
    %18 = arith.negf %17 : vector<2x96xf32>
    %19 = math.exp %18 : vector<2x96xf32>
    %cst_11 = arith.constant 1.000000e+00 : f32
    %20 = vector.broadcast %cst_11 : f32 to vector<2x96xf32>
    %21 = arith.addf %20, %19 : vector<2x96xf32>
    %22 = arith.divf %20, %21 : vector<2x96xf32>
    %23 = vector.extract_strided_slice %16 {offsets = [0, 96], sizes = [2, 32], strides = [1, 1]} : vector<2x128xf32> to vector<2x32xf32>
    %24 = math.tanh %23 : vector<2x32xf32>
    %25 = vector.extract_strided_slice %22 {offsets = [0, 0], sizes = [2, 32], strides = [1, 1]} : vector<2x96xf32> to vector<2x32xf32>
    %26 = vector.extract_strided_slice %22 {offsets = [0, 32], sizes = [2, 32], strides = [1, 1]} : vector<2x96xf32> to vector<2x32xf32>
    %27 = vector.extract_strided_slice %22 {offsets = [0, 64], sizes = [2, 32], strides = [1, 1]} : vector<2x96xf32> to vector<2x32xf32>
    %28 = arith.mulf %26, %6 : vector<2x32xf32>
    %29 = arith.mulf %25, %24 : vector<2x32xf32>
    %30 = arith.addf %28, %29 : vector<2x32xf32>
    %31 = math.tanh %30 : vector<2x32xf32>
    %32 = arith.mulf %27, %31 : vector<2x32xf32>
    %c0_12 = arith.constant 0 : index
    %33 = arith.index_cast %11 : i32 to index
    %c0_13 = arith.constant 0 : index
    %c0_14 = arith.constant 0 : index
    %34 = vector.load %arg4[%c0_12, %33, %c0_13, %c0_14] : memref<1x8x2x32xf32, #tpu.memory_space<vmem>>, vector<1x1x2x32xf32>
    %35 = vector.shape_cast %34 : vector<1x1x2x32xf32> to vector<2x32xf32>
    %36 = vector.shape_cast %32 : vector<2x32xf32> to vector<1x1x2x32xf32>
    tpu.vector_store %arg4[%c0_12, %33, %c0_13, %c0_14], %36 {strides = array<i32>} : memref<1x8x2x32xf32, #tpu.memory_space<vmem>>, vector<1x1x2x32xf32>,
    %c1_i32_15 = arith.constant 1 : i32
    %c1_i32_16 = arith.constant 1 : i32
    %37 = arith.subi %c1_i32_16, %arg0 : i32
    %38 = arith.muli %37, %c1_i32_15 : i32
    %c7_i32_17 = arith.constant 7 : i32
    %39 = arith.subi %c7_i32_17, %c1_i32_15 : i32
    %40 = arith.muli %arg0, %39 : i32
    %41 = arith.addi %38, %40 : i32
    %c0_18 = arith.constant 0 : index
    %42 = arith.index_cast %41 : i32 to index
    %c0_19 = arith.constant 0 : index
    %c0_20 = arith.constant 0 : index
    %43 = vector.load %arg2[%c0_18, %42, %c0_19, %c0_20] : memref<1x8x2x128xf32, #tpu.memory_space<vmem>>, vector<1x1x2x128xf32>
    %44 = vector.shape_cast %43 : vector<1x1x2x128xf32> to vector<2x128xf32>
    %cst_21 = arith.constant dense<0.000000e+00> : vector<2x128xf32>
    %45 = tpu.matmul %32, %4, %cst_21 {dimension_numbers = #tpu.dot_dimension_numbers<[1], [0], [0], [1], [0, 0, 1, 1], [], []>} : vector<2x32xf32>, vector<32x128xf32>, vector<2x128xf32> -> vector<2x128xf32>
    %46 = arith.addf %44, %45 : vector<2x128xf32>
    %47 = vector.extract_strided_slice %46 {offsets = [0, 0], sizes = [2, 96], strides = [1, 1]} : vector<2x128xf32> to vector<2x96xf32>
    %48 = arith.negf %47 : vector<2x96xf32>
    %49 = math.exp %48 : vector<2x96xf32>
    %cst_22 = arith.constant 1.000000e+00 : f32
    %50 = vector.broadcast %cst_22 : f32 to vector<2x96xf32>
    %51 = arith.addf %50, %49 : vector<2x96xf32>
    %52 = arith.divf %50, %51 : vector<2x96xf32>
    %53 = vector.extract_strided_slice %46 {offsets = [0, 96], sizes = [2, 32], strides = [1, 1]} : vector<2x128xf32> to vector<2x32xf32>
    %54 = math.tanh %53 : vector<2x32xf32>
    %55 = vector.extract_strided_slice %52 {offsets = [0, 0], sizes = [2, 32], strides = [1, 1]} : vector<2x96xf32> to vector<2x32xf32>
    %56 = vector.extract_strided_slice %52 {offsets = [0, 32], sizes = [2, 32], strides = [1, 1]} : vector<2x96xf32> to vector<2x32xf32>
    %57 = vector.extract_strided_slice %52 {offsets = [0, 64], sizes = [2, 32], strides = [1, 1]} : vector<2x96xf32> to vector<2x32xf32>
    %58 = arith.mulf %56, %30 : vector<2x32xf32>
    %59 = arith.mulf %55, %54 : vector<2x32xf32>
    %60 = arith.addf %58, %59 : vector<2x32xf32>
    %61 = math.tanh %60 : vector<2x32xf32>
    %62 = arith.mulf %57, %61 : vector<2x32xf32>
    %c0_23 = arith.constant 0 : index
    %63 = arith.index_cast %41 : i32 to index
    %c0_24 = arith.constant 0 : index
    %c0_25 = arith.constant 0 : index
    %64 = vector.load %arg4[%c0_23, %63, %c0_24, %c0_25] : memref<1x8x2x32xf32, #tpu.memory_space<vmem>>, vector<1x1x2x32xf32>
    %65 = vector.shape_cast %64 : vector<1x1x2x32xf32> to vector<2x32xf32>
    %66 = vector.shape_cast %62 : vector<2x32xf32> to vector<1x1x2x32xf32>
    tpu.vector_store %arg4[%c0_23, %63, %c0_24, %c0_25], %66 {strides = array<i32>} : memref<1x8x2x32xf32, #tpu.memory_space<vmem>>, vector<1x1x2x32xf32>,
    %c2_i32 = arith.constant 2 : i32
    %c1_i32_26 = arith.constant 1 : i32
    %67 = arith.subi %c1_i32_26, %arg0 : i32
    %68 = arith.muli %67, %c2_i32 : i32
    %c7_i32_27 = arith.constant 7 : i32
    %69 = arith.subi %c7_i32_27, %c2_i32 : i32
    %70 = arith.muli %arg0, %69 : i32
    %71 = arith.addi %68, %70 : i32
    %c0_28 = arith.constant 0 : index
    %72 = arith.index_cast %71 : i32 to index
    %c0_29 = arith.constant 0 : index
    %c0_30 = arith.constant 0 : index
    %73 = vector.load %arg2[%c0_28, %72, %c0_29, %c0_30] : memref<1x8x2x128xf32, #tpu.memory_space<vmem>>, vector<1x1x2x128xf32>
    %74 = vector.shape_cast %73 : vector<1x1x2x128xf32> to vector<2x128xf32>
    %cst_31 = arith.constant dense<0.000000e+00> : vector<2x128xf32>
    %75 = tpu.matmul %62, %4, %cst_31 {dimension_numbers = #tpu.dot_dimension_numbers<[1], [0], [0], [1], [0, 0, 1, 1], [], []>} : vector<2x32xf32>, vector<32x128xf32>, vector<2x128xf32> -> vector<2x128xf32>
    %76 = arith.addf %74, %75 : vector<2x128xf32>
    %77 = vector.extract_strided_slice %76 {offsets = [0, 0], sizes = [2, 96], strides = [1, 1]} : vector<2x128xf32> to vector<2x96xf32>
    %78 = arith.negf %77 : vector<2x96xf32>
    %79 = math.exp %78 : vector<2x96xf32>
    %cst_32 = arith.constant 1.000000e+00 : f32
    %80 = vector.broadcast %cst_32 : f32 to vector<2x96xf32>
    %81 = arith.addf %80, %79 : vector<2x96xf32>
    %82 = arith.divf %80, %81 : vector<2x96xf32>
    %83 = vector.extract_strided_slice %76 {offsets = [0, 96], sizes = [2, 32], strides = [1, 1]} : vector<2x128xf32> to vector<2x32xf32>
    %84 = math.tanh %83 : vector<2x32xf32>
    %85 = vector.extract_strided_slice %82 {offsets = [0, 0], sizes = [2, 32], strides = [1, 1]} : vector<2x96xf32> to vector<2x32xf32>
    %86 = vector.extract_strided_slice %82 {offsets = [0, 32], sizes = [2, 32], strides = [1, 1]} : vector<2x96xf32> to vector<2x32xf32>
    %87 = vector.extract_strided_slice %82 {offsets = [0, 64], sizes = [2, 32], strides = [1, 1]} : vector<2x96xf32> to vector<2x32xf32>
    %88 = arith.mulf %86, %60 : vector<2x32xf32>
    %89 = arith.mulf %85, %84 : vector<2x32xf32>
    %90 = arith.addf %88, %89 : vector<2x32xf32>
    %91 = math.tanh %90 : vector<2x32xf32>
    %92 = arith.mulf %87, %91 : vector<2x32xf32>
    %c0_33 = arith.constant 0 : index
    %93 = arith.index_cast %71 : i32 to index
    %c0_34 = arith.constant 0 : index
    %c0_35 = arith.constant 0 : index
    %94 = vector.load %arg4[%c0_33, %93, %c0_34, %c0_35] : memref<1x8x2x32xf32, #tpu.memory_space<vmem>>, vector<1x1x2x32xf32>
    %95 = vector.shape_cast %94 : vector<1x1x2x32xf32> to vector<2x32xf32>
    %96 = vector.shape_cast %92 : vector<2x32xf32> to vector<1x1x2x32xf32>
    tpu.vector_store %arg4[%c0_33, %93, %c0_34, %c0_35], %96 {strides = array<i32>} : memref<1x8x2x32xf32, #tpu.memory_space<vmem>>, vector<1x1x2x32xf32>,
    %c3_i32 = arith.constant 3 : i32
    %c1_i32_36 = arith.constant 1 : i32
    %97 = arith.subi %c1_i32_36, %arg0 : i32
    %98 = arith.muli %97, %c3_i32 : i32
    %c7_i32_37 = arith.constant 7 : i32
    %99 = arith.subi %c7_i32_37, %c3_i32 : i32
    %100 = arith.muli %arg0, %99 : i32
    %101 = arith.addi %98, %100 : i32
    %c0_38 = arith.constant 0 : index
    %102 = arith.index_cast %101 : i32 to index
    %c0_39 = arith.constant 0 : index
    %c0_40 = arith.constant 0 : index
    %103 = vector.load %arg2[%c0_38, %102, %c0_39, %c0_40] : memref<1x8x2x128xf32, #tpu.memory_space<vmem>>, vector<1x1x2x128xf32>
    %104 = vector.shape_cast %103 : vector<1x1x2x128xf32> to vector<2x128xf32>
    %cst_41 = arith.constant dense<0.000000e+00> : vector<2x128xf32>
    %105 = tpu.matmul %92, %4, %cst_41 {dimension_numbers = #tpu.dot_dimension_numbers<[1], [0], [0], [1], [0, 0, 1, 1], [], []>} : vector<2x32xf32>, vector<32x128xf32>, vector<2x128xf32> -> vector<2x128xf32>
    %106 = arith.addf %104, %105 : vector<2x128xf32>
    %107 = vector.extract_strided_slice %106 {offsets = [0, 0], sizes = [2, 96], strides = [1, 1]} : vector<2x128xf32> to vector<2x96xf32>
    %108 = arith.negf %107 : vector<2x96xf32>
    %109 = math.exp %108 : vector<2x96xf32>
    %cst_42 = arith.constant 1.000000e+00 : f32
    %110 = vector.broadcast %cst_42 : f32 to vector<2x96xf32>
    %111 = arith.addf %110, %109 : vector<2x96xf32>
    %112 = arith.divf %110, %111 : vector<2x96xf32>
    %113 = vector.extract_strided_slice %106 {offsets = [0, 96], sizes = [2, 32], strides = [1, 1]} : vector<2x128xf32> to vector<2x32xf32>
    %114 = math.tanh %113 : vector<2x32xf32>
    %115 = vector.extract_strided_slice %112 {offsets = [0, 0], sizes = [2, 32], strides = [1, 1]} : vector<2x96xf32> to vector<2x32xf32>
    %116 = vector.extract_strided_slice %112 {offsets = [0, 32], sizes = [2, 32], strides = [1, 1]} : vector<2x96xf32> to vector<2x32xf32>
    %117 = vector.extract_strided_slice %112 {offsets = [0, 64], sizes = [2, 32], strides = [1, 1]} : vector<2x96xf32> to vector<2x32xf32>
    %118 = arith.mulf %116, %90 : vector<2x32xf32>
    %119 = arith.mulf %115, %114 : vector<2x32xf32>
    %120 = arith.addf %118, %119 : vector<2x32xf32>
    %121 = math.tanh %120 : vector<2x32xf32>
    %122 = arith.mulf %117, %121 : vector<2x32xf32>
    %c0_43 = arith.constant 0 : index
    %123 = arith.index_cast %101 : i32 to index
    %c0_44 = arith.constant 0 : index
    %c0_45 = arith.constant 0 : index
    %124 = vector.load %arg4[%c0_43, %123, %c0_44, %c0_45] : memref<1x8x2x32xf32, #tpu.memory_space<vmem>>, vector<1x1x2x32xf32>
    %125 = vector.shape_cast %124 : vector<1x1x2x32xf32> to vector<2x32xf32>
    %126 = vector.shape_cast %122 : vector<2x32xf32> to vector<1x1x2x32xf32>
    tpu.vector_store %arg4[%c0_43, %123, %c0_44, %c0_45], %126 {strides = array<i32>} : memref<1x8x2x32xf32, #tpu.memory_space<vmem>>, vector<1x1x2x32xf32>,
    %c4_i32 = arith.constant 4 : i32
    %c1_i32_46 = arith.constant 1 : i32
    %127 = arith.subi %c1_i32_46, %arg0 : i32
    %128 = arith.muli %127, %c4_i32 : i32
    %c7_i32_47 = arith.constant 7 : i32
    %129 = arith.subi %c7_i32_47, %c4_i32 : i32
    %130 = arith.muli %arg0, %129 : i32
    %131 = arith.addi %128, %130 : i32
    %c0_48 = arith.constant 0 : index
    %132 = arith.index_cast %131 : i32 to index
    %c0_49 = arith.constant 0 : index
    %c0_50 = arith.constant 0 : index
    %133 = vector.load %arg2[%c0_48, %132, %c0_49, %c0_50] : memref<1x8x2x128xf32, #tpu.memory_space<vmem>>, vector<1x1x2x128xf32>
    %134 = vector.shape_cast %133 : vector<1x1x2x128xf32> to vector<2x128xf32>
    %cst_51 = arith.constant dense<0.000000e+00> : vector<2x128xf32>
    %135 = tpu.matmul %122, %4, %cst_51 {dimension_numbers = #tpu.dot_dimension_numbers<[1], [0], [0], [1], [0, 0, 1, 1], [], []>} : vector<2x32xf32>, vector<32x128xf32>, vector<2x128xf32> -> vector<2x128xf32>
    %136 = arith.addf %134, %135 : vector<2x128xf32>
    %137 = vector.extract_strided_slice %136 {offsets = [0, 0], sizes = [2, 96], strides = [1, 1]} : vector<2x128xf32> to vector<2x96xf32>
    %138 = arith.negf %137 : vector<2x96xf32>
    %139 = math.exp %138 : vector<2x96xf32>
    %cst_52 = arith.constant 1.000000e+00 : f32
    %140 = vector.broadcast %cst_52 : f32 to vector<2x96xf32>
    %141 = arith.addf %140, %139 : vector<2x96xf32>
    %142 = arith.divf %140, %141 : vector<2x96xf32>
    %143 = vector.extract_strided_slice %136 {offsets = [0, 96], sizes = [2, 32], strides = [1, 1]} : vector<2x128xf32> to vector<2x32xf32>
    %144 = math.tanh %143 : vector<2x32xf32>
    %145 = vector.extract_strided_slice %142 {offsets = [0, 0], sizes = [2, 32], strides = [1, 1]} : vector<2x96xf32> to vector<2x32xf32>
    %146 = vector.extract_strided_slice %142 {offsets = [0, 32], sizes = [2, 32], strides = [1, 1]} : vector<2x96xf32> to vector<2x32xf32>
    %147 = vector.extract_strided_slice %142 {offsets = [0, 64], sizes = [2, 32], strides = [1, 1]} : vector<2x96xf32> to vector<2x32xf32>
    %148 = arith.mulf %146, %120 : vector<2x32xf32>
    %149 = arith.mulf %145, %144 : vector<2x32xf32>
    %150 = arith.addf %148, %149 : vector<2x32xf32>
    %151 = math.tanh %150 : vector<2x32xf32>
    %152 = arith.mulf %147, %151 : vector<2x32xf32>
    %c0_53 = arith.constant 0 : index
    %153 = arith.index_cast %131 : i32 to index
    %c0_54 = arith.constant 0 : index
    %c0_55 = arith.constant 0 : index
    %154 = vector.load %arg4[%c0_53, %153, %c0_54, %c0_55] : memref<1x8x2x32xf32, #tpu.memory_space<vmem>>, vector<1x1x2x32xf32>
    %155 = vector.shape_cast %154 : vector<1x1x2x32xf32> to vector<2x32xf32>
    %156 = vector.shape_cast %152 : vector<2x32xf32> to vector<1x1x2x32xf32>
    tpu.vector_store %arg4[%c0_53, %153, %c0_54, %c0_55], %156 {strides = array<i32>} : memref<1x8x2x32xf32, #tpu.memory_space<vmem>>, vector<1x1x2x32xf32>,
    %c5_i32 = arith.constant 5 : i32
    %c1_i32_56 = arith.constant 1 : i32
    %157 = arith.subi %c1_i32_56, %arg0 : i32
    %158 = arith.muli %157, %c5_i32 : i32
    %c7_i32_57 = arith.constant 7 : i32
    %159 = arith.subi %c7_i32_57, %c5_i32 : i32
    %160 = arith.muli %arg0, %159 : i32
    %161 = arith.addi %158, %160 : i32
    %c0_58 = arith.constant 0 : index
    %162 = arith.index_cast %161 : i32 to index
    %c0_59 = arith.constant 0 : index
    %c0_60 = arith.constant 0 : index
    %163 = vector.load %arg2[%c0_58, %162, %c0_59, %c0_60] : memref<1x8x2x128xf32, #tpu.memory_space<vmem>>, vector<1x1x2x128xf32>
    %164 = vector.shape_cast %163 : vector<1x1x2x128xf32> to vector<2x128xf32>
    %cst_61 = arith.constant dense<0.000000e+00> : vector<2x128xf32>
    %165 = tpu.matmul %152, %4, %cst_61 {dimension_numbers = #tpu.dot_dimension_numbers<[1], [0], [0], [1], [0, 0, 1, 1], [], []>} : vector<2x32xf32>, vector<32x128xf32>, vector<2x128xf32> -> vector<2x128xf32>
    %166 = arith.addf %164, %165 : vector<2x128xf32>
    %167 = vector.extract_strided_slice %166 {offsets = [0, 0], sizes = [2, 96], strides = [1, 1]} : vector<2x128xf32> to vector<2x96xf32>
    %168 = arith.negf %167 : vector<2x96xf32>
    %169 = math.exp %168 : vector<2x96xf32>
    %cst_62 = arith.constant 1.000000e+00 : f32
    %170 = vector.broadcast %cst_62 : f32 to vector<2x96xf32>
    %171 = arith.addf %170, %169 : vector<2x96xf32>
    %172 = arith.divf %170, %171 : vector<2x96xf32>
    %173 = vector.extract_strided_slice %166 {offsets = [0, 96], sizes = [2, 32], strides = [1, 1]} : vector<2x128xf32> to vector<2x32xf32>
    %174 = math.tanh %173 : vector<2x32xf32>
    %175 = vector.extract_strided_slice %172 {offsets = [0, 0], sizes = [2, 32], strides = [1, 1]} : vector<2x96xf32> to vector<2x32xf32>
    %176 = vector.extract_strided_slice %172 {offsets = [0, 32], sizes = [2, 32], strides = [1, 1]} : vector<2x96xf32> to vector<2x32xf32>
    %177 = vector.extract_strided_slice %172 {offsets = [0, 64], sizes = [2, 32], strides = [1, 1]} : vector<2x96xf32> to vector<2x32xf32>
    %178 = arith.mulf %176, %150 : vector<2x32xf32>
    %179 = arith.mulf %175, %174 : vector<2x32xf32>
    %180 = arith.addf %178, %179 : vector<2x32xf32>
    %181 = math.tanh %180 : vector<2x32xf32>
    %182 = arith.mulf %177, %181 : vector<2x32xf32>
    %c0_63 = arith.constant 0 : index
    %183 = arith.index_cast %161 : i32 to index
    %c0_64 = arith.constant 0 : index
    %c0_65 = arith.constant 0 : index
    %184 = vector.load %arg4[%c0_63, %183, %c0_64, %c0_65] : memref<1x8x2x32xf32, #tpu.memory_space<vmem>>, vector<1x1x2x32xf32>
    %185 = vector.shape_cast %184 : vector<1x1x2x32xf32> to vector<2x32xf32>
    %186 = vector.shape_cast %182 : vector<2x32xf32> to vector<1x1x2x32xf32>
    tpu.vector_store %arg4[%c0_63, %183, %c0_64, %c0_65], %186 {strides = array<i32>} : memref<1x8x2x32xf32, #tpu.memory_space<vmem>>, vector<1x1x2x32xf32>,
    %c6_i32 = arith.constant 6 : i32
    %c1_i32_66 = arith.constant 1 : i32
    %187 = arith.subi %c1_i32_66, %arg0 : i32
    %188 = arith.muli %187, %c6_i32 : i32
    %c7_i32_67 = arith.constant 7 : i32
    %189 = arith.subi %c7_i32_67, %c6_i32 : i32
    %190 = arith.muli %arg0, %189 : i32
    %191 = arith.addi %188, %190 : i32
    %c0_68 = arith.constant 0 : index
    %192 = arith.index_cast %191 : i32 to index
    %c0_69 = arith.constant 0 : index
    %c0_70 = arith.constant 0 : index
    %193 = vector.load %arg2[%c0_68, %192, %c0_69, %c0_70] : memref<1x8x2x128xf32, #tpu.memory_space<vmem>>, vector<1x1x2x128xf32>
    %194 = vector.shape_cast %193 : vector<1x1x2x128xf32> to vector<2x128xf32>
    %cst_71 = arith.constant dense<0.000000e+00> : vector<2x128xf32>
    %195 = tpu.matmul %182, %4, %cst_71 {dimension_numbers = #tpu.dot_dimension_numbers<[1], [0], [0], [1], [0, 0, 1, 1], [], []>} : vector<2x32xf32>, vector<32x128xf32>, vector<2x128xf32> -> vector<2x128xf32>
    %196 = arith.addf %194, %195 : vector<2x128xf32>
    %197 = vector.extract_strided_slice %196 {offsets = [0, 0], sizes = [2, 96], strides = [1, 1]} : vector<2x128xf32> to vector<2x96xf32>
    %198 = arith.negf %197 : vector<2x96xf32>
    %199 = math.exp %198 : vector<2x96xf32>
    %cst_72 = arith.constant 1.000000e+00 : f32
    %200 = vector.broadcast %cst_72 : f32 to vector<2x96xf32>
    %201 = arith.addf %200, %199 : vector<2x96xf32>
    %202 = arith.divf %200, %201 : vector<2x96xf32>
    %203 = vector.extract_strided_slice %196 {offsets = [0, 96], sizes = [2, 32], strides = [1, 1]} : vector<2x128xf32> to vector<2x32xf32>
    %204 = math.tanh %203 : vector<2x32xf32>
    %205 = vector.extract_strided_slice %202 {offsets = [0, 0], sizes = [2, 32], strides = [1, 1]} : vector<2x96xf32> to vector<2x32xf32>
    %206 = vector.extract_strided_slice %202 {offsets = [0, 32], sizes = [2, 32], strides = [1, 1]} : vector<2x96xf32> to vector<2x32xf32>
    %207 = vector.extract_strided_slice %202 {offsets = [0, 64], sizes = [2, 32], strides = [1, 1]} : vector<2x96xf32> to vector<2x32xf32>
    %208 = arith.mulf %206, %180 : vector<2x32xf32>
    %209 = arith.mulf %205, %204 : vector<2x32xf32>
    %210 = arith.addf %208, %209 : vector<2x32xf32>
    %211 = math.tanh %210 : vector<2x32xf32>
    %212 = arith.mulf %207, %211 : vector<2x32xf32>
    %c0_73 = arith.constant 0 : index
    %213 = arith.index_cast %191 : i32 to index
    %c0_74 = arith.constant 0 : index
    %c0_75 = arith.constant 0 : index
    %214 = vector.load %arg4[%c0_73, %213, %c0_74, %c0_75] : memref<1x8x2x32xf32, #tpu.memory_space<vmem>>, vector<1x1x2x32xf32>
    %215 = vector.shape_cast %214 : vector<1x1x2x32xf32> to vector<2x32xf32>
    %216 = vector.shape_cast %212 : vector<2x32xf32> to vector<1x1x2x32xf32>
    tpu.vector_store %arg4[%c0_73, %213, %c0_74, %c0_75], %216 {strides = array<i32>} : memref<1x8x2x32xf32, #tpu.memory_space<vmem>>, vector<1x1x2x32xf32>,
    %c7_i32_76 = arith.constant 7 : i32
    %c1_i32_77 = arith.constant 1 : i32
    %217 = arith.subi %c1_i32_77, %arg0 : i32
    %218 = arith.muli %217, %c7_i32_76 : i32
    %c7_i32_78 = arith.constant 7 : i32
    %219 = arith.subi %c7_i32_78, %c7_i32_76 : i32
    %220 = arith.muli %arg0, %219 : i32
    %221 = arith.addi %218, %220 : i32
    %c0_79 = arith.constant 0 : index
    %222 = arith.index_cast %221 : i32 to index
    %c0_80 = arith.constant 0 : index
    %c0_81 = arith.constant 0 : index
    %223 = vector.load %arg2[%c0_79, %222, %c0_80, %c0_81] : memref<1x8x2x128xf32, #tpu.memory_space<vmem>>, vector<1x1x2x128xf32>
    %224 = vector.shape_cast %223 : vector<1x1x2x128xf32> to vector<2x128xf32>
    %cst_82 = arith.constant dense<0.000000e+00> : vector<2x128xf32>
    %225 = tpu.matmul %212, %4, %cst_82 {dimension_numbers = #tpu.dot_dimension_numbers<[1], [0], [0], [1], [0, 0, 1, 1], [], []>} : vector<2x32xf32>, vector<32x128xf32>, vector<2x128xf32> -> vector<2x128xf32>
    %226 = arith.addf %224, %225 : vector<2x128xf32>
    %227 = vector.extract_strided_slice %226 {offsets = [0, 0], sizes = [2, 96], strides = [1, 1]} : vector<2x128xf32> to vector<2x96xf32>
    %228 = arith.negf %227 : vector<2x96xf32>
    %229 = math.exp %228 : vector<2x96xf32>
    %cst_83 = arith.constant 1.000000e+00 : f32
    %230 = vector.broadcast %cst_83 : f32 to vector<2x96xf32>
    %231 = arith.addf %230, %229 : vector<2x96xf32>
    %232 = arith.divf %230, %231 : vector<2x96xf32>
    %233 = vector.extract_strided_slice %226 {offsets = [0, 96], sizes = [2, 32], strides = [1, 1]} : vector<2x128xf32> to vector<2x32xf32>
    %234 = math.tanh %233 : vector<2x32xf32>
    %235 = vector.extract_strided_slice %232 {offsets = [0, 0], sizes = [2, 32], strides = [1, 1]} : vector<2x96xf32> to vector<2x32xf32>
    %236 = vector.extract_strided_slice %232 {offsets = [0, 32], sizes = [2, 32], strides = [1, 1]} : vector<2x96xf32> to vector<2x32xf32>
    %237 = vector.extract_strided_slice %232 {offsets = [0, 64], sizes = [2, 32], strides = [1, 1]} : vector<2x96xf32> to vector<2x32xf32>
    %238 = arith.mulf %236, %210 : vector<2x32xf32>
    %239 = arith.mulf %235, %234 : vector<2x32xf32>
    %240 = arith.addf %238, %239 : vector<2x32xf32>
    %241 = math.tanh %240 : vector<2x32xf32>
    %242 = arith.mulf %237, %241 : vector<2x32xf32>
    %c0_84 = arith.constant 0 : index
    %243 = arith.index_cast %221 : i32 to index
    %c0_85 = arith.constant 0 : index
    %c0_86 = arith.constant 0 : index
    %244 = vector.load %arg4[%c0_84, %243, %c0_85, %c0_86] : memref<1x8x2x32xf32, #tpu.memory_space<vmem>>, vector<1x1x2x32xf32>
    %245 = vector.shape_cast %244 : vector<1x1x2x32xf32> to vector<2x32xf32>
    %246 = vector.shape_cast %242 : vector<2x32xf32> to vector<1x1x2x32xf32>
    tpu.vector_store %arg4[%c0_84, %243, %c0_85, %c0_86], %246 {strides = array<i32>} : memref<1x8x2x32xf32, #tpu.memory_space<vmem>>, vector<1x1x2x32xf32>,
    %c8_i32 = arith.constant 8 : i32
    %c0_87 = arith.constant 0 : index
    %c0_88 = arith.constant 0 : index
    %247 = vector.load %arg5[%c0_87, %c0_88] : memref<2x32xf32, #tpu.memory_space<vmem>>, vector<2x32xf32>
    tpu.vector_store %arg5[%c0_87, %c0_88], %242 {strides = array<i32>} : memref<2x32xf32, #tpu.memory_space<vmem>>, vector<2x32xf32>,
    %c0_89 = arith.constant 0 : index
    %c0_90 = arith.constant 0 : index
    %248 = vector.load %arg6[%c0_89, %c0_90] : memref<2x32xf32, #tpu.memory_space<vmem>>, vector<2x32xf32>
    tpu.vector_store %arg6[%c0_89, %c0_90], %240 {strides = array<i32>} : memref<2x32xf32, #tpu.memory_space<vmem>>, vector<2x32xf32>,
    return
  }
  func.func @transform_0(%arg0: i32, %arg1: i32) -> (i32, i32, i32, i32) {
    %c1_i32 = arith.constant 1 : i32
    %0 = arith.subi %c1_i32, %arg0 : i32
    %1 = arith.muli %0, %arg1 : i32
    %c1_i32_0 = arith.constant 1 : i32
    %2 = arith.subi %c1_i32_0, %arg1 : i32
    %3 = arith.muli %arg0, %2 : i32
    %4 = arith.addi %1, %3 : i32
    %c0_i32 = arith.constant 0 : i32
    %c0_i32_1 = arith.constant 0 : i32
    %c0_i32_2 = arith.constant 0 : i32
    return %arg0, %4, %c0_i32, %c0_i32_1 : i32, i32, i32, i32
  }
  func.func @transform_1(%arg0: i32, %arg1: i32) -> (i32, i32, i32) {
    %c0_i32 = arith.constant 0 : i32
    %c0_i32_0 = arith.constant 0 : i32
    %c0_i32_1 = arith.constant 0 : i32
    return %arg0, %c0_i32, %c0_i32_0 : i32, i32, i32
  }
  func.func @transform_2(%arg0: i32, %arg1: i32) -> (i32, i32, i32, i32) {
    %c1_i32 = arith.constant 1 : i32
    %0 = arith.subi %c1_i32, %arg0 : i32
    %1 = arith.muli %0, %arg1 : i32
    %c1_i32_0 = arith.constant 1 : i32
    %2 = arith.subi %c1_i32_0, %arg1 : i32
    %3 = arith.muli %arg0, %2 : i32
    %4 = arith.addi %1, %3 : i32
    %c0_i32 = arith.constant 0 : i32
    %c0_i32_1 = arith.constant 0 : i32
    %c0_i32_2 = arith.constant 0 : i32
    return %arg0, %4, %c0_i32, %c0_i32_1 : i32, i32, i32, i32
  }
}

module attributes {stable_mosaic.version = 11 : i64} {
  func.func @proj_ln_out_kernel(%arg0: i32, %arg1: memref<2x16x32xf32, #tpu.memory_space<vmem>>, %arg2: memref<16x16xf32, #tpu.memory_space<vmem>>, %arg3: memref<16x16xf32, #tpu.memory_space<vmem>>, %arg4: memref<1x1xf32, #tpu.memory_space<vmem>>, %arg5: memref<64x16xf32, #tpu.memory_space<vmem>>, %arg6: memref<1x16xf32, #tpu.memory_space<vmem>>, %arg7: memref<1x16xf32, #tpu.memory_space<vmem>>, %arg8: memref<1x16xf32, #tpu.memory_space<vmem>>, %arg9: memref<16x16xf32, #tpu.memory_space<vmem>>) attributes {dimension_semantics = [#tpu.dimension_semantics<parallel>], iteration_bounds = array<i64: 2>, scalar_prefetch = 0 : i64, scratch_operands = 0 : i64, tpu.core_type = #tpu.core_type<tc>, window_params = [{transform_indices = @transform_0, window_bounds = array<i64: 2, 16, 32>}, {transform_indices = @transform_1, window_bounds = array<i64: 16, 16>}, {transform_indices = @transform_2, window_bounds = array<i64: 16, 16>}, {pipeline_mode = #tpu.pipeline_mode<synchronous>, transform_indices = @transform_3, window_bounds = array<i64: 1, 1>}, {pipeline_mode = #tpu.pipeline_mode<synchronous>, transform_indices = @transform_4, window_bounds = array<i64: 64, 16>}, {pipeline_mode = #tpu.pipeline_mode<synchronous>, transform_indices = @transform_5, window_bounds = array<i64: 1, 16>}, {pipeline_mode = #tpu.pipeline_mode<synchronous>, transform_indices = @transform_6, window_bounds = array<i64: 1, 16>}, {pipeline_mode = #tpu.pipeline_mode<synchronous>, transform_indices = @transform_7, window_bounds = array<i64: 1, 16>}, {transform_indices = @transform_8, window_bounds = array<i64: 16, 16>}]} {
    %c0 = arith.constant 0 : index
    %c0_0 = arith.constant 0 : index
    %0 = vector.load %arg4[%c0, %c0_0] : memref<1x1xf32, #tpu.memory_space<vmem>>, vector<1x1xf32>
    %c0_1 = arith.constant 0 : index
    %c0_2 = arith.constant 0 : index
    %c0_3 = arith.constant 0 : index
    %1 = vector.load %arg1[%c0_1, %c0_2, %c0_3] : memref<2x16x32xf32, #tpu.memory_space<vmem>>, vector<1x16x32xf32>
    %2 = vector.shape_cast %1 : vector<1x16x32xf32> to vector<16x32xf32>
    %c1 = arith.constant 1 : index
    %c0_4 = arith.constant 0 : index
    %c0_5 = arith.constant 0 : index
    %3 = vector.load %arg1[%c1, %c0_4, %c0_5] : memref<2x16x32xf32, #tpu.memory_space<vmem>>, vector<1x16x32xf32>
    %4 = vector.shape_cast %3 : vector<1x16x32xf32> to vector<16x32xf32>
    %5 = tpu.concatenate %2, %4 in 1 : vector<16x32xf32>, vector<16x32xf32> -> vector<16x64xf32>
    %cst = arith.constant 0.000000e+00 : f32
    %6 = vector.broadcast %cst : f32 to vector<16x64xf32>
    %7 = arith.cmpf oge, %5, %6 : vector<16x64xf32>
    %8 = vector.broadcast %0 : vector<1x1xf32> to vector<16x64xf32>
    %9 = arith.mulf %8, %5 : vector<16x64xf32>
    %10 = arith.select %7, %5, %9 : vector<16x64xi1>, vector<16x64xf32>
    %c0_6 = arith.constant 0 : index
    %c0_7 = arith.constant 0 : index
    %11 = vector.load %arg5[%c0_6, %c0_7] : memref<64x16xf32, #tpu.memory_space<vmem>>, vector<64x16xf32>
    %cst_8 = arith.constant dense<0.000000e+00> : vector<16x16xf32>
    %12 = tpu.matmul %10, %11, %cst_8 {dimension_numbers = #tpu.dot_dimension_numbers<[1], [0], [0], [1], [0, 0, 1, 1], [], []>} : vector<16x64xf32>, vector<64x16xf32>, vector<16x16xf32> -> vector<16x16xf32>
    %c0_9 = arith.constant 0 : index
    %c0_10 = arith.constant 0 : index
    %13 = vector.load %arg6[%c0_9, %c0_10] : memref<1x16xf32, #tpu.memory_space<vmem>>, vector<1x16xf32>
    %14 = vector.broadcast %13 : vector<1x16xf32> to vector<16x16xf32>
    %15 = arith.addf %12, %14 : vector<16x16xf32>
    %c0_11 = arith.constant 0 : index
    %c0_12 = arith.constant 0 : index
    %16 = vector.load %arg2[%c0_11, %c0_12] : memref<16x16xf32, #tpu.memory_space<vmem>>, vector<16x16xf32>
    %17 = arith.addf %15, %16 : vector<16x16xf32>
    %cst_13 = arith.constant dense<0.000000e+00> : vector<16xf32>
    %18 = vector.multi_reduction <add>, %17, %cst_13 [1] : vector<16x16xf32> to vector<16xf32>
    %19 = vector.shape_cast %18 : vector<16xf32> to vector<16x1xf32>
    %cst_14 = arith.constant 1.600000e+01 : f32
    %20 = vector.broadcast %cst_14 : f32 to vector<16x1xf32>
    %21 = arith.divf %19, %20 : vector<16x1xf32>
    %22 = vector.broadcast %21 : vector<16x1xf32> to vector<16x16xf32>
    %23 = arith.subf %17, %22 : vector<16x16xf32>
    %24 = arith.mulf %23, %23 : vector<16x16xf32>
    %cst_15 = arith.constant dense<0.000000e+00> : vector<16xf32>
    %25 = vector.multi_reduction <add>, %24, %cst_15 [1] : vector<16x16xf32> to vector<16xf32>
    %26 = vector.shape_cast %25 : vector<16xf32> to vector<16x1xf32>
    %cst_16 = arith.constant 1.600000e+01 : f32
    %27 = vector.broadcast %cst_16 : f32 to vector<16x1xf32>
    %28 = arith.divf %26, %27 : vector<16x1xf32>
    %29 = vector.broadcast %21 : vector<16x1xf32> to vector<16x16xf32>
    %30 = arith.subf %17, %29 : vector<16x16xf32>
    %cst_17 = arith.constant 9.99999974E-6 : f32
    %31 = vector.broadcast %cst_17 : f32 to vector<16x1xf32>
    %32 = arith.addf %28, %31 : vector<16x1xf32>
    %33 = math.rsqrt %32 : vector<16x1xf32>
    %34 = vector.broadcast %33 : vector<16x1xf32> to vector<16x16xf32>
    %35 = arith.mulf %30, %34 : vector<16x16xf32>
    %c0_18 = arith.constant 0 : index
    %c0_19 = arith.constant 0 : index
    %36 = vector.load %arg7[%c0_18, %c0_19] : memref<1x16xf32, #tpu.memory_space<vmem>>, vector<1x16xf32>
    %37 = vector.broadcast %36 : vector<1x16xf32> to vector<16x16xf32>
    %38 = arith.mulf %35, %37 : vector<16x16xf32>
    %c0_20 = arith.constant 0 : index
    %c0_21 = arith.constant 0 : index
    %39 = vector.load %arg8[%c0_20, %c0_21] : memref<1x16xf32, #tpu.memory_space<vmem>>, vector<1x16xf32>
    %40 = vector.broadcast %39 : vector<1x16xf32> to vector<16x16xf32>
    %41 = arith.addf %38, %40 : vector<16x16xf32>
    %c0_22 = arith.constant 0 : index
    %c0_23 = arith.constant 0 : index
    %42 = vector.load %arg3[%c0_22, %c0_23] : memref<16x16xf32, #tpu.memory_space<vmem>>, vector<16x16xf32>
    %43 = arith.addf %41, %42 : vector<16x16xf32>
    %c0_24 = arith.constant 0 : index
    %c0_25 = arith.constant 0 : index
    %44 = vector.load %arg9[%c0_24, %c0_25] : memref<16x16xf32, #tpu.memory_space<vmem>>, vector<16x16xf32>
    tpu.vector_store %arg9[%c0_24, %c0_25], %43 {strides = array<i32>} : memref<16x16xf32, #tpu.memory_space<vmem>>, vector<16x16xf32>,
    return
  }
  func.func @transform_0(%arg0: i32) -> (i32, i32, i32) {
    %c0_i32 = arith.constant 0 : i32
    %c0_i32_0 = arith.constant 0 : i32
    %c0_i32_1 = arith.constant 0 : i32
    return %c0_i32, %arg0, %c0_i32_0 : i32, i32, i32
  }
  func.func @transform_1(%arg0: i32) -> (i32, i32) {
    %c0_i32 = arith.constant 0 : i32
    %c0_i32_0 = arith.constant 0 : i32
    return %arg0, %c0_i32 : i32, i32
  }
  func.func @transform_2(%arg0: i32) -> (i32, i32) {
    %c0_i32 = arith.constant 0 : i32
    %c0_i32_0 = arith.constant 0 : i32
    return %arg0, %c0_i32 : i32, i32
  }
  func.func @transform_3(%arg0: i32) -> (i32, i32) {
    %c0_i32 = arith.constant 0 : i32
    %c0_i32_0 = arith.constant 0 : i32
    %c0_i32_1 = arith.constant 0 : i32
    return %c0_i32, %c0_i32_0 : i32, i32
  }
  func.func @transform_4(%arg0: i32) -> (i32, i32) {
    %c0_i32 = arith.constant 0 : i32
    %c0_i32_0 = arith.constant 0 : i32
    %c0_i32_1 = arith.constant 0 : i32
    return %c0_i32, %c0_i32_0 : i32, i32
  }
  func.func @transform_5(%arg0: i32) -> (i32, i32) {
    %c0_i32 = arith.constant 0 : i32
    %c0_i32_0 = arith.constant 0 : i32
    %c0_i32_1 = arith.constant 0 : i32
    return %c0_i32, %c0_i32_0 : i32, i32
  }
  func.func @transform_6(%arg0: i32) -> (i32, i32) {
    %c0_i32 = arith.constant 0 : i32
    %c0_i32_0 = arith.constant 0 : i32
    %c0_i32_1 = arith.constant 0 : i32
    return %c0_i32, %c0_i32_0 : i32, i32
  }
  func.func @transform_7(%arg0: i32) -> (i32, i32) {
    %c0_i32 = arith.constant 0 : i32
    %c0_i32_0 = arith.constant 0 : i32
    %c0_i32_1 = arith.constant 0 : i32
    return %c0_i32, %c0_i32_0 : i32, i32
  }
  func.func @transform_8(%arg0: i32) -> (i32, i32) {
    %c0_i32 = arith.constant 0 : i32
    %c0_i32_0 = arith.constant 0 : i32
    return %arg0, %c0_i32 : i32, i32
  }
}

</mosaic_0001>

<llo_original>
// kernel: global_attention_rnn.3
$region0: #{global_attention_rnn.3}
  #allocation0 [shape = 'u32[]', space=smem, size = 0x4, offset = 0x4, fixed_abs, tag = 'smem constant byte address 0x4 - core index']
  #allocation1 [shape = 'u32[144,128]{1,0:T(1,128)}', space=vmem, size = 0x12000, scoped, tag = 'internal scratch']
  %s0 = inlined_call_operand.vmem [shape: f32[32,16], index: 0, kind: input, shape index: {}]
  %s1 = inlined_call_operand.vmem [shape: f32[1,16], index: 1, kind: input, shape index: {}]
  %s2 = inlined_call_operand.vmem [shape: f32[1,16], index: 2, kind: input, shape index: {}]
  %s3 = inlined_call_operand.vmem [shape: f32[2,16,128], index: 3, kind: input, shape index: {}]
  %s4 = inlined_call_operand.vmem [shape: f32[2,1,128], index: 4, kind: input, shape index: {}]
  %s5 = inlined_call_operand.vmem [shape: f32[32,16], index: 5, kind: output, shape index: {0}]
  %s6 = inlined_call_operand.vmem [shape: f32[2,32,128], index: 6, kind: output, shape index: {1}]
  %7 = xla_tuple %s5, %s6
  %s8 = sld [smem:[#allocation0]]
  $region95: #{global_attention_rnn.3} parent=0
    _
  %s10 = ssub.s32 1, %s8
  %s11 = scalar_select 0, %s10, %s8
  $region1: #{global_attention_rnn.3} parent=0
    #allocation2 [shape = 'u8[32768]{0}', space=vmem, size = 0x8000, scoped, tag = 'output window, operand 1']
    loop: start=0, step=1, limit=4
    $region2: #{global_attention_rnn.3} parent=1 // loop_pre_header
      _
    $region3: #{global_attention_rnn.3} parent=1 // loop_header
      %s13 = sphi 0, %s17
      %p14 = scmp.ge.s32.totalorder %s13, 4
      %s23 = sphi 0, %s25
      %s26 = sphi 0, %s23
      %s27 = sphi 0, %s26
      %s43 = sphi 0, %s27
      %s47 = sphi 0, %s47
      %s49 = sphi 0, %s47
      %s50 = sphi 0, %s49
      %s64 = sphi 0, %s50
      %s68 = sphi 0, %s68
      %s70 = sphi 0, %s68
      %s71 = sphi 0, %s70
      %s85 = sphi 0, %s71
      %s89 = sphi 0, %s89
      %s91 = sphi 0, %s89
      %s92 = sphi 0, %s91
      %s106 = sphi 0, %s92
      %s110 = sphi 0, %s110
      %s112 = sphi 0, %s110
      %s113 = sphi 0, %s112
      %s127 = sphi 0, %s113
      %s133 = sphi 0, %s135
      %s136 = sphi 0, %s133
      %s137 = sphi 0, %s136
      %s153 = sphi 0, %s137
      %s159 = sphi 0, %s161
      %s162 = sphi 0, %s159
      %s163 = sphi 0, %s162
      %s179 = sphi 0, %s163
    $region4: #{global_attention_rnn.3} parent=1 // loop_header_branch
      %16 = sbr.rel (%p14) target = $region8
    $region5: #{global_attention_rnn.3} parent=1 // loop_body
      %s18 = ssub.s32 %s13, 1
      %s19 = ssub.s32 %s13, 2
      %s20 = sadd.s32 %s13, 1
      %s21 = ssub.s32 %s13, %s20
      %p22 = scmp.eq.s32.totalorder %s21, 0
      %s24 = sadd.s32 %s23, 1
      %s25 = scalar_select %p22, %s23, %s24
      %p28 = pneg %p22
      %p29 = scmp.eq.s32.totalorder %s13, 1
      %p30 = por %p28, %p29
      %p31 = scmp.ne.s32.totalorder %s23, %s26
      %p32 = scmp.eq.s32.totalorder %s13, 0
      %p33 = por %p31, %p32
      %p34 = scmp.ne.s32.totalorder %s23, %s26
      %p35 = scmp.eq.s32.totalorder %s18, 1
      %p36 = por %p34, %p35
      %p37 = scmp.ne.s32.totalorder %s26, %s27
      %p38 = scmp.eq.s32.totalorder %s18, 0
      %p39 = por %p37, %p38
      %p40 = scmp.ne.s32.totalorder %s26, %s27
      %p41 = scmp.eq.s32.totalorder %s19, 1
      %p42 = por %p40, %p41
      %p44 = scmp.ne.s32.totalorder %s27, %s43
      %p45 = scmp.eq.s32.totalorder %s19, 0
      %p46 = por %p44, %p45
      %s48 = sadd.s32 %s47, 1
      %p51 = scmp.eq.s32.totalorder %s13, 1
      %p52 = scmp.ne.s32.totalorder %s47, %s49
      %p53 = scmp.eq.s32.totalorder %s13, 0
      %p54 = por %p52, %p53
      %p55 = scmp.ne.s32.totalorder %s47, %s49
      %p56 = scmp.eq.s32.totalorder %s18, 1
      %p57 = por %p55, %p56
      %p58 = scmp.ne.s32.totalorder %s49, %s50
      %p59 = scmp.eq.s32.totalorder %s18, 0
      %p60 = por %p58, %p59
      %p61 = scmp.ne.s32.totalorder %s49, %s50
      %p62 = scmp.eq.s32.totalorder %s19, 1
      %p63 = por %p61, %p62
      %p65 = scmp.ne.s32.totalorder %s50, %s64
      %p66 = scmp.eq.s32.totalorder %s19, 0
      %p67 = por %p65, %p66
      %s69 = sadd.s32 %s68, 1
      %p72 = scmp.eq.s32.totalorder %s13, 1
      %p73 = scmp.ne.s32.totalorder %s68, %s70
      %p74 = scmp.eq.s32.totalorder %s13, 0
      %p75 = por %p73, %p74
      %p76 = scmp.ne.s32.totalorder %s68, %s70
      %p77 = scmp.eq.s32.totalorder %s18, 1
      %p78 = por %p76, %p77
      %p79 = scmp.ne.s32.totalorder %s70, %s71
      %p80 = scmp.eq.s32.totalorder %s18, 0
      %p81 = por %p79, %p80
      %p82 = scmp.ne.s32.totalorder %s70, %s71
      %p83 = scmp.eq.s32.totalorder %s19, 1
      %p84 = por %p82, %p83
      %p86 = scmp.ne.s32.totalorder %s71, %s85
      %p87 = scmp.eq.s32.totalorder %s19, 0
      %p88 = por %p86, %p87
      %s90 = sadd.s32 %s89, 1
      %p93 = scmp.eq.s32.totalorder %s13, 1
      %p94 = scmp.ne.s32.totalorder %s89, %s91
      %p95 = scmp.eq.s32.totalorder %s13, 0
      %p96 = por %p94, %p95
      %p97 = scmp.ne.s32.totalorder %s89, %s91
      %p98 = scmp.eq.s32.totalorder %s18, 1
      %p99 = por %p97, %p98
      %p100 = scmp.ne.s32.totalorder %s91, %s92
      %p101 = scmp.eq.s32.totalorder %s18, 0
      %p102 = por %p100, %p101
      %p103 = scmp.ne.s32.totalorder %s91, %s92
      %p104 = scmp.eq.s32.totalorder %s19, 1
      %p105 = por %p103, %p104
      %p107 = scmp.ne.s32.totalorder %s92, %s106
      %p108 = scmp.eq.s32.totalorder %s19, 0
      %p109 = por %p107, %p108
      %s111 = sadd.s32 %s110, 1
      %p114 = scmp.eq.s32.totalorder %s13, 1
      %p115 = scmp.ne.s32.totalorder %s110, %s112
      %p116 = scmp.eq.s32.totalorder %s13, 0
      %p117 = por %p115, %p116
      %p118 = scmp.ne.s32.totalorder %s110, %s112
      %p119 = scmp.eq.s32.totalorder %s18, 1
      %p120 = por %p118, %p119
      %p121 = scmp.ne.s32.totalorder %s112, %s113
      %p122 = scmp.eq.s32.totalorder %s18, 0
      %p123 = por %p121, %p122
      %p124 = scmp.ne.s32.totalorder %s112, %s113
      %p125 = scmp.eq.s32.totalorder %s19, 1
      %p126 = por %p124, %p125
      %p128 = scmp.ne.s32.totalorder %s113, %s127
      %p129 = scmp.eq.s32.totalorder %s19, 0
      %p130 = por %p128, %p129
      %s131 = ssub.s32 %s13, %s20
      %p132 = scmp.eq.s32.totalorder %s131, 0
      %s134 = sadd.s32 %s133, 1
      %s135 = scalar_select %p132, %s133, %s134
      %p138 = pneg %p132
      %p139 = scmp.eq.s32.totalorder %s13, 1
      %p140 = por %p138, %p139
      %p141 = scmp.ne.s32.totalorder %s133, %s136
      %p142 = scmp.eq.s32.totalorder %s13, 0
      %p143 = por %p141, %p142
      %p144 = scmp.ne.s32.totalorder %s133, %s136
      %p145 = scmp.eq.s32.totalorder %s18, 1
      %p146 = por %p144, %p145
      %p147 = scmp.ne.s32.totalorder %s136, %s137
      %p148 = scmp.eq.s32.totalorder %s18, 0
      %p149 = por %p147, %p148
      %p150 = scmp.ne.s32.totalorder %s136, %s137
      %p151 = scmp.eq.s32.totalorder %s19, 1
      %p152 = por %p150, %p151
      %p154 = scmp.ne.s32.totalorder %s137, %s153
      %p155 = scmp.eq.s32.totalorder %s19, 0
      %p156 = por %p154, %p155
      %s157 = ssub.s32 %s13, %s20
      %p158 = scmp.eq.s32.totalorder %s157, 0
      %s160 = sadd.s32 %s159, 1
      %s161 = scalar_select %p158, %s159, %s160
      %p164 = pneg %p158
      %p165 = scmp.eq.s32.totalorder %s13, 1
      %p166 = por %p164, %p165
      %p167 = scmp.ne.s32.totalorder %s159, %s162
      %p168 = scmp.eq.s32.totalorder %s13, 0
      %p169 = por %p167, %p168
      %p170 = scmp.ne.s32.totalorder %s159, %s162
      %p171 = scmp.eq.s32.totalorder %s18, 1
      %p172 = por %p170, %p171
      %p173 = scmp.ne.s32.totalorder %s162, %s163
      %p174 = scmp.eq.s32.totalorder %s18, 0
      %p175 = por %p173, %p174
      %p176 = scmp.ne.s32.totalorder %s162, %s163
      %p177 = scmp.eq.s32.totalorder %s19, 1
      %p178 = por %p176, %p177
      %p180 = scmp.ne.s32.totalorder %s163, %s179
      %p181 = scmp.eq.s32.totalorder %s19, 0
      %p182 = por %p180, %p181
      %p183 = scmp.le.s32.totalorder 1, %s13
      %p184 = scmp.lt.s32.totalorder %s13, 3
      %p185 = pnand %p183, %p184
      %p186 = pneg %p185
      // Predicated region
      $region9: #{global_attention_rnn.3} parent=5 // pred_check
        _
      $region10: #{global_attention_rnn.3} parent=5 // pred_check_branch
        %188 = sbr.rel (%p185) target = $region12
      $region11: #{global_attention_rnn.3} parent=5 // pred_region
        %s189 = ssub.s32 %s13, 1
        // Predicated region
        $region13: #{global_attention_rnn.3} parent=11 // pred_check
          %p190 = pneg %p60
        $region14: #{global_attention_rnn.3} parent=11 // pred_check_branch
          %192 = sbr.rel (%p190) target = $region16
        $region15: #{global_attention_rnn.3} parent=11 // pred_region
          _
        $region16: #{global_attention_rnn.3} parent=11 // pred_fallthru
          _
        // Predicated region
        $region17: #{global_attention_rnn.3} parent=11 // pred_check
          %p193 = pneg %p81
        $region18: #{global_attention_rnn.3} parent=11 // pred_check_branch
          %195 = sbr.rel (%p193) target = $region20
        $region19: #{global_attention_rnn.3} parent=11 // pred_region
          _
        $region20: #{global_attention_rnn.3} parent=11 // pred_fallthru
          _
        // Predicated region
        $region21: #{global_attention_rnn.3} parent=11 // pred_check
          %p196 = pneg %p102
        $region22: #{global_attention_rnn.3} parent=11 // pred_check_branch
          %198 = sbr.rel (%p196) target = $region24
        $region23: #{global_attention_rnn.3} parent=11 // pred_region
          _
        $region24: #{global_attention_rnn.3} parent=11 // pred_fallthru
          _
        // Predicated region
        $region25: #{global_attention_rnn.3} parent=11 // pred_check
          %p199 = pneg %p123
        $region26: #{global_attention_rnn.3} parent=11 // pred_check_branch
          %201 = sbr.rel (%p199) target = $region28
        $region27: #{global_attention_rnn.3} parent=11 // pred_region
          _
        $region28: #{global_attention_rnn.3} parent=11 // pred_fallthru
          _
      $region12: #{global_attention_rnn.3} parent=5 // pred_fallthru
        _
      %p202 = scmp.lt.s32.totalorder %s13, 2
      // Predicated region
      $region29: #{global_attention_rnn.3} parent=5 // pred_check
        %p203 = pneg %p202
      $region30: #{global_attention_rnn.3} parent=5 // pred_check_branch
        %205 = sbr.rel (%p203) target = $region32
      $region31: #{global_attention_rnn.3} parent=5 // pred_region
        // Predicated region
        $region33: #{global_attention_rnn.3} parent=31 // pred_check
          %p206 = pneg %p33
        $region34: #{global_attention_rnn.3} parent=31 // pred_check_branch
          %208 = sbr.rel (%p206) target = $region36
        $region35: #{global_attention_rnn.3} parent=31 // pred_region
          %s209 = smul.u32 2, %s13
          %p210 = scmp.lt.s32.totalorder %s209, 3
          %s211 = scalar_select %p210, %s209, 3
          %s212 = smul.addr %s211, 8
          %s213 = scalar_lea.vmem %s0, %s212
          %s214 = smul.u32 2, %s13
        $region36: #{global_attention_rnn.3} parent=31 // pred_fallthru
          _
      $region32: #{global_attention_rnn.3} parent=5 // pred_fallthru
        _
      %p215 = scmp.le.s32.totalorder 1, %s13
      %p216 = scmp.lt.s32.totalorder %s13, 3
      %p217 = pnand %p215, %p216
      %p218 = pneg %p217
      // Predicated region
      $region37: #{global_attention_rnn.3} parent=5 // pred_check
        _
      $region38: #{global_attention_rnn.3} parent=5 // pred_check_branch
        %220 = sbr.rel (%p217) target = $region40
      $region39: #{global_attention_rnn.3} parent=5 // pred_region
        %s221 = ssub.s32 %s13, 1
        %s222 = smul.u32 2, %s18
        %p223 = scmp.lt.s32.totalorder %s222, 3
        %s224 = scalar_select %p223, %s222, 3
        %s225 = smul.addr %s224, 8
        %s226 = scalar_lea.vmem %s0, %s225
        %p227 = pneg %p39
        %p228 = pneg %p36
        %p229 = pneg %p60
        %p230 = pneg %p57
        %p231 = pneg %p81
        %p232 = pneg %p78
        %p233 = pneg %p102
        %p234 = pneg %p99
        %p235 = pneg %p123
        %p236 = pneg %p120
        %p237 = pneg %p149
        %p238 = pneg %p146
        %s239 = smul.u32 2, %s18
        %p240 = scmp.lt.s32.totalorder %s239, 3
        %s241 = scalar_select %p240, %s239, 3
        %s242 = smul.addr %s241, 8
        %s243 = scalar_lea.vmem %s5, %s242
        %p244 = pneg %p175
        %p245 = pneg %p172
        %s246 = sand.u32 %s162, 1
        %s247 = sand.u32 %s162, 1
        %s248 = smul.addr %s247, 32
        %s249 = scalar_lea.vmem [#allocation2], %s248
        %s250 = smul.u32 2, %s18
        %p251 = scmp.lt.s32.totalorder %s250, 3
        %s252 = scalar_select %p251, %s250, 3
        %s253 = smul.addr %s252, 8
        %s254 = scalar_lea.vmem %s0, %s253
        %s255 = smul.u32 2, %s18
        %s256 = smul.u32 2, %s18
        %p257 = scmp.lt.s32.totalorder %s256, 3
        %s258 = scalar_select %p257, %s256, 3
        %s259 = smul.addr %s258, 8
        %s260 = scalar_lea.vmem %s5, %s259
        %s261 = smul.u32 2, %s18
        %s262 = smul.u32 2, %s18
        %v263 = vld [vmem:[%s254] sm:$0xff]
        %v264 = vld [vmem:[%s254 + $0x8] sm:$0xff]
        %vm265 = vcmask 130048
        %v266 = vsel %vm265, %v263, 0.0
        %267 = vadd.xlane.f32.xlu0 %v266
        %v268 = vpop.xlane.xlu0 %267
        %v269 = vsel %vm265, %v264, 0.0
        %270 = vadd.xlane.f32.xlu0 %v269
        %v271 = vpop.xlane.xlu0 %270
        %v272 = vrcp.pop 16.0
        %v273 = vmul.f32 %v268, %v272
        %v274 = vmul.f32 %v271, %v272
        %v275 = vsub.f32 %v263, %v273
        %v276 = vsub.f32 %v264, %v274
        %v277 = vmul.f32 %v275, %v275
        %v278 = vmul.f32 %v276, %v276
        %v279 = vsel %vm265, %v277, 0.0
        %280 = vadd.xlane.f32.xlu0 %v279
        %v281 = vpop.xlane.xlu0 %280
        %v282 = vsel %vm265, %v278, 0.0
        %283 = vadd.xlane.f32.xlu0 %v282
        %v284 = vpop.xlane.xlu0 %283
        %v285 = vmul.f32 %v281, %v272
        %v286 = vmul.f32 %v284, %v272
        %v287 = vadd.f32 %v285, 1e-05
        %v288 = vadd.f32 %v286, 1e-05
        %v289 = vrsqrt.pop %v287
        %v290 = vrsqrt.pop %v288
        %v291 = vmul.f32 %v275, %v289
        %v292 = vmul.f32 %v276, %v290
        %v293 = vld [vmem:[%s1] sm:$0x1]
        %v295 = vlaneseq
        %v296 = vshrl.u32 %v295, 7
        %v297 = vsub.s32 0, %v296
        %v298 = vrot.slane %v293, %v297
        %v300 = vmul.f32 %v291, %v298
        %v301 = vmul.f32 %v292, %v298
        %v302 = vld [vmem:[%s2] sm:$0x1]
        %v304 = vlaneseq
        %v305 = vshrl.u32 %v304, 7
        %v306 = vsub.s32 0, %v305
        %v307 = vrot.slane %v302, %v306
        %v309 = vadd.f32 %v300, %v307
        %v310 = vadd.f32 %v301, %v307
        %311 = vst.msk [vmem:[%s260] sm:$0xff] %vm265, %v309
        %312 = vst.msk [vmem:[%s260 + $0x8] sm:$0xff] %vm265, %v310
        %v313 = vld [vmem:[%s3] sm:$0xff]
        %v314 = vld [vmem:[%s3 + $0x8] sm:$0xff]
        %v315 = vld [vmem:[%s4] sm:$0x1]
        %v317 = vlaneseq
        %v318 = vshrl.u32 %v317, 7
        %v319 = vsub.s32 0, %v318
        %v320 = vrot.slane %v315, %v319
        %v323 = vsel %vm265, %v309, 0
        %v326 = vsel %vm265, %v310, 0
        %328 = vmatprep.subr.mxu0 0.0
        %329 = vmatpush1.msra.mxu0 %v313
        %330 = vmatprep.subr.mxu0 0.0
        %331 = vmatpush1.msra.mxu0 %v314
        %332 = vmatprep.subr.mxu0 0.0
        %333 = vmatpush1.msra.mxu0 0.0
        %334 = vmatprep.subr.mxu0 0.0
        %335 = vmatpush1.msra.mxu0 0.0
        %336 = vmatprep.subr.mxu0 0.0
        %337 = vmatpush1.msra.mxu0 0.0
        %338 = vmatprep.subr.mxu0 0.0
        %339 = vmatpush1.msra.mxu0 0.0
        %340 = vmatprep.subr.mxu0 0.0
        %341 = vmatpush1.msra.mxu0 0.0
        %342 = vmatprep.subr.mxu0 0.0
        %343 = vmatpush1.msra.mxu0 0.0
        %344 = vmatprep.subr.mxu0 0.0
        %345 = vmatpush1.msra.mxu0 0.0
        %346 = vmatprep.subr.mxu0 0.0
        %347 = vmatpush1.msra.mxu0 0.0
        %348 = vmatprep.subr.mxu0 0.0
        %349 = vmatpush1.msra.mxu0 0.0
        %350 = vmatprep.subr.mxu0 0.0
        %351 = vmatpush1.msra.mxu0 0.0
        %352 = vmatprep.subr.mxu0 0.0
        %353 = vmatpush1.msra.mxu0 0.0
        %354 = vmatprep.subr.mxu0 0.0
        %355 = vmatpush1.msra.mxu0 0.0
        %356 = vmatprep.subr.mxu0 0.0
        %357 = vmatpush1.msra.mxu0 0.0
        %358 = vmatprep.subr.mxu0 0.0
        %359 = vmatpush1.msra.mxu0 0.0
        %360 = vmatprep.subr.mxu0 0.0
        %361 = vmatpush1.msra.mxu0 0.0
        %362 = vmatprep.subr.mxu0 0.0
        %363 = vmatpush1.msra.mxu0 0.0
        %364 = vmatprep.subr.mxu0 0.0
        %365 = vmatpush1.msra.mxu0 0.0
        %366 = vmatprep.subr.mxu0 0.0
        %367 = vmatpush1.msra.mxu0 0.0
        %368 = vmatprep.subr.mxu0 0.0
        %369 = vmatpush1.msra.mxu0 0.0
        %370 = vmatprep.subr.mxu0 0.0
        %371 = vmatpush1.msra.mxu0 0.0
        %372 = vmatprep.subr.mxu0 0.0
        %373 = vmatpush1.msra.mxu0 0.0
        %374 = vmatprep.subr.mxu0 0.0
        %375 = vmatpush1.msra.mxu0 0.0
        %376 = vmatprep.subr.mxu0 0.0
        %377 = vmatpush1.msra.mxu0 0.0
        %378 = vmatprep.subr.mxu0 0.0
        %379 = vmatpush1.msra.mxu0 0.0
        %380 = vmatprep.subr.mxu0 0.0
        %381 = vmatpush1.msra.mxu0 0.0
        %382 = vmatprep.subr.mxu0 0.0
        %383 = vmatpush1.msra.mxu0 0.0
        %384 = vmatprep.subr.mxu0 0.0
        %385 = vmatpush1.msra.mxu0 0.0
        %386 = vmatprep.subr.mxu0 0.0
        %387 = vmatpush1.msra.mxu0 0.0
        %388 = vmatprep.subr.mxu0 0.0
        %389 = vmatpush1.msra.mxu0 0.0
        %390 = vmatprep.subr.mxu0 0.0
        %391 = vmatpush1.msra.mxu0 0.0
        %392 = vmatprep.mubr.f32.mxu0 0.0
        %393 = vmatmul.mubr.f32.gmra.mrb[0].mxu0 %v323
        %v394 = vpop.f32.mrb[0].mxu0
        %v395 = vadd.f32 %v320, %v394
        %v396 = vpop.f32.mrb[0].mxu0
        %397 = vmatprep.mubr.f32.mxu0 0.0
        %398 = vmatmul.mubr.f32.gmra.mrb[0].mxu0 %v326
        %v399 = vpop.f32.mrb[0].mxu0
        %v400 = vadd.f32 %v320, %v399
        %v401 = vpop.f32.mrb[0].mxu0
        %402 = vdwg.mxu0
        %403 = vst [vmem:[%s249] sm:$0xff] %v395
        %404 = vst [vmem:[%s249 + $0x8] sm:$0xff] %v400
        %s405 = scalar_lea.vmem %s3, 16
        %v406 = vld [vmem:[%s405] sm:$0xff]
        %v407 = vld [vmem:[%s405 + $0x8] sm:$0xff]
        %s408 = scalar_lea.vmem %s4, 1
        %v409 = vld [vmem:[%s408] sm:$0x1]
        %v411 = vlaneseq
        %v412 = vshrl.u32 %v411, 7
        %v413 = vsub.s32 0, %v412
        %v414 = vrot.slane %v409, %v413
        %416 = vmatprep.subr.mxu0 0.0
        %417 = vmatpush1.msra.mxu0 %v406
        %418 = vmatprep.subr.mxu0 0.0
        %419 = vmatpush1.msra.mxu0 %v407
        %420 = vmatprep.subr.mxu0 0.0
        %421 = vmatpush1.msra.mxu0 0.0
        %422 = vmatprep.subr.mxu0 0.0
        %423 = vmatpush1.msra.mxu0 0.0
        %424 = vmatprep.subr.mxu0 0.0
        %425 = vmatpush1.msra.mxu0 0.0
        %426 = vmatprep.subr.mxu0 0.0
        %427 = vmatpush1.msra.mxu0 0.0
        %428 = vmatprep.subr.mxu0 0.0
        %429 = vmatpush1.msra.mxu0 0.0
        %430 = vmatprep.subr.mxu0 0.0
        %431 = vmatpush1.msra.mxu0 0.0
        %432 = vmatprep.subr.mxu0 0.0
        %433 = vmatpush1.msra.mxu0 0.0
        %434 = vmatprep.subr.mxu0 0.0
        %435 = vmatpush1.msra.mxu0 0.0
        %436 = vmatprep.subr.mxu0 0.0
        %437 = vmatpush1.msra.mxu0 0.0
        %438 = vmatprep.subr.mxu0 0.0
        %439 = vmatpush1.msra.mxu0 0.0
        %440 = vmatprep.subr.mxu0 0.0
        %441 = vmatpush1.msra.mxu0 0.0
        %442 = vmatprep.subr.mxu0 0.0
        %443 = vmatpush1.msra.mxu0 0.0
        %444 = vmatprep.subr.mxu0 0.0
        %445 = vmatpush1.msra.mxu0 0.0
        %446 = vmatprep.subr.mxu0 0.0
        %447 = vmatpush1.msra.mxu0 0.0
        %448 = vmatprep.subr.mxu0 0.0
        %449 = vmatpush1.msra.mxu0 0.0
        %450 = vmatprep.subr.mxu0 0.0
        %451 = vmatpush1.msra.mxu0 0.0
        %452 = vmatprep.subr.mxu0 0.0
        %453 = vmatpush1.msra.mxu0 0.0
        %454 = vmatprep.subr.mxu0 0.0
        %455 = vmatpush1.msra.mxu0 0.0
        %456 = vmatprep.subr.mxu0 0.0
        %457 = vmatpush1.msra.mxu0 0.0
        %458 = vmatprep.subr.mxu0 0.0
        %459 = vmatpush1.msra.mxu0 0.0
        %460 = vmatprep.subr.mxu0 0.0
        %461 = vmatpush1.msra.mxu0 0.0
        %462 = vmatprep.subr.mxu0 0.0
        %463 = vmatpush1.msra.mxu0 0.0
        %464 = vmatprep.subr.mxu0 0.0
        %465 = vmatpush1.msra.mxu0 0.0
        %466 = vmatprep.subr.mxu0 0.0
        %467 = vmatpush1.msra.mxu0 0.0
        %468 = vmatprep.subr.mxu0 0.0
        %469 = vmatpush1.msra.mxu0 0.0
        %470 = vmatprep.subr.mxu0 0.0
        %471 = vmatpush1.msra.mxu0 0.0
        %472 = vmatprep.subr.mxu0 0.0
        %473 = vmatpush1.msra.mxu0 0.0
        %474 = vmatprep.subr.mxu0 0.0
        %475 = vmatpush1.msra.mxu0 0.0
        %476 = vmatprep.subr.mxu0 0.0
        %477 = vmatpush1.msra.mxu0 0.0
        %478 = vmatprep.subr.mxu0 0.0
        %479 = vmatpush1.msra.mxu0 0.0
        %480 = vmatprep.mubr.f32.mxu0 0.0
        %481 = vmatmul.mubr.f32.gmra.mrb[0].mxu0 %v323
        %v482 = vpop.f32.mrb[0].mxu0
        %v483 = vadd.f32 %v414, %v482
        %v484 = vpop.f32.mrb[0].mxu0
        %485 = vmatprep.mubr.f32.mxu0 0.0
        %486 = vmatmul.mubr.f32.gmra.mrb[0].mxu0 %v326
        %v487 = vpop.f32.mrb[0].mxu0
        %v488 = vadd.f32 %v414, %v487
        %v489 = vpop.f32.mrb[0].mxu0
        %490 = vdwg.mxu0
        %s491 = scalar_lea.vmem %s249, 16 [#allocation2]
        %492 = vst [vmem:[%s491] sm:$0xff] %v483
        %493 = vst [vmem:[%s491 + $0x8] sm:$0xff] %v488
        %s494 = smul.u32 2, %s18
        %p495 = scmp.lt.s32.totalorder %s494, 3
        %s496 = scalar_select %p495, %s494, 3
        %s497 = smul.addr %s496, 8
        %s498 = scalar_lea.vmem %s5, %s497
        %s499 = sand.u32 %s162, 1
        %s500 = sand.u32 %s162, 1
        %s501 = smul.addr %s500, 32
        %s502 = scalar_lea.vmem [#allocation2], %s501
        // Predicated region
        $region41: #{global_attention_rnn.3} parent=39 // pred_check
          %p503 = pneg %p146
        $region42: #{global_attention_rnn.3} parent=39 // pred_check_branch
          %505 = sbr.rel (%p503) target = $region44
        $region43: #{global_attention_rnn.3} parent=39 // pred_region
          %s506 = smul.u32 2, %s18
        $region44: #{global_attention_rnn.3} parent=39 // pred_fallthru
          _
        // Predicated region
        $region45: #{global_attention_rnn.3} parent=39 // pred_check
          %p507 = pneg %p172
        $region46: #{global_attention_rnn.3} parent=39 // pred_check_branch
          %509 = sbr.rel (%p507) target = $region48
        $region47: #{global_attention_rnn.3} parent=39 // pred_region
          %s510 = smul.u32 2, %s18
          %s511 = smul.addr %s510, 8
          %s512 = scalar_lea.vmem %s6, %s511
          // Predicated region
          $region49: #{global_attention_rnn.3} parent=47 // pred_check
            _
          $region50: #{global_attention_rnn.3} parent=47 // pred_check_branch
            %514 = sbr.rel (0) target = $region52
          $region51: #{global_attention_rnn.3} parent=47 // pred_region
            // Predicated region
            $region53: #{global_attention_rnn.3} parent=51 // pred_check
              _
            $region54: #{global_attention_rnn.3} parent=51 // pred_check_branch
              %516 = sbr.rel (0) target = $region56
            $region55: #{global_attention_rnn.3} parent=51 // pred_region
              // Predicated region
              $region68: #{global_attention_rnn.3} parent=55 // pred_check
                _
              $region69: #{global_attention_rnn.3} parent=55 // pred_check_branch
                %537 = sbr.rel (0) target = $region71
              $region70: #{global_attention_rnn.3} parent=55 // pred_region
                loop: start=0, step=1, limit=1
                $region72: #{global_attention_rnn.3} parent=70 // loop_pre_header
                  _
                $region73: #{global_attention_rnn.3} parent=70 // loop_header
                  %s539 = sphi 0, %s543
                  %p540 = scmp.ge.s32.totalorder %s539, 1
                  %s544 = sphi %s502, %s502
                  %s545 = sphi %s512, %s512
                $region74: #{global_attention_rnn.3} parent=70 // loop_header_branch
                  %542 = sbr.rel (%p540) target = $region78
                $region75: #{global_attention_rnn.3} parent=70 // loop_body
                  %v546 = vld [vmem:[%s544] sm:$0xff]
                  %547 = vst [vmem:[%s545] sm:$0xff] %v546
                  %v548 = vld [vmem:[%s544 + $0x8] sm:$0xff]
                  %549 = vst [vmem:[%s545 + $0x8] sm:$0xff] %v548
                  %v550 = vld [vmem:[%s544 + $0x10] sm:$0xff]
                  %551 = vst [vmem:[%s545 + $0x20] sm:$0xff] %v550
                  %v552 = vld [vmem:[%s544 + $0x18] sm:$0xff]
                  %553 = vst [vmem:[%s545 + $0x28] sm:$0xff] %v552
                $region76: #{global_attention_rnn.3} parent=70 // loop_footer
                  %s543 = sadd.s32 1, %s539
                $region77: #{global_attention_rnn.3} parent=70 // loop_footer_branch
                  %538 = sbr.rel target = $region73
                $region78: #{global_attention_rnn.3} parent=70 // loop_exit
                  _
              $region71: #{global_attention_rnn.3} parent=55 // pred_fallthru
                _
              // Predicated region
              $region79: #{global_attention_rnn.3} parent=55 // pred_check
                _
              $region80: #{global_attention_rnn.3} parent=55 // pred_check_branch
                %555 = sbr.rel target = $region82
              $region81: #{global_attention_rnn.3} parent=55 // pred_region
                _
              $region82: #{global_attention_rnn.3} parent=55 // pred_fallthru
                _
            $region56: #{global_attention_rnn.3} parent=51 // pred_fallthru
              _
            // Predicated region
            $region57: #{global_attention_rnn.3} parent=51 // pred_check
              _
            $region58: #{global_attention_rnn.3} parent=51 // pred_check_branch
              %518 = sbr.rel target = $region60
            $region59: #{global_attention_rnn.3} parent=51 // pred_region
              loop: start=0, step=1, limit=1
              $region61: #{global_attention_rnn.3} parent=59 // loop_pre_header
                _
              $region62: #{global_attention_rnn.3} parent=59 // loop_header
                %s521 = sphi 0, %s525
                %p522 = scmp.ge.s32.totalorder %s521, 1
                %s526 = sphi %s502, %s502
                %s527 = sphi %s512, %s512
              $region63: #{global_attention_rnn.3} parent=59 // loop_header_branch
                %524 = sbr.rel (%p522) target = $region67
              $region64: #{global_attention_rnn.3} parent=59 // loop_body
                %v528 = vld [vmem:[%s526] sm:$0xff]
                %529 = vst [vmem:[%s527] sm:$0xff] %v528
                %v530 = vld [vmem:[%s526 + $0x8] sm:$0xff]
                %531 = vst [vmem:[%s527 + $0x8] sm:$0xff] %v530
                %v532 = vld [vmem:[%s526 + $0x10] sm:$0xff]
                %533 = vst [vmem:[%s527 + $0x20] sm:$0xff] %v532
                %v534 = vld [vmem:[%s526 + $0x18] sm:$0xff]
                %535 = vst [vmem:[%s527 + $0x28] sm:$0xff] %v534
              $region65: #{global_attention_rnn.3} parent=59 // loop_footer
                %s525 = sadd.s32 1, %s521
              $region66: #{global_attention_rnn.3} parent=59 // loop_footer_branch
                %520 = sbr.rel target = $region62
              $region67: #{global_attention_rnn.3} parent=59 // loop_exit
                _
            $region60: #{global_attention_rnn.3} parent=51 // pred_fallthru
              _
          $region52: #{global_attention_rnn.3} parent=47 // pred_fallthru
            _
          %556 = vnop
        $region48: #{global_attention_rnn.3} parent=39 // pred_fallthru
          _
      $region40: #{global_attention_rnn.3} parent=5 // pred_fallthru
        _
      %p557 = scmp.le.s32.totalorder 2, %s13
      // Predicated region
      $region83: #{global_attention_rnn.3} parent=5 // pred_check
        %p558 = pneg %p557
      $region84: #{global_attention_rnn.3} parent=5 // pred_check_branch
        %560 = sbr.rel (%p558) target = $region86
      $region85: #{global_attention_rnn.3} parent=5 // pred_region
        %s561 = ssub.s32 %s13, 2
        // Predicated region
        $region87: #{global_attention_rnn.3} parent=85 // pred_check
          %p562 = pneg %p152
        $region88: #{global_attention_rnn.3} parent=85 // pred_check_branch
          %564 = sbr.rel (%p562) target = $region90
        $region89: #{global_attention_rnn.3} parent=85 // pred_region
          %s565 = smul.u32 2, %s19
          %p566 = scmp.lt.s32.totalorder %s565, 3
          %s567 = scalar_select %p566, %s565, 3
          %s568 = smul.addr %s567, 8
          %s569 = scalar_lea.vmem %s5, %s568
        $region90: #{global_attention_rnn.3} parent=85 // pred_fallthru
          _
        // Predicated region
        $region91: #{global_attention_rnn.3} parent=85 // pred_check
          %p570 = pneg %p178
        $region92: #{global_attention_rnn.3} parent=85 // pred_check_branch
          %572 = sbr.rel (%p570) target = $region94
        $region93: #{global_attention_rnn.3} parent=85 // pred_region
          %s573 = sand.u32 %s163, 1
          %s574 = sand.u32 %s163, 1
          %s575 = smul.addr %s574, 32
          %s576 = scalar_lea.vmem [#allocation2], %s575
        $region94: #{global_attention_rnn.3} parent=85 // pred_fallthru
          _
      $region86: #{global_attention_rnn.3} parent=5 // pred_fallthru
        _
    $region6: #{global_attention_rnn.3} parent=1 // loop_footer
      %s17 = sadd.s32 1, %s13
    $region7: #{global_attention_rnn.3} parent=1 // loop_footer_branch
      %12 = sbr.rel target = $region3
    $region8: #{global_attention_rnn.3} parent=1 // loop_exit
      _

// kernel: global_attention_rnn.5
$region0: #{global_attention_rnn.5}
  #allocation0 [shape = 'u32[]', space=smem, size = 0x4, offset = 0x4, fixed_abs, tag = 'smem constant byte address 0x4 - core index']
  #allocation1 [shape = 'u32[144,128]{1,0:T(1,128)}', space=vmem, size = 0x12000, scoped, tag = 'internal scratch']
  #allocation2 [shape = 'f32[1,1]{1,0:T(1,128)S(1)}', space=vmem, size = 0x200, scoped, tag = 'scoped memory for global_attention_rnn.5']
  %s0 = inlined_call_operand.vmem [shape: f32[2,32,32], index: 0, kind: input, shape index: {}]
  %s1 = inlined_call_operand.vmem [shape: f32[32,16], index: 1, kind: input, shape index: {}]
  %s2 = inlined_call_operand.vmem [shape: f32[32,16], index: 2, kind: input, shape index: {}]
  %s3 = inlined_call_operand.<no memory space> [shape: f32[1,1], index: 3, kind: input, shape index: {}]
  %s4 = inlined_call_operand.vmem [shape: f32[64,16], index: 4, kind: input, shape index: {}]
  %s5 = inlined_call_operand.vmem [shape: f32[1,16], index: 5, kind: input, shape index: {}]
  %s6 = inlined_call_operand.vmem [shape: f32[1,16], index: 6, kind: input, shape index: {}]
  %s7 = inlined_call_operand.vmem [shape: f32[1,16], index: 7, kind: input, shape index: {}]
  %s8 = inlined_call_operand.vmem [shape: f32[32,16], index: 8, kind: output, shape index: {}]
  %s9 = sld [smem:[#allocation0]]
  $region103: #{global_attention_rnn.5} parent=0
    _
  %s11 = ssub.s32 1, %s9
  %s12 = scalar_select 0, %s11, %s9
  %v13 = vstv %s3
  %14 = vst [vmem:[#allocation2] sm:$0x1] %v13
  $region1: #{global_attention_rnn.5} parent=0
    #allocation3 [shape = 'u8[32768]{0}', space=vmem, size = 0x8000, scoped, tag = 'input window, operand 0']
    loop: start=0, step=1, limit=4
    $region2: #{global_attention_rnn.5} parent=1 // loop_pre_header
      _
    $region3: #{global_attention_rnn.5} parent=1 // loop_header
      %s16 = sphi 0, %s20
      %p17 = scmp.ge.s32.totalorder %s16, 4
      %s26 = sphi 0, %s28
      %s29 = sphi 0, %s26
      %s30 = sphi 0, %s29
      %s46 = sphi 0, %s30
      %s52 = sphi 0, %s54
      %s55 = sphi 0, %s52
      %s56 = sphi 0, %s55
      %s72 = sphi 0, %s56
      %s78 = sphi 0, %s80
      %s81 = sphi 0, %s78
      %s82 = sphi 0, %s81
      %s98 = sphi 0, %s82
      %s102 = sphi 0, %s102
      %s104 = sphi 0, %s102
      %s105 = sphi 0, %s104
      %s119 = sphi 0, %s105
      %s123 = sphi 0, %s123
      %s125 = sphi 0, %s123
      %s126 = sphi 0, %s125
      %s140 = sphi 0, %s126
      %s144 = sphi 0, %s144
      %s146 = sphi 0, %s144
      %s147 = sphi 0, %s146
      %s161 = sphi 0, %s147
      %s165 = sphi 0, %s165
      %s167 = sphi 0, %s165
      %s168 = sphi 0, %s167
      %s182 = sphi 0, %s168
      %s186 = sphi 0, %s186
      %s188 = sphi 0, %s186
      %s189 = sphi 0, %s188
      %s203 = sphi 0, %s189
      %s209 = sphi 0, %s211
      %s212 = sphi 0, %s209
      %s213 = sphi 0, %s212
      %s229 = sphi 0, %s213
    $region4: #{global_attention_rnn.5} parent=1 // loop_header_branch
      %19 = sbr.rel (%p17) target = $region8
    $region5: #{global_attention_rnn.5} parent=1 // loop_body
      %s21 = ssub.s32 %s16, 1
      %s22 = ssub.s32 %s16, 2
      %s23 = sadd.s32 %s16, 1
      %s24 = ssub.s32 %s16, %s23
      %p25 = scmp.eq.s32.totalorder %s24, 0
      %s27 = sadd.s32 %s26, 1
      %s28 = scalar_select %p25, %s26, %s27
      %p31 = pneg %p25
      %p32 = scmp.eq.s32.totalorder %s16, 1
      %p33 = por %p31, %p32
      %p34 = scmp.ne.s32.totalorder %s26, %s29
      %p35 = scmp.eq.s32.totalorder %s16, 0
      %p36 = por %p34, %p35
      %p37 = scmp.ne.s32.totalorder %s26, %s29
      %p38 = scmp.eq.s32.totalorder %s21, 1
      %p39 = por %p37, %p38
      %p40 = scmp.ne.s32.totalorder %s29, %s30
      %p41 = scmp.eq.s32.totalorder %s21, 0
      %p42 = por %p40, %p41
      %p43 = scmp.ne.s32.totalorder %s29, %s30
      %p44 = scmp.eq.s32.totalorder %s22, 1
      %p45 = por %p43, %p44
      %p47 = scmp.ne.s32.totalorder %s30, %s46
      %p48 = scmp.eq.s32.totalorder %s22, 0
      %p49 = por %p47, %p48
      %s50 = ssub.s32 %s16, %s23
      %p51 = scmp.eq.s32.totalorder %s50, 0
      %s53 = sadd.s32 %s52, 1
      %s54 = scalar_select %p51, %s52, %s53
      %p57 = pneg %p51
      %p58 = scmp.eq.s32.totalorder %s16, 1
      %p59 = por %p57, %p58
      %p60 = scmp.ne.s32.totalorder %s52, %s55
      %p61 = scmp.eq.s32.totalorder %s16, 0
      %p62 = por %p60, %p61
      %p63 = scmp.ne.s32.totalorder %s52, %s55
      %p64 = scmp.eq.s32.totalorder %s21, 1
      %p65 = por %p63, %p64
      %p66 = scmp.ne.s32.totalorder %s55, %s56
      %p67 = scmp.eq.s32.totalorder %s21, 0
      %p68 = por %p66, %p67
      %p69 = scmp.ne.s32.totalorder %s55, %s56
      %p70 = scmp.eq.s32.totalorder %s22, 1
      %p71 = por %p69, %p70
      %p73 = scmp.ne.s32.totalorder %s56, %s72
      %p74 = scmp.eq.s32.totalorder %s22, 0
      %p75 = por %p73, %p74
      %s76 = ssub.s32 %s16, %s23
      %p77 = scmp.eq.s32.totalorder %s76, 0
      %s79 = sadd.s32 %s78, 1
      %s80 = scalar_select %p77, %s78, %s79
      %p83 = pneg %p77
      %p84 = scmp.eq.s32.totalorder %s16, 1
      %p85 = por %p83, %p84
      %p86 = scmp.ne.s32.totalorder %s78, %s81
      %p87 = scmp.eq.s32.totalorder %s16, 0
      %p88 = por %p86, %p87
      %p89 = scmp.ne.s32.totalorder %s78, %s81
      %p90 = scmp.eq.s32.totalorder %s21, 1
      %p91 = por %p89, %p90
      %p92 = scmp.ne.s32.totalorder %s81, %s82
      %p93 = scmp.eq.s32.totalorder %s21, 0
      %p94 = por %p92, %p93
      %p95 = scmp.ne.s32.totalorder %s81, %s82
      %p96 = scmp.eq.s32.totalorder %s22, 1
      %p97 = por %p95, %p96
      %p99 = scmp.ne.s32.totalorder %s82, %s98
      %p100 = scmp.eq.s32.totalorder %s22, 0
      %p101 = por %p99, %p100
      %s103 = sadd.s32 %s102, 1
      %p106 = scmp.eq.s32.totalorder %s16, 1
      %p107 = scmp.ne.s32.totalorder %s102, %s104
      %p108 = scmp.eq.s32.totalorder %s16, 0
      %p109 = por %p107, %p108
      %p110 = scmp.ne.s32.totalorder %s102, %s104
      %p111 = scmp.eq.s32.totalorder %s21, 1
      %p112 = por %p110, %p111
      %p113 = scmp.ne.s32.totalorder %s104, %s105
      %p114 = scmp.eq.s32.totalorder %s21, 0
      %p115 = por %p113, %p114
      %p116 = scmp.ne.s32.totalorder %s104, %s105
      %p117 = scmp.eq.s32.totalorder %s22, 1
      %p118 = por %p116, %p117
      %p120 = scmp.ne.s32.totalorder %s105, %s119
      %p121 = scmp.eq.s32.totalorder %s22, 0
      %p122 = por %p120, %p121
      %s124 = sadd.s32 %s123, 1
      %p127 = scmp.eq.s32.totalorder %s16, 1
      %p128 = scmp.ne.s32.totalorder %s123, %s125
      %p129 = scmp.eq.s32.totalorder %s16, 0
      %p130 = por %p128, %p129
      %p131 = scmp.ne.s32.totalorder %s123, %s125
      %p132 = scmp.eq.s32.totalorder %s21, 1
      %p133 = por %p131, %p132
      %p134 = scmp.ne.s32.totalorder %s125, %s126
      %p135 = scmp.eq.s32.totalorder %s21, 0
      %p136 = por %p134, %p135
      %p137 = scmp.ne.s32.totalorder %s125, %s126
      %p138 = scmp.eq.s32.totalorder %s22, 1
      %p139 = por %p137, %p138
      %p141 = scmp.ne.s32.totalorder %s126, %s140
      %p142 = scmp.eq.s32.totalorder %s22, 0
      %p143 = por %p141, %p142
      %s145 = sadd.s32 %s144, 1
      %p148 = scmp.eq.s32.totalorder %s16, 1
      %p149 = scmp.ne.s32.totalorder %s144, %s146
      %p150 = scmp.eq.s32.totalorder %s16, 0
      %p151 = por %p149, %p150
      %p152 = scmp.ne.s32.totalorder %s144, %s146
      %p153 = scmp.eq.s32.totalorder %s21, 1
      %p154 = por %p152, %p153
      %p155 = scmp.ne.s32.totalorder %s146, %s147
      %p156 = scmp.eq.s32.totalorder %s21, 0
      %p157 = por %p155, %p156
      %p158 = scmp.ne.s32.totalorder %s146, %s147
      %p159 = scmp.eq.s32.totalorder %s22, 1
      %p160 = por %p158, %p159
      %p162 = scmp.ne.s32.totalorder %s147, %s161
      %p163 = scmp.eq.s32.totalorder %s22, 0
      %p164 = por %p162, %p163
      %s166 = sadd.s32 %s165, 1
      %p169 = scmp.eq.s32.totalorder %s16, 1
      %p170 = scmp.ne.s32.totalorder %s165, %s167
      %p171 = scmp.eq.s32.totalorder %s16, 0
      %p172 = por %p170, %p171
      %p173 = scmp.ne.s32.totalorder %s165, %s167
      %p174 = scmp.eq.s32.totalorder %s21, 1
      %p175 = por %p173, %p174
      %p176 = scmp.ne.s32.totalorder %s167, %s168
      %p177 = scmp.eq.s32.totalorder %s21, 0
      %p178 = por %p176, %p177
      %p179 = scmp.ne.s32.totalorder %s167, %s168
      %p180 = scmp.eq.s32.totalorder %s22, 1
      %p181 = por %p179, %p180
      %p183 = scmp.ne.s32.totalorder %s168, %s182
      %p184 = scmp.eq.s32.totalorder %s22, 0
      %p185 = por %p183, %p184
      %s187 = sadd.s32 %s186, 1
      %p190 = scmp.eq.s32.totalorder %s16, 1
      %p191 = scmp.ne.s32.totalorder %s186, %s188
      %p192 = scmp.eq.s32.totalorder %s16, 0
      %p193 = por %p191, %p192
      %p194 = scmp.ne.s32.totalorder %s186, %s188
      %p195 = scmp.eq.s32.totalorder %s21, 1
      %p196 = por %p194, %p195
      %p197 = scmp.ne.s32.totalorder %s188, %s189
      %p198 = scmp.eq.s32.totalorder %s21, 0
      %p199 = por %p197, %p198
      %p200 = scmp.ne.s32.totalorder %s188, %s189
      %p201 = scmp.eq.s32.totalorder %s22, 1
      %p202 = por %p200, %p201
      %p204 = scmp.ne.s32.totalorder %s189, %s203
      %p205 = scmp.eq.s32.totalorder %s22, 0
      %p206 = por %p204, %p205
      %s207 = ssub.s32 %s16, %s23
      %p208 = scmp.eq.s32.totalorder %s207, 0
      %s210 = sadd.s32 %s209, 1
      %s211 = scalar_select %p208, %s209, %s210
      %p214 = pneg %p208
      %p215 = scmp.eq.s32.totalorder %s16, 1
      %p216 = por %p214, %p215
      %p217 = scmp.ne.s32.totalorder %s209, %s212
      %p218 = scmp.eq.s32.totalorder %s16, 0
      %p219 = por %p217, %p218
      %p220 = scmp.ne.s32.totalorder %s209, %s212
      %p221 = scmp.eq.s32.totalorder %s21, 1
      %p222 = por %p220, %p221
      %p223 = scmp.ne.s32.totalorder %s212, %s213
      %p224 = scmp.eq.s32.totalorder %s21, 0
      %p225 = por %p223, %p224
      %p226 = scmp.ne.s32.totalorder %s212, %s213
      %p227 = scmp.eq.s32.totalorder %s22, 1
      %p228 = por %p226, %p227
      %p230 = scmp.ne.s32.totalorder %s213, %s229
      %p231 = scmp.eq.s32.totalorder %s22, 0
      %p232 = por %p230, %p231
      %p233 = scmp.le.s32.totalorder 1, %s16
      %p234 = scmp.lt.s32.totalorder %s16, 3
      %p235 = pnand %p233, %p234
      %p236 = pneg %p235
      // Predicated region
      $region9: #{global_attention_rnn.5} parent=5 // pred_check
        _
      $region10: #{global_attention_rnn.5} parent=5 // pred_check_branch
        %238 = sbr.rel (%p235) target = $region12
      $region11: #{global_attention_rnn.5} parent=5 // pred_region
        %s239 = ssub.s32 %s16, 1
        // Predicated region
        $region13: #{global_attention_rnn.5} parent=11 // pred_check
          %p240 = pneg %p115
        $region14: #{global_attention_rnn.5} parent=11 // pred_check_branch
          %242 = sbr.rel (%p240) target = $region16
        $region15: #{global_attention_rnn.5} parent=11 // pred_region
          _
        $region16: #{global_attention_rnn.5} parent=11 // pred_fallthru
          _
        // Predicated region
        $region17: #{global_attention_rnn.5} parent=11 // pred_check
          %p243 = pneg %p136
        $region18: #{global_attention_rnn.5} parent=11 // pred_check_branch
          %245 = sbr.rel (%p243) target = $region20
        $region19: #{global_attention_rnn.5} parent=11 // pred_region
          _
        $region20: #{global_attention_rnn.5} parent=11 // pred_fallthru
          _
        // Predicated region
        $region21: #{global_attention_rnn.5} parent=11 // pred_check
          %p246 = pneg %p157
        $region22: #{global_attention_rnn.5} parent=11 // pred_check_branch
          %248 = sbr.rel (%p246) target = $region24
        $region23: #{global_attention_rnn.5} parent=11 // pred_region
          _
        $region24: #{global_attention_rnn.5} parent=11 // pred_fallthru
          _
        // Predicated region
        $region25: #{global_attention_rnn.5} parent=11 // pred_check
          %p249 = pneg %p178
        $region26: #{global_attention_rnn.5} parent=11 // pred_check_branch
          %251 = sbr.rel (%p249) target = $region28
        $region27: #{global_attention_rnn.5} parent=11 // pred_region
          _
        $region28: #{global_attention_rnn.5} parent=11 // pred_fallthru
          _
        // Predicated region
        $region29: #{global_attention_rnn.5} parent=11 // pred_check
          %p252 = pneg %p199
        $region30: #{global_attention_rnn.5} parent=11 // pred_check_branch
          %254 = sbr.rel (%p252) target = $region32
        $region31: #{global_attention_rnn.5} parent=11 // pred_region
          _
        $region32: #{global_attention_rnn.5} parent=11 // pred_fallthru
          _
      $region12: #{global_attention_rnn.5} parent=5 // pred_fallthru
        _
      %p255 = scmp.lt.s32.totalorder %s16, 2
      // Predicated region
      $region33: #{global_attention_rnn.5} parent=5 // pred_check
        %p256 = pneg %p255
      $region34: #{global_attention_rnn.5} parent=5 // pred_check_branch
        %258 = sbr.rel (%p256) target = $region36
      $region35: #{global_attention_rnn.5} parent=5 // pred_region
        // Predicated region
        $region37: #{global_attention_rnn.5} parent=35 // pred_check
          %p259 = pneg %p36
        $region38: #{global_attention_rnn.5} parent=35 // pred_check_branch
          %261 = sbr.rel (%p259) target = $region40
        $region39: #{global_attention_rnn.5} parent=35 // pred_region
          %s262 = sand.u32 %s26, 1
          %s263 = sand.u32 %s26, 1
          %s264 = smul.addr %s263, 32
          %s265 = scalar_lea.vmem [#allocation3], %s264
          %s266 = smul.u32 2, %s16
          %s267 = smul.addr %s266, 8
          %s268 = scalar_lea.vmem %s0, %s267
          // Predicated region
          $region41: #{global_attention_rnn.5} parent=39 // pred_check
            _
          $region42: #{global_attention_rnn.5} parent=39 // pred_check_branch
            %270 = sbr.rel (0) target = $region44
          $region43: #{global_attention_rnn.5} parent=39 // pred_region
            // Predicated region
            $region45: #{global_attention_rnn.5} parent=43 // pred_check
              _
            $region46: #{global_attention_rnn.5} parent=43 // pred_check_branch
              %272 = sbr.rel (0) target = $region48
            $region47: #{global_attention_rnn.5} parent=43 // pred_region
              // Predicated region
              $region60: #{global_attention_rnn.5} parent=47 // pred_check
                _
              $region61: #{global_attention_rnn.5} parent=47 // pred_check_branch
                %293 = sbr.rel (0) target = $region63
              $region62: #{global_attention_rnn.5} parent=47 // pred_region
                loop: start=0, step=1, limit=1
                $region64: #{global_attention_rnn.5} parent=62 // loop_pre_header
                  _
                $region65: #{global_attention_rnn.5} parent=62 // loop_header
                  %s295 = sphi 0, %s299
                  %p296 = scmp.ge.s32.totalorder %s295, 1
                  %s300 = sphi %s268, %s268
                  %s301 = sphi %s265, %s265
                $region66: #{global_attention_rnn.5} parent=62 // loop_header_branch
                  %298 = sbr.rel (%p296) target = $region70
                $region67: #{global_attention_rnn.5} parent=62 // loop_body
                  %v302 = vld [vmem:[%s300] sm:$0xff]
                  %303 = vst [vmem:[%s301] sm:$0xff] %v302
                  %v304 = vld [vmem:[%s300 + $0x8] sm:$0xff]
                  %305 = vst [vmem:[%s301 + $0x8] sm:$0xff] %v304
                  %v306 = vld [vmem:[%s300 + $0x20] sm:$0xff]
                  %307 = vst [vmem:[%s301 + $0x10] sm:$0xff] %v306
                  %v308 = vld [vmem:[%s300 + $0x28] sm:$0xff]
                  %309 = vst [vmem:[%s301 + $0x18] sm:$0xff] %v308
                $region68: #{global_attention_rnn.5} parent=62 // loop_footer
                  %s299 = sadd.s32 1, %s295
                $region69: #{global_attention_rnn.5} parent=62 // loop_footer_branch
                  %294 = sbr.rel target = $region65
                $region70: #{global_attention_rnn.5} parent=62 // loop_exit
                  _
              $region63: #{global_attention_rnn.5} parent=47 // pred_fallthru
                _
              // Predicated region
              $region71: #{global_attention_rnn.5} parent=47 // pred_check
                _
              $region72: #{global_attention_rnn.5} parent=47 // pred_check_branch
                %311 = sbr.rel target = $region74
              $region73: #{global_attention_rnn.5} parent=47 // pred_region
                _
              $region74: #{global_attention_rnn.5} parent=47 // pred_fallthru
                _
            $region48: #{global_attention_rnn.5} parent=43 // pred_fallthru
              _
            // Predicated region
            $region49: #{global_attention_rnn.5} parent=43 // pred_check
              _
            $region50: #{global_attention_rnn.5} parent=43 // pred_check_branch
              %274 = sbr.rel target = $region52
            $region51: #{global_attention_rnn.5} parent=43 // pred_region
              loop: start=0, step=1, limit=1
              $region53: #{global_attention_rnn.5} parent=51 // loop_pre_header
                _
              $region54: #{global_attention_rnn.5} parent=51 // loop_header
                %s277 = sphi 0, %s281
                %p278 = scmp.ge.s32.totalorder %s277, 1
                %s282 = sphi %s268, %s268
                %s283 = sphi %s265, %s265
              $region55: #{global_attention_rnn.5} parent=51 // loop_header_branch
                %280 = sbr.rel (%p278) target = $region59
              $region56: #{global_attention_rnn.5} parent=51 // loop_body
                %v284 = vld [vmem:[%s282] sm:$0xff]
                %285 = vst [vmem:[%s283] sm:$0xff] %v284
                %v286 = vld [vmem:[%s282 + $0x8] sm:$0xff]
                %287 = vst [vmem:[%s283 + $0x8] sm:$0xff] %v286
                %v288 = vld [vmem:[%s282 + $0x20] sm:$0xff]
                %289 = vst [vmem:[%s283 + $0x10] sm:$0xff] %v288
                %v290 = vld [vmem:[%s282 + $0x28] sm:$0xff]
                %291 = vst [vmem:[%s283 + $0x18] sm:$0xff] %v290
              $region57: #{global_attention_rnn.5} parent=51 // loop_footer
                %s281 = sadd.s32 1, %s277
              $region58: #{global_attention_rnn.5} parent=51 // loop_footer_branch
                %276 = sbr.rel target = $region54
              $region59: #{global_attention_rnn.5} parent=51 // loop_exit
                _
            $region52: #{global_attention_rnn.5} parent=43 // pred_fallthru
              _
          $region44: #{global_attention_rnn.5} parent=39 // pred_fallthru
            _
          %312 = vnop
        $region40: #{global_attention_rnn.5} parent=35 // pred_fallthru
          _
        // Predicated region
        $region75: #{global_attention_rnn.5} parent=35 // pred_check
          %p313 = pneg %p62
        $region76: #{global_attention_rnn.5} parent=35 // pred_check_branch
          %315 = sbr.rel (%p313) target = $region78
        $region77: #{global_attention_rnn.5} parent=35 // pred_region
          %s316 = smul.u32 2, %s16
          %p317 = scmp.lt.s32.totalorder %s316, 3
          %s318 = scalar_select %p317, %s316, 3
          %s319 = smul.addr %s318, 8
          %s320 = scalar_lea.vmem %s1, %s319
          %s321 = smul.u32 2, %s16
        $region78: #{global_attention_rnn.5} parent=35 // pred_fallthru
          _
        // Predicated region
        $region79: #{global_attention_rnn.5} parent=35 // pred_check
          %p322 = pneg %p88
        $region80: #{global_attention_rnn.5} parent=35 // pred_check_branch
          %324 = sbr.rel (%p322) target = $region82
        $region81: #{global_attention_rnn.5} parent=35 // pred_region
          %s325 = smul.u32 2, %s16
          %p326 = scmp.lt.s32.totalorder %s325, 3
          %s327 = scalar_select %p326, %s325, 3
          %s328 = smul.addr %s327, 8
          %s329 = scalar_lea.vmem %s2, %s328
          %s330 = smul.u32 2, %s16
        $region82: #{global_attention_rnn.5} parent=35 // pred_fallthru
          _
      $region36: #{global_attention_rnn.5} parent=5 // pred_fallthru
        _
      %p331 = scmp.le.s32.totalorder 1, %s16
      %p332 = scmp.lt.s32.totalorder %s16, 3
      %p333 = pnand %p331, %p332
      %p334 = pneg %p333
      // Predicated region
      $region83: #{global_attention_rnn.5} parent=5 // pred_check
        _
      $region84: #{global_attention_rnn.5} parent=5 // pred_check_branch
        %336 = sbr.rel (%p333) target = $region86
      $region85: #{global_attention_rnn.5} parent=5 // pred_region
        %s337 = ssub.s32 %s16, 1
        %s338 = sand.u32 %s29, 1
        %s339 = sand.u32 %s29, 1
        %s340 = smul.addr %s339, 32
        %s341 = scalar_lea.vmem [#allocation3], %s340
        // Predicated region
        $region87: #{global_attention_rnn.5} parent=85 // pred_check
          %p342 = pneg %p42
        $region88: #{global_attention_rnn.5} parent=85 // pred_check_branch
          %344 = sbr.rel (%p342) target = $region90
        $region89: #{global_attention_rnn.5} parent=85 // pred_region
          _
        $region90: #{global_attention_rnn.5} parent=85 // pred_fallthru
          _
        %s345 = sand.u32 %s29, 1
        %s346 = sand.u32 %s29, 1
        %s347 = smul.addr %s346, 32
        %s348 = scalar_lea.vmem [#allocation3], %s347
        %p349 = pneg %p42
        %p350 = pneg %p39
        %s351 = smul.u32 2, %s21
        %p352 = scmp.lt.s32.totalorder %s351, 3
        %s353 = scalar_select %p352, %s351, 3
        %s354 = smul.addr %s353, 8
        %s355 = scalar_lea.vmem %s1, %s354
        %p356 = pneg %p68
        %p357 = pneg %p65
        %s358 = smul.u32 2, %s21
        %p359 = scmp.lt.s32.totalorder %s358, 3
        %s360 = scalar_select %p359, %s358, 3
        %s361 = smul.addr %s360, 8
        %s362 = scalar_lea.vmem %s2, %s361
        %p363 = pneg %p94
        %p364 = pneg %p91
        %p365 = pneg %p115
        %p366 = pneg %p112
        %p367 = pneg %p136
        %p368 = pneg %p133
        %p369 = pneg %p157
        %p370 = pneg %p154
        %p371 = pneg %p178
        %p372 = pneg %p175
        %p373 = pneg %p199
        %p374 = pneg %p196
        %p375 = pneg %p225
        %p376 = pneg %p222
        %s377 = smul.u32 2, %s21
        %p378 = scmp.lt.s32.totalorder %s377, 3
        %s379 = scalar_select %p378, %s377, 3
        %s380 = smul.addr %s379, 8
        %s381 = scalar_lea.vmem %s8, %s380
        %s382 = smul.u32 2, %s21
        %s383 = smul.u32 2, %s21
        %p384 = scmp.lt.s32.totalorder %s383, 3
        %s385 = scalar_select %p384, %s383, 3
        %s386 = smul.addr %s385, 8
        %s387 = scalar_lea.vmem %s1, %s386
        %s388 = smul.u32 2, %s21
        %s389 = smul.u32 2, %s21
        %p390 = scmp.lt.s32.totalorder %s389, 3
        %s391 = scalar_select %p390, %s389, 3
        %s392 = smul.addr %s391, 8
        %s393 = scalar_lea.vmem %s2, %s392
        %s394 = smul.u32 2, %s21
        %s395 = smul.u32 2, %s21
        %p396 = scmp.lt.s32.totalorder %s395, 3
        %s397 = scalar_select %p396, %s395, 3
        %s398 = smul.addr %s397, 8
        %s399 = scalar_lea.vmem %s8, %s398
        %s400 = smul.u32 2, %s21
        %v401 = vld [vmem:[#allocation2] sm:$0x1]
        %v402 = vld [vmem:[%s341] sm:$0xff]
        %v403 = vld [vmem:[%s341 + $0x8] sm:$0xff]
        %s404 = scalar_lea.vmem %s341, 16 [#allocation3]
        %v405 = vld [vmem:[%s404] sm:$0xff]
        %v406 = vld [vmem:[%s404 + $0x8] sm:$0xff]
        %409 = vrot.lane.b32.xlu0 %v405, 32
        %v410 = vpop.permute.xlu0 %409
        %411 = vrot.lane.b32.xlu0 %v406, 32
        %v412 = vpop.permute.xlu0 %411
        %vm415 = vcmask 261120
        %v416 = vsel %vm415, %v402, %v410
        %v417 = vsel %vm415, %v403, %v412
        %vm418 = vcmp.ge.f32.partialorder %v416, 0.0
        %vm419 = vcmp.ge.f32.partialorder %v417, 0.0
        %v421 = vlaneseq
        %v422 = vshrl.u32 %v421, 7
        %v423 = vsub.s32 0, %v422
        %v424 = vrot.slane %v401, %v423
        %425 = vset.pattern.permute.xlu0 0
        %426 = vperm.xlu0 %425, %v424
        %v427 = vpop.permute.xlu0 %426
        %v429 = vmul.f32 %v427, %v416
        %v430 = vmul.f32 %v427, %v417
        %v431 = vsel %vm418, %v416, %v429
        %v432 = vsel %vm419, %v417, %v430
        %v433 = vld [vmem:[%s4] sm:$0xff]
        %v434 = vld [vmem:[%s4 + $0x8] sm:$0xff]
        %v435 = vld [vmem:[%s4 + $0x10] sm:$0xff]
        %v436 = vld [vmem:[%s4 + $0x18] sm:$0xff]
        %v437 = vld [vmem:[%s4 + $0x20] sm:$0xff]
        %v438 = vld [vmem:[%s4 + $0x28] sm:$0xff]
        %v439 = vld [vmem:[%s4 + $0x30] sm:$0xff]
        %v440 = vld [vmem:[%s4 + $0x38] sm:$0xff]
        %v441 = vld [vmem:[%s5] sm:$0x1]
        %v443 = vlaneseq
        %v444 = vshrl.u32 %v443, 7
        %v445 = vsub.s32 0, %v444
        %v446 = vrot.slane %v441, %v445
        %vm448 = vcmask 523264
        %v450 = vsel %vm448, %v431, 0
        %v453 = vsel %vm448, %v432, 0
        %455 = vmatprep.subr.mxu0 0.0
        %456 = vmatpush1.msra.mxu0 %v433
        %457 = vmatprep.subr.mxu0 0.0
        %458 = vmatpush1.msra.mxu0 %v434
        %459 = vmatprep.subr.mxu0 0.0
        %460 = vmatpush1.msra.mxu0 %v435
        %461 = vmatprep.subr.mxu0 0.0
        %462 = vmatpush1.msra.mxu0 %v436
        %463 = vmatprep.subr.mxu0 0.0
        %464 = vmatpush1.msra.mxu0 %v437
        %465 = vmatprep.subr.mxu0 0.0
        %466 = vmatpush1.msra.mxu0 %v438
        %467 = vmatprep.subr.mxu0 0.0
        %468 = vmatpush1.msra.mxu0 %v439
        %469 = vmatprep.subr.mxu0 0.0
        %470 = vmatpush1.msra.mxu0 %v440
        %471 = vmatprep.subr.mxu0 0.0
        %472 = vmatpush1.msra.mxu0 0.0
        %473 = vmatprep.subr.mxu0 0.0
        %474 = vmatpush1.msra.mxu0 0.0
        %475 = vmatprep.subr.mxu0 0.0
        %476 = vmatpush1.msra.mxu0 0.0
        %477 = vmatprep.subr.mxu0 0.0
        %478 = vmatpush1.msra.mxu0 0.0
        %479 = vmatprep.subr.mxu0 0.0
        %480 = vmatpush1.msra.mxu0 0.0
        %481 = vmatprep.subr.mxu0 0.0
        %482 = vmatpush1.msra.mxu0 0.0
        %483 = vmatprep.subr.mxu0 0.0
        %484 = vmatpush1.msra.mxu0 0.0
        %485 = vmatprep.subr.mxu0 0.0
        %486 = vmatpush1.msra.mxu0 0.0
        %487 = vmatprep.subr.mxu0 0.0
        %488 = vmatpush1.msra.mxu0 0.0
        %489 = vmatprep.subr.mxu0 0.0
        %490 = vmatpush1.msra.mxu0 0.0
        %491 = vmatprep.subr.mxu0 0.0
        %492 = vmatpush1.msra.mxu0 0.0
        %493 = vmatprep.subr.mxu0 0.0
        %494 = vmatpush1.msra.mxu0 0.0
        %495 = vmatprep.subr.mxu0 0.0
        %496 = vmatpush1.msra.mxu0 0.0
        %497 = vmatprep.subr.mxu0 0.0
        %498 = vmatpush1.msra.mxu0 0.0
        %499 = vmatprep.subr.mxu0 0.0
        %500 = vmatpush1.msra.mxu0 0.0
        %501 = vmatprep.subr.mxu0 0.0
        %502 = vmatpush1.msra.mxu0 0.0
        %503 = vmatprep.subr.mxu0 0.0
        %504 = vmatpush1.msra.mxu0 0.0
        %505 = vmatprep.subr.mxu0 0.0
        %506 = vmatpush1.msra.mxu0 0.0
        %507 = vmatprep.subr.mxu0 0.0
        %508 = vmatpush1.msra.mxu0 0.0
        %509 = vmatprep.subr.mxu0 0.0
        %510 = vmatpush1.msra.mxu0 0.0
        %511 = vmatprep.subr.mxu0 0.0
        %512 = vmatpush1.msra.mxu0 0.0
        %513 = vmatprep.subr.mxu0 0.0
        %514 = vmatpush1.msra.mxu0 0.0
        %515 = vmatprep.subr.mxu0 0.0
        %516 = vmatpush1.msra.mxu0 0.0
        %517 = vmatprep.subr.mxu0 0.0
        %518 = vmatpush1.msra.mxu0 0.0
        %519 = vmatprep.mubr.f32.mxu0 0.0
        %520 = vmatmul.mubr.f32.gmra.mrb[0].mxu0 %v450
        %v521 = vpop.f32.mrb[0].mxu0
        %v522 = vadd.f32 %v446, %v521
        %v523 = vpop.f32.mrb[0].mxu0
        %524 = vmatprep.mubr.f32.mxu0 0.0
        %525 = vmatmul.mubr.f32.gmra.mrb[0].mxu0 %v453
        %v526 = vpop.f32.mrb[0].mxu0
        %v527 = vadd.f32 %v446, %v526
        %v528 = vpop.f32.mrb[0].mxu0
        %529 = vdwg.mxu0
        %v530 = vld [vmem:[%s387] sm:$0xff]
        %v531 = vld [vmem:[%s387 + $0x8] sm:$0xff]
        %v532 = vadd.f32 %v522, %v530
        %v533 = vadd.f32 %v527, %v531
        %vm534 = vcmask 130048
        %v535 = vsel %vm534, %v532, 0.0
        %536 = vadd.xlane.f32.xlu0 %v535
        %v537 = vpop.xlane.xlu0 %536
        %v538 = vsel %vm534, %v533, 0.0
        %539 = vadd.xlane.f32.xlu0 %v538
        %v540 = vpop.xlane.xlu0 %539
        %v541 = vrcp.pop 16.0
        %v542 = vmul.f32 %v537, %v541
        %v543 = vmul.f32 %v540, %v541
        %v544 = vsub.f32 %v532, %v542
        %v545 = vsub.f32 %v533, %v543
        %v546 = vmul.f32 %v544, %v544
        %v547 = vmul.f32 %v545, %v545
        %v548 = vsel %vm534, %v546, 0.0
        %549 = vadd.xlane.f32.xlu0 %v548
        %v550 = vpop.xlane.xlu0 %549
        %v551 = vsel %vm534, %v547, 0.0
        %552 = vadd.xlane.f32.xlu0 %v551
        %v553 = vpop.xlane.xlu0 %552
        %v554 = vmul.f32 %v550, %v541
        %v555 = vmul.f32 %v553, %v541
        %v556 = vadd.f32 %v554, 1e-05
        %v557 = vadd.f32 %v555, 1e-05
        %v558 = vrsqrt.pop %v556
        %v559 = vrsqrt.pop %v557
        %v560 = vmul.f32 %v544, %v558
        %v561 = vmul.f32 %v545, %v559
        %v562 = vld [vmem:[%s6] sm:$0x1]
        %v564 = vlaneseq
        %v565 = vshrl.u32 %v564, 7
        %v566 = vsub.s32 0, %v565
        %v567 = vrot.slane %v562, %v566
        %v569 = vmul.f32 %v560, %v567
        %v570 = vmul.f32 %v561, %v567
        %v571 = vld [vmem:[%s7] sm:$0x1]
        %v573 = vlaneseq
        %v574 = vshrl.u32 %v573, 7
        %v575 = vsub.s32 0, %v574
        %v576 = vrot.slane %v571, %v575
        %v578 = vadd.f32 %v569, %v576
        %v579 = vadd.f32 %v570, %v576
        %v580 = vld [vmem:[%s393] sm:$0xff]
        %v581 = vld [vmem:[%s393 + $0x8] sm:$0xff]
        %v582 = vadd.f32 %v578, %v580
        %v583 = vadd.f32 %v579, %v581
        %584 = vst.msk [vmem:[%s399] sm:$0xff] %vm534, %v582
        %585 = vst.msk [vmem:[%s399 + $0x8] sm:$0xff] %vm534, %v583
        %s586 = smul.u32 2, %s21
        %p587 = scmp.lt.s32.totalorder %s586, 3
        %s588 = scalar_select %p587, %s586, 3
        %s589 = smul.addr %s588, 8
        %s590 = scalar_lea.vmem %s8, %s589
        // Predicated region
        $region91: #{global_attention_rnn.5} parent=85 // pred_check
          %p591 = pneg %p222
        $region92: #{global_attention_rnn.5} parent=85 // pred_check_branch
          %593 = sbr.rel (%p591) target = $region94
        $region93: #{global_attention_rnn.5} parent=85 // pred_region
          %s594 = smul.u32 2, %s21
        $region94: #{global_attention_rnn.5} parent=85 // pred_fallthru
          _
      $region86: #{global_attention_rnn.5} parent=5 // pred_fallthru
        _
      %p595 = scmp.le.s32.totalorder 2, %s16
      // Predicated region
      $region95: #{global_attention_rnn.5} parent=5 // pred_check
        %p596 = pneg %p595
      $region96: #{global_attention_rnn.5} parent=5 // pred_check_branch
        %598 = sbr.rel (%p596) target = $region98
      $region97: #{global_attention_rnn.5} parent=5 // pred_region
        %s599 = ssub.s32 %s16, 2
        // Predicated region
        $region99: #{global_attention_rnn.5} parent=97 // pred_check
          %p600 = pneg %p228
        $region100: #{global_attention_rnn.5} parent=97 // pred_check_branch
          %602 = sbr.rel (%p600) target = $region102
        $region101: #{global_attention_rnn.5} parent=97 // pred_region
          %s603 = smul.u32 2, %s22
          %p604 = scmp.lt.s32.totalorder %s603, 3
          %s605 = scalar_select %p604, %s603, 3
          %s606 = smul.addr %s605, 8
          %s607 = scalar_lea.vmem %s8, %s606
        $region102: #{global_attention_rnn.5} parent=97 // pred_fallthru
          _
      $region98: #{global_attention_rnn.5} parent=5 // pred_fallthru
        _
    $region6: #{global_attention_rnn.5} parent=1 // loop_footer
      %s20 = sadd.s32 1, %s16
    $region7: #{global_attention_rnn.5} parent=1 // loop_footer_branch
      %15 = sbr.rel target = $region3
    $region8: #{global_attention_rnn.5} parent=1 // loop_exit
      _

// kernel: global_attention_rnn.4
$region0: #{global_attention_rnn.4}
  #allocation0 [shape = 'u32[]', space=smem, size = 0x4, offset = 0x4, fixed_abs, tag = 'smem constant byte address 0x4 - core index']
  #allocation1 [shape = 'u32[144,128]{1,0:T(1,128)}', space=vmem, size = 0x12000, scoped, tag = 'internal scratch']
  #allocation2 [shape = 'f32[2,32]{1,0:T(2,128)}', space=vmem, size = 0x400, scoped, tag = 'scratch operand']
  #allocation3 [shape = 'f32[2,32]{1,0:T(2,128)}', space=vmem, size = 0x400, scoped, tag = 'scratch operand']
  %s0 = inlined_call_operand.vmem [shape: f32[2,16,2,128], index: 0, kind: input, shape index: {}]
  %s1 = inlined_call_operand.vmem [shape: f32[2,32,128], index: 1, kind: input, shape index: {}]
  %s2 = inlined_call_operand.vmem [shape: f32[2,16,2,32], index: 2, kind: output, shape index: {}]
  %s3 = sld [smem:[#allocation0]]
  $region45: #{global_attention_rnn.4} parent=0
    _
  %s5 = ssub.s32 1, %s3
  %s6 = scalar_select 0, %s5, %s3
  loop: start=0, step=1, limit=6
  $region2: #{global_attention_rnn.4} parent=0 // loop_pre_header
    _
  $region3: #{global_attention_rnn.4} parent=0 // loop_header
    %s8 = sphi 0, %s12
    %p9 = scmp.ge.s32.totalorder %s8, 6
    %s15 = sphi 0, %s27
    %s16 = sphi 0, %s23
    %s17 = sphi 0, %s15
    %s18 = sphi 0, %s16
    %s19 = sphi 0, %s17
    %s20 = sphi 0, %s18
    %s42 = sphi 0, %s44
    %s45 = sphi 0, %s42
    %s46 = sphi 0, %s45
    %s62 = sphi 0, %s46
    %s68 = sphi 0, %s70
    %s71 = sphi 0, %s68
    %s72 = sphi 0, %s71
    %s88 = sphi 0, %s72
    %s106 = sphi 0, %s108
    %s109 = sphi 0, %s106
    %s110 = sphi 0, %s109
    %s126 = sphi 0, %s110
  $region4: #{global_attention_rnn.4} parent=0 // loop_header_branch
    %11 = sbr.rel (%p9) target = $region8
  $region5: #{global_attention_rnn.4} parent=0 // loop_body
    %s13 = ssub.s32 %s8, 1
    %s14 = ssub.s32 %s8, 2
    %s21 = sadd.s32 1, %s16
    %p22 = scmp.ge.s32.totalorder %s21, 2
    %s23 = scalar_select %p22, 0, %s21
    %s24 = sadd.s32 1, %s15
    %s25 = scalar_select %p22, %s24, %s15
    %p26 = scmp.ge.s32.totalorder %s25, 2
    %s27 = scalar_select %p26, 0, %s25
    %s28 = ssub.s32 1, %s15
    %s29 = smul.u32 %s28, %s16
    %s30 = ssub.s32 1, %s16
    %s31 = smul.u32 %s15, %s30
    %s32 = sadd.s32 %s29, %s31
    %s33 = ssub.s32 1, %s27
    %s34 = smul.u32 %s33, %s23
    %s35 = ssub.s32 1, %s23
    %s36 = smul.u32 %s27, %s35
    %s37 = sadd.s32 %s34, %s36
    %s38 = ssub.s32 %s15, %s27
    %s39 = ssub.s32 %s32, %s37
    %s40 = sor.u32 %s38, %s39
    %p41 = scmp.eq.s32.totalorder %s40, 0
    %s43 = sadd.s32 %s42, 1
    %s44 = scalar_select %p41, %s42, %s43
    %p47 = pneg %p41
    %p48 = scmp.eq.s32.totalorder %s8, 3
    %p49 = por %p47, %p48
    %p50 = scmp.ne.s32.totalorder %s42, %s45
    %p51 = scmp.eq.s32.totalorder %s8, 0
    %p52 = por %p50, %p51
    %p53 = scmp.ne.s32.totalorder %s42, %s45
    %p54 = scmp.eq.s32.totalorder %s13, 3
    %p55 = por %p53, %p54
    %p56 = scmp.ne.s32.totalorder %s45, %s46
    %p57 = scmp.eq.s32.totalorder %s13, 0
    %p58 = por %p56, %p57
    %p59 = scmp.ne.s32.totalorder %s45, %s46
    %p60 = scmp.eq.s32.totalorder %s14, 3
    %p61 = por %p59, %p60
    %p63 = scmp.ne.s32.totalorder %s46, %s62
    %p64 = scmp.eq.s32.totalorder %s14, 0
    %p65 = por %p63, %p64
    %s66 = ssub.s32 %s15, %s27
    %p67 = scmp.eq.s32.totalorder %s66, 0
    %s69 = sadd.s32 %s68, 1
    %s70 = scalar_select %p67, %s68, %s69
    %p73 = pneg %p67
    %p74 = scmp.eq.s32.totalorder %s8, 3
    %p75 = por %p73, %p74
    %p76 = scmp.ne.s32.totalorder %s68, %s71
    %p77 = scmp.eq.s32.totalorder %s8, 0
    %p78 = por %p76, %p77
    %p79 = scmp.ne.s32.totalorder %s68, %s71
    %p80 = scmp.eq.s32.totalorder %s13, 3
    %p81 = por %p79, %p80
    %p82 = scmp.ne.s32.totalorder %s71, %s72
    %p83 = scmp.eq.s32.totalorder %s13, 0
    %p84 = por %p82, %p83
    %p85 = scmp.ne.s32.totalorder %s71, %s72
    %p86 = scmp.eq.s32.totalorder %s14, 3
    %p87 = por %p85, %p86
    %p89 = scmp.ne.s32.totalorder %s72, %s88
    %p90 = scmp.eq.s32.totalorder %s14, 0
    %p91 = por %p89, %p90
    %s92 = ssub.s32 1, %s15
    %s93 = smul.u32 %s92, %s16
    %s94 = ssub.s32 1, %s16
    %s95 = smul.u32 %s15, %s94
    %s96 = sadd.s32 %s93, %s95
    %s97 = ssub.s32 1, %s27
    %s98 = smul.u32 %s97, %s23
    %s99 = ssub.s32 1, %s23
    %s100 = smul.u32 %s27, %s99
    %s101 = sadd.s32 %s98, %s100
    %s102 = ssub.s32 %s15, %s27
    %s103 = ssub.s32 %s96, %s101
    %s104 = sor.u32 %s102, %s103
    %p105 = scmp.eq.s32.totalorder %s104, 0
    %s107 = sadd.s32 %s106, 1
    %s108 = scalar_select %p105, %s106, %s107
    %p111 = pneg %p105
    %p112 = scmp.eq.s32.totalorder %s8, 3
    %p113 = por %p111, %p112
    %p114 = scmp.ne.s32.totalorder %s106, %s109
    %p115 = scmp.eq.s32.totalorder %s8, 0
    %p116 = por %p114, %p115
    %p117 = scmp.ne.s32.totalorder %s106, %s109
    %p118 = scmp.eq.s32.totalorder %s13, 3
    %p119 = por %p117, %p118
    %p120 = scmp.ne.s32.totalorder %s109, %s110
    %p121 = scmp.eq.s32.totalorder %s13, 0
    %p122 = por %p120, %p121
    %p123 = scmp.ne.s32.totalorder %s109, %s110
    %p124 = scmp.eq.s32.totalorder %s14, 3
    %p125 = por %p123, %p124
    %p127 = scmp.ne.s32.totalorder %s110, %s126
    %p128 = scmp.eq.s32.totalorder %s14, 0
    %p129 = por %p127, %p128
    %p130 = scmp.le.s32.totalorder 1, %s8
    %p131 = scmp.lt.s32.totalorder %s8, 5
    %p132 = pnand %p130, %p131
    %p133 = pneg %p132
    // Predicated region
    $region9: #{global_attention_rnn.4} parent=5 // pred_check
      _
    $region10: #{global_attention_rnn.4} parent=5 // pred_check_branch
      %135 = sbr.rel (%p132) target = $region12
    $region11: #{global_attention_rnn.4} parent=5 // pred_region
      %s136 = ssub.s32 %s8, 1
    $region12: #{global_attention_rnn.4} parent=5 // pred_fallthru
      _
    %p137 = scmp.lt.s32.totalorder %s8, 4
    // Predicated region
    $region13: #{global_attention_rnn.4} parent=5 // pred_check
      %p138 = pneg %p137
    $region14: #{global_attention_rnn.4} parent=5 // pred_check_branch
      %140 = sbr.rel (%p138) target = $region16
    $region15: #{global_attention_rnn.4} parent=5 // pred_region
      // Predicated region
      $region17: #{global_attention_rnn.4} parent=15 // pred_check
        %p141 = pneg %p52
      $region18: #{global_attention_rnn.4} parent=15 // pred_check_branch
        %143 = sbr.rel (%p141) target = $region20
      $region19: #{global_attention_rnn.4} parent=15 // pred_region
        %s144 = ssub.s32 1, %s15
        %s145 = smul.u32 %s144, %s16
        %s146 = ssub.s32 1, %s16
        %s147 = smul.u32 %s15, %s146
        %s148 = sadd.s32 %s145, %s147
        %s149 = smul.u32 8, %s148
        %p150 = scmp.lt.s32.totalorder %s15, 1
        %s151 = scalar_select %p150, %s15, 1
        %p152 = scmp.lt.s32.totalorder %s149, 15
        %s153 = scalar_select %p152, %s149, 15
        %s154 = smul.addr %s151, 16
        %s155 = sadd.s32 %s153, %s154
        %s156 = smul.addr %s155, 2
        %s157 = scalar_lea.vmem %s0, %s156
        %s158 = ssub.s32 1, %s15
        %s159 = smul.u32 %s158, %s16
        %s160 = ssub.s32 1, %s16
        %s161 = smul.u32 %s15, %s160
        %s162 = sadd.s32 %s159, %s161
        %s163 = smul.u32 8, %s162
      $region20: #{global_attention_rnn.4} parent=15 // pred_fallthru
        _
      // Predicated region
      $region21: #{global_attention_rnn.4} parent=15 // pred_check
        %p164 = pneg %p78
      $region22: #{global_attention_rnn.4} parent=15 // pred_check_branch
        %166 = sbr.rel (%p164) target = $region24
      $region23: #{global_attention_rnn.4} parent=15 // pred_region
        %p167 = scmp.lt.s32.totalorder %s15, 1
        %s168 = scalar_select %p167, %s15, 1
        %s169 = smul.addr %s168, 4
        %s170 = smul.addr %s169, 8
        %s171 = scalar_lea.vmem %s1, %s170
      $region24: #{global_attention_rnn.4} parent=15 // pred_fallthru
        _
    $region16: #{global_attention_rnn.4} parent=5 // pred_fallthru
      _
    %p172 = scmp.le.s32.totalorder 1, %s8
    %p173 = scmp.lt.s32.totalorder %s8, 5
    %p174 = pnand %p172, %p173
    %p175 = pneg %p174
    // Predicated region
    $region25: #{global_attention_rnn.4} parent=5 // pred_check
      _
    $region26: #{global_attention_rnn.4} parent=5 // pred_check_branch
      %177 = sbr.rel (%p174) target = $region28
    $region27: #{global_attention_rnn.4} parent=5 // pred_region
      %s178 = ssub.s32 %s8, 1
      %s179 = ssub.s32 1, %s17
      %s180 = smul.u32 %s179, %s18
      %s181 = ssub.s32 1, %s18
      %s182 = smul.u32 %s17, %s181
      %s183 = sadd.s32 %s180, %s182
      %s184 = smul.u32 8, %s183
      %p185 = scmp.lt.s32.totalorder %s17, 1
      %s186 = scalar_select %p185, %s17, 1
      %p187 = scmp.lt.s32.totalorder %s184, 15
      %s188 = scalar_select %p187, %s184, 15
      %s189 = smul.addr %s186, 16
      %s190 = sadd.s32 %s188, %s189
      %s191 = smul.addr %s190, 2
      %s192 = scalar_lea.vmem %s0, %s191
      %p193 = pneg %p58
      %p194 = pneg %p55
      %p195 = scmp.lt.s32.totalorder %s17, 1
      %s196 = scalar_select %p195, %s17, 1
      %s197 = smul.addr %s196, 4
      %s198 = smul.addr %s197, 8
      %s199 = scalar_lea.vmem %s1, %s198
      %p200 = pneg %p84
      %p201 = pneg %p81
      %p202 = pneg %p122
      %p203 = pneg %p119
      %s204 = ssub.s32 1, %s17
      %s205 = smul.u32 %s204, %s18
      %s206 = ssub.s32 1, %s18
      %s207 = smul.u32 %s17, %s206
      %s208 = sadd.s32 %s205, %s207
      %s209 = smul.u32 8, %s208
      %p210 = scmp.lt.s32.totalorder %s17, 1
      %s211 = scalar_select %p210, %s17, 1
      %p212 = scmp.lt.s32.totalorder %s209, 15
      %s213 = scalar_select %p212, %s209, 15
      %s214 = smul.addr %s211, 16
      %s215 = sadd.s32 %s213, %s214
      %s216 = smul.addr %s215, 2
      %s217 = scalar_lea.vmem %s2, %s216
      %s218 = ssub.s32 1, %s17
      %s219 = smul.u32 %s218, %s18
      %s220 = ssub.s32 1, %s18
      %s221 = smul.u32 %s17, %s220
      %s222 = sadd.s32 %s219, %s221
      %s223 = smul.u32 8, %s222
      %p224 = scmp.lt.s32.totalorder %s17, 1
      %s225 = scalar_select %p224, %s17, 1
      %p226 = scmp.lt.s32.totalorder %s223, 15
      %s227 = scalar_select %p226, %s223, 15
      %s228 = smul.addr %s225, 16
      %s229 = sadd.s32 %s227, %s228
      %s230 = smul.addr %s229, 2
      %s231 = scalar_lea.vmem %s0, %s230
      %s232 = ssub.s32 1, %s17
      %s233 = smul.u32 %s232, %s18
      %s234 = ssub.s32 1, %s18
      %s235 = smul.u32 %s17, %s234
      %s236 = sadd.s32 %s233, %s235
      %s237 = smul.u32 8, %s236
      %p238 = scmp.lt.s32.totalorder %s17, 1
      %s239 = scalar_select %p238, %s17, 1
      %s240 = smul.addr %s239, 4
      %s241 = smul.addr %s240, 8
      %s242 = scalar_lea.vmem %s1, %s241
      %s243 = ssub.s32 1, %s17
      %s244 = smul.u32 %s243, %s18
      %s245 = ssub.s32 1, %s18
      %s246 = smul.u32 %s17, %s245
      %s247 = sadd.s32 %s244, %s246
      %s248 = smul.u32 8, %s247
      %p249 = scmp.lt.s32.totalorder %s17, 1
      %s250 = scalar_select %p249, %s17, 1
      %p251 = scmp.lt.s32.totalorder %s248, 15
      %s252 = scalar_select %p251, %s248, 15
      %s253 = smul.addr %s250, 16
      %s254 = sadd.s32 %s252, %s253
      %s255 = smul.addr %s254, 2
      %s256 = scalar_lea.vmem %s2, %s255
      %s257 = ssub.s32 1, %s17
      %s258 = smul.u32 %s257, %s18
      %s259 = ssub.s32 1, %s18
      %s260 = smul.u32 %s17, %s259
      %s261 = sadd.s32 %s258, %s260
      %s262 = smul.u32 8, %s261
      %p263 = scmp.eq.s32.totalorder %s18, 0
      // Predicated region
      $region29: #{global_attention_rnn.4} parent=27 // pred_check
        %p264 = pneg %p263
      $region30: #{global_attention_rnn.4} parent=27 // pred_check_branch
        %266 = sbr.rel (%p264) target = $region32
      $region31: #{global_attention_rnn.4} parent=27 // pred_region
        %vm267 = vcmask 254976
        %268 = vst.msk [vmem:[#allocation2] sm:$0x3] %vm267, 0.0
        %269 = vst.msk [vmem:[#allocation3] sm:$0x3] %vm267, 0.0
      $region32: #{global_attention_rnn.4} parent=27 // pred_fallthru
        _
      %v270 = vld [vmem:[%s242] sm:$0xff]
      %v271 = vld [vmem:[%s242 + $0x8] sm:$0xff]
      %v272 = vld [vmem:[%s242 + $0x10] sm:$0xff]
      %v273 = vld [vmem:[%s242 + $0x18] sm:$0xff]
      %v274 = vld [vmem:[#allocation2] sm:$0x3]
      %v275 = vld [vmem:[#allocation3] sm:$0x3]
      %s276 = smul.u32 %s17, 7
      %s277 = smul.u32 %s276, 2
      %s278 = scalar_lea.vmem %s231, %s277
      %v279 = vld [vmem:[%s278] sm:$0x3]
      %vm280 = vcmask 261120
      %v282 = vsel %vm280, %v274, 0
      %284 = vmatprep.subr.mxu0 0.0
      %285 = vmatpush1.msra.mxu0 %v270
      %286 = vmatprep.subr.mxu0 0.0
      %287 = vmatpush1.msra.mxu0 %v271
      %288 = vmatprep.subr.mxu0 0.0
      %289 = vmatpush1.msra.mxu0 %v272
      %290 = vmatprep.subr.mxu0 0.0
      %291 = vmatpush1.msra.mxu0 %v273
      %292 = vmatprep.subr.mxu0 0.0
      %293 = vmatpush1.msra.mxu0 0.0
      %294 = vmatprep.subr.mxu0 0.0
      %295 = vmatpush1.msra.mxu0 0.0
      %296 = vmatprep.subr.mxu0 0.0
      %297 = vmatpush1.msra.mxu0 0.0
      %298 = vmatprep.subr.mxu0 0.0
      %299 = vmatpush1.msra.mxu0 0.0
      %300 = vmatprep.subr.mxu0 0.0
      %301 = vmatpush1.msra.mxu0 0.0
      %302 = vmatprep.subr.mxu0 0.0
      %303 = vmatpush1.msra.mxu0 0.0
      %304 = vmatprep.subr.mxu0 0.0
      %305 = vmatpush1.msra.mxu0 0.0
      %306 = vmatprep.subr.mxu0 0.0
      %307 = vmatpush1.msra.mxu0 0.0
      %308 = vmatprep.subr.mxu0 0.0
      %309 = vmatpush1.msra.mxu0 0.0
      %310 = vmatprep.subr.mxu0 0.0
      %311 = vmatpush1.msra.mxu0 0.0
      %312 = vmatprep.subr.mxu0 0.0
      %313 = vmatpush1.msra.mxu0 0.0
      %314 = vmatprep.subr.mxu0 0.0
      %315 = vmatpush1.msra.mxu0 0.0
      %316 = vmatprep.subr.mxu0 0.0
      %317 = vmatpush1.msra.mxu0 0.0
      %318 = vmatprep.subr.mxu0 0.0
      %319 = vmatpush1.msra.mxu0 0.0
      %320 = vmatprep.subr.mxu0 0.0
      %321 = vmatpush1.msra.mxu0 0.0
      %322 = vmatprep.subr.mxu0 0.0
      %323 = vmatpush1.msra.mxu0 0.0
      %324 = vmatprep.subr.mxu0 0.0
      %325 = vmatpush1.msra.mxu0 0.0
      %326 = vmatprep.subr.mxu0 0.0
      %327 = vmatpush1.msra.mxu0 0.0
      %328 = vmatprep.subr.mxu0 0.0
      %329 = vmatpush1.msra.mxu0 0.0
      %330 = vmatprep.subr.mxu0 0.0
      %331 = vmatpush1.msra.mxu0 0.0
      %332 = vmatprep.subr.mxu0 0.0
      %333 = vmatpush1.msra.mxu0 0.0
      %334 = vmatprep.subr.mxu0 0.0
      %335 = vmatpush1.msra.mxu0 0.0
      %336 = vmatprep.subr.mxu0 0.0
      %337 = vmatpush1.msra.mxu0 0.0
      %338 = vmatprep.subr.mxu0 0.0
      %339 = vmatpush1.msra.mxu0 0.0
      %340 = vmatprep.subr.mxu0 0.0
      %341 = vmatpush1.msra.mxu0 0.0
      %342 = vmatprep.subr.mxu0 0.0
      %343 = vmatpush1.msra.mxu0 0.0
      %344 = vmatprep.subr.mxu0 0.0
      %345 = vmatpush1.msra.mxu0 0.0
      %346 = vmatprep.subr.mxu0 0.0
      %347 = vmatpush1.msra.mxu0 0.0
      %348 = vmatprep.mubr.f32.mxu0 0.0
      %349 = vmatmul.mubr.f32.gmra.mrb[0].mxu0 %v282
      %v350 = vpop.f32.mrb[0].mxu0
      %v351 = vadd.f32 0.0, %v350
      %v352 = vpop.f32.mrb[0].mxu0
      %353 = vdwg.mxu0
      %v354 = vadd.f32 %v279, %v351
      %v355 = vxor.u32 %v354, 2147483648
      %v356 = vmul.f32 %v355, 1.442695
      %v357 = vpow.pop %v356
      %v358 = vadd.f32 %v357, 1.0
      %v359 = vrcp.pop %v358
      %v360 = vmul.f32 1.0, %v359
      %v361 = vtanh.pop %v354
      %363 = vrot.lane.b32.xlu0 %v275, 32
      %v364 = vpop.permute.xlu0 %363
      %v366 = vmul.f32 %v360, %v364
      %368 = vrot.lane.b32.xlu0 %v361, 32
      %v369 = vpop.permute.xlu0 %368
      %v371 = vmul.f32 %v360, %v369
      %373 = vrot.lane.b32.xlu0 %v371, 32
      %v374 = vpop.permute.xlu0 %373
      %v376 = vadd.f32 %v366, %v374
      %v377 = vtanh.pop %v376
      %379 = vrot.lane.b32.xlu0 %v377, 32
      %v380 = vpop.permute.xlu0 %379
      %v382 = vmul.f32 %v360, %v380
      %384 = vrot.lane.b32.xlu0 %v382, 64
      %v385 = vpop.permute.xlu0 %384
      %s387 = scalar_lea.vmem %s256, %s277
      %vm388 = vcmask 254976
      %389 = vst.msk [vmem:[%s387] sm:$0x3] %vm388, %v385
      %s390 = ssub.s32 1, %s17
      %s391 = smul.u32 %s17, 6
      %s392 = sadd.s32 %s390, %s391
      %s393 = smul.u32 %s392, 2
      %s394 = scalar_lea.vmem %s231, %s393
      %v395 = vld [vmem:[%s394] sm:$0x3]
      %v396 = vsel %vm280, %v385, 0
      %398 = vmatprep.subr.mxu0 0.0
      %399 = vmatpush1.msra.mxu0 %v270
      %400 = vmatprep.subr.mxu0 0.0
      %401 = vmatpush1.msra.mxu0 %v271
      %402 = vmatprep.subr.mxu0 0.0
      %403 = vmatpush1.msra.mxu0 %v272
      %404 = vmatprep.subr.mxu0 0.0
      %405 = vmatpush1.msra.mxu0 %v273
      %406 = vmatprep.subr.mxu0 0.0
      %407 = vmatpush1.msra.mxu0 0.0
      %408 = vmatprep.subr.mxu0 0.0
      %409 = vmatpush1.msra.mxu0 0.0
      %410 = vmatprep.subr.mxu0 0.0
      %411 = vmatpush1.msra.mxu0 0.0
      %412 = vmatprep.subr.mxu0 0.0
      %413 = vmatpush1.msra.mxu0 0.0
      %414 = vmatprep.subr.mxu0 0.0
      %415 = vmatpush1.msra.mxu0 0.0
      %416 = vmatprep.subr.mxu0 0.0
      %417 = vmatpush1.msra.mxu0 0.0
      %418 = vmatprep.subr.mxu0 0.0
      %419 = vmatpush1.msra.mxu0 0.0
      %420 = vmatprep.subr.mxu0 0.0
      %421 = vmatpush1.msra.mxu0 0.0
      %422 = vmatprep.subr.mxu0 0.0
      %423 = vmatpush1.msra.mxu0 0.0
      %424 = vmatprep.subr.mxu0 0.0
      %425 = vmatpush1.msra.mxu0 0.0
      %426 = vmatprep.subr.mxu0 0.0
      %427 = vmatpush1.msra.mxu0 0.0
      %428 = vmatprep.subr.mxu0 0.0
      %429 = vmatpush1.msra.mxu0 0.0
      %430 = vmatprep.subr.mxu0 0.0
      %431 = vmatpush1.msra.mxu0 0.0
      %432 = vmatprep.subr.mxu0 0.0
      %433 = vmatpush1.msra.mxu0 0.0
      %434 = vmatprep.subr.mxu0 0.0
      %435 = vmatpush1.msra.mxu0 0.0
      %436 = vmatprep.subr.mxu0 0.0
      %437 = vmatpush1.msra.mxu0 0.0
      %438 = vmatprep.subr.mxu0 0.0
      %439 = vmatpush1.msra.mxu0 0.0
      %440 = vmatprep.subr.mxu0 0.0
      %441 = vmatpush1.msra.mxu0 0.0
      %442 = vmatprep.subr.mxu0 0.0
      %443 = vmatpush1.msra.mxu0 0.0
      %444 = vmatprep.subr.mxu0 0.0
      %445 = vmatpush1.msra.mxu0 0.0
      %446 = vmatprep.subr.mxu0 0.0
      %447 = vmatpush1.msra.mxu0 0.0
      %448 = vmatprep.subr.mxu0 0.0
      %449 = vmatpush1.msra.mxu0 0.0
      %450 = vmatprep.subr.mxu0 0.0
      %451 = vmatpush1.msra.mxu0 0.0
      %452 = vmatprep.subr.mxu0 0.0
      %453 = vmatpush1.msra.mxu0 0.0
      %454 = vmatprep.subr.mxu0 0.0
      %455 = vmatpush1.msra.mxu0 0.0
      %456 = vmatprep.subr.mxu0 0.0
      %457 = vmatpush1.msra.mxu0 0.0
      %458 = vmatprep.subr.mxu0 0.0
      %459 = vmatpush1.msra.mxu0 0.0
      %460 = vmatprep.subr.mxu0 0.0
      %461 = vmatpush1.msra.mxu0 0.0
      %462 = vmatprep.mubr.f32.mxu0 0.0
      %463 = vmatmul.mubr.f32.gmra.mrb[0].mxu0 %v396
      %v464 = vpop.f32.mrb[0].mxu0
      %v465 = vadd.f32 0.0, %v464
      %v466 = vpop.f32.mrb[0].mxu0
      %467 = vdwg.mxu0
      %v468 = vadd.f32 %v395, %v465
      %v469 = vxor.u32 %v468, 2147483648
      %v470 = vmul.f32 %v469, 1.442695
      %v471 = vpow.pop %v470
      %v472 = vadd.f32 %v471, 1.0
      %v473 = vrcp.pop %v472
      %v474 = vmul.f32 1.0, %v473
      %v475 = vtanh.pop %v468
      %v476 = vmul.f32 %v474, %v376
      %478 = vrot.lane.b32.xlu0 %v475, 32
      %v479 = vpop.permute.xlu0 %478
      %v481 = vmul.f32 %v474, %v479
      %483 = vrot.lane.b32.xlu0 %v481, 32
      %v484 = vpop.permute.xlu0 %483
      %v486 = vadd.f32 %v476, %v484
      %v487 = vtanh.pop %v486
      %489 = vrot.lane.b32.xlu0 %v487, 32
      %v490 = vpop.permute.xlu0 %489
      %v492 = vmul.f32 %v474, %v490
      %494 = vrot.lane.b32.xlu0 %v492, 64
      %v495 = vpop.permute.xlu0 %494
      %s497 = scalar_lea.vmem %s256, %s393
      %498 = vst.msk [vmem:[%s497] sm:$0x3] %vm388, %v495
      %s499 = smul.u32 %s390, 2
      %s500 = smul.u32 %s17, 5
      %s501 = sadd.s32 %s499, %s500
      %s502 = smul.u32 %s501, 2
      %s503 = scalar_lea.vmem %s231, %s502
      %v504 = vld [vmem:[%s503] sm:$0x3]
      %v505 = vsel %vm280, %v495, 0
      %507 = vmatprep.subr.mxu0 0.0
      %508 = vmatpush1.msra.mxu0 %v270
      %509 = vmatprep.subr.mxu0 0.0
      %510 = vmatpush1.msra.mxu0 %v271
      %511 = vmatprep.subr.mxu0 0.0
      %512 = vmatpush1.msra.mxu0 %v272
      %513 = vmatprep.subr.mxu0 0.0
      %514 = vmatpush1.msra.mxu0 %v273
      %515 = vmatprep.subr.mxu0 0.0
      %516 = vmatpush1.msra.mxu0 0.0
      %517 = vmatprep.subr.mxu0 0.0
      %518 = vmatpush1.msra.mxu0 0.0
      %519 = vmatprep.subr.mxu0 0.0
      %520 = vmatpush1.msra.mxu0 0.0
      %521 = vmatprep.subr.mxu0 0.0
      %522 = vmatpush1.msra.mxu0 0.0
      %523 = vmatprep.subr.mxu0 0.0
      %524 = vmatpush1.msra.mxu0 0.0
      %525 = vmatprep.subr.mxu0 0.0
      %526 = vmatpush1.msra.mxu0 0.0
      %527 = vmatprep.subr.mxu0 0.0
      %528 = vmatpush1.msra.mxu0 0.0
      %529 = vmatprep.subr.mxu0 0.0
      %530 = vmatpush1.msra.mxu0 0.0
      %531 = vmatprep.subr.mxu0 0.0
      %532 = vmatpush1.msra.mxu0 0.0
      %533 = vmatprep.subr.mxu0 0.0
      %534 = vmatpush1.msra.mxu0 0.0
      %535 = vmatprep.subr.mxu0 0.0
      %536 = vmatpush1.msra.mxu0 0.0
      %537 = vmatprep.subr.mxu0 0.0
      %538 = vmatpush1.msra.mxu0 0.0
      %539 = vmatprep.subr.mxu0 0.0
      %540 = vmatpush1.msra.mxu0 0.0
      %541 = vmatprep.subr.mxu0 0.0
      %542 = vmatpush1.msra.mxu0 0.0
      %543 = vmatprep.subr.mxu0 0.0
      %544 = vmatpush1.msra.mxu0 0.0
      %545 = vmatprep.subr.mxu0 0.0
      %546 = vmatpush1.msra.mxu0 0.0
      %547 = vmatprep.subr.mxu0 0.0
      %548 = vmatpush1.msra.mxu0 0.0
      %549 = vmatprep.subr.mxu0 0.0
      %550 = vmatpush1.msra.mxu0 0.0
      %551 = vmatprep.subr.mxu0 0.0
      %552 = vmatpush1.msra.mxu0 0.0
      %553 = vmatprep.subr.mxu0 0.0
      %554 = vmatpush1.msra.mxu0 0.0
      %555 = vmatprep.subr.mxu0 0.0
      %556 = vmatpush1.msra.mxu0 0.0
      %557 = vmatprep.subr.mxu0 0.0
      %558 = vmatpush1.msra.mxu0 0.0
      %559 = vmatprep.subr.mxu0 0.0
      %560 = vmatpush1.msra.mxu0 0.0
      %561 = vmatprep.subr.mxu0 0.0
      %562 = vmatpush1.msra.mxu0 0.0
      %563 = vmatprep.subr.mxu0 0.0
      %564 = vmatpush1.msra.mxu0 0.0
      %565 = vmatprep.subr.mxu0 0.0
      %566 = vmatpush1.msra.mxu0 0.0
      %567 = vmatprep.subr.mxu0 0.0
      %568 = vmatpush1.msra.mxu0 0.0
      %569 = vmatprep.subr.mxu0 0.0
      %570 = vmatpush1.msra.mxu0 0.0
      %571 = vmatprep.mubr.f32.mxu0 0.0
      %572 = vmatmul.mubr.f32.gmra.mrb[0].mxu0 %v505
      %v573 = vpop.f32.mrb[0].mxu0
      %v574 = vadd.f32 0.0, %v573
      %v575 = vpop.f32.mrb[0].mxu0
      %576 = vdwg.mxu0
      %v577 = vadd.f32 %v504, %v574
      %v578 = vxor.u32 %v577, 2147483648
      %v579 = vmul.f32 %v578, 1.442695
      %v580 = vpow.pop %v579
      %v581 = vadd.f32 %v580, 1.0
      %v582 = vrcp.pop %v581
      %v583 = vmul.f32 1.0, %v582
      %v584 = vtanh.pop %v577
      %v585 = vmul.f32 %v583, %v486
      %587 = vrot.lane.b32.xlu0 %v584, 32
      %v588 = vpop.permute.xlu0 %587
      %v590 = vmul.f32 %v583, %v588
      %592 = vrot.lane.b32.xlu0 %v590, 32
      %v593 = vpop.permute.xlu0 %592
      %v595 = vadd.f32 %v585, %v593
      %v596 = vtanh.pop %v595
      %598 = vrot.lane.b32.xlu0 %v596, 32
      %v599 = vpop.permute.xlu0 %598
      %v601 = vmul.f32 %v583, %v599
      %603 = vrot.lane.b32.xlu0 %v601, 64
      %v604 = vpop.permute.xlu0 %603
      %s606 = scalar_lea.vmem %s256, %s502
      %607 = vst.msk [vmem:[%s606] sm:$0x3] %vm388, %v604
      %s608 = smul.u32 %s390, 3
      %s609 = smul.u32 %s17, 4
      %s610 = sadd.s32 %s608, %s609
      %s611 = smul.u32 %s610, 2
      %s612 = scalar_lea.vmem %s231, %s611
      %v613 = vld [vmem:[%s612] sm:$0x3]
      %v614 = vsel %vm280, %v604, 0
      %616 = vmatprep.subr.mxu0 0.0
      %617 = vmatpush1.msra.mxu0 %v270
      %618 = vmatprep.subr.mxu0 0.0
      %619 = vmatpush1.msra.mxu0 %v271
      %620 = vmatprep.subr.mxu0 0.0
      %621 = vmatpush1.msra.mxu0 %v272
      %622 = vmatprep.subr.mxu0 0.0
      %623 = vmatpush1.msra.mxu0 %v273
      %624 = vmatprep.subr.mxu0 0.0
      %625 = vmatpush1.msra.mxu0 0.0
      %626 = vmatprep.subr.mxu0 0.0
      %627 = vmatpush1.msra.mxu0 0.0
      %628 = vmatprep.subr.mxu0 0.0
      %629 = vmatpush1.msra.mxu0 0.0
      %630 = vmatprep.subr.mxu0 0.0
      %631 = vmatpush1.msra.mxu0 0.0
      %632 = vmatprep.subr.mxu0 0.0
      %633 = vmatpush1.msra.mxu0 0.0
      %634 = vmatprep.subr.mxu0 0.0
      %635 = vmatpush1.msra.mxu0 0.0
      %636 = vmatprep.subr.mxu0 0.0
      %637 = vmatpush1.msra.mxu0 0.0
      %638 = vmatprep.subr.mxu0 0.0
      %639 = vmatpush1.msra.mxu0 0.0
      %640 = vmatprep.subr.mxu0 0.0
      %641 = vmatpush1.msra.mxu0 0.0
      %642 = vmatprep.subr.mxu0 0.0
      %643 = vmatpush1.msra.mxu0 0.0
      %644 = vmatprep.subr.mxu0 0.0
      %645 = vmatpush1.msra.mxu0 0.0
      %646 = vmatprep.subr.mxu0 0.0
      %647 = vmatpush1.msra.mxu0 0.0
      %648 = vmatprep.subr.mxu0 0.0
      %649 = vmatpush1.msra.mxu0 0.0
      %650 = vmatprep.subr.mxu0 0.0
      %651 = vmatpush1.msra.mxu0 0.0
      %652 = vmatprep.subr.mxu0 0.0
      %653 = vmatpush1.msra.mxu0 0.0
      %654 = vmatprep.subr.mxu0 0.0
      %655 = vmatpush1.msra.mxu0 0.0
      %656 = vmatprep.subr.mxu0 0.0
      %657 = vmatpush1.msra.mxu0 0.0
      %658 = vmatprep.subr.mxu0 0.0
      %659 = vmatpush1.msra.mxu0 0.0
      %660 = vmatprep.subr.mxu0 0.0
      %661 = vmatpush1.msra.mxu0 0.0
      %662 = vmatprep.subr.mxu0 0.0
      %663 = vmatpush1.msra.mxu0 0.0
      %664 = vmatprep.subr.mxu0 0.0
      %665 = vmatpush1.msra.mxu0 0.0
      %666 = vmatprep.subr.mxu0 0.0
      %667 = vmatpush1.msra.mxu0 0.0
      %668 = vmatprep.subr.mxu0 0.0
      %669 = vmatpush1.msra.mxu0 0.0
      %670 = vmatprep.subr.mxu0 0.0
      %671 = vmatpush1.msra.mxu0 0.0
      %672 = vmatprep.subr.mxu0 0.0
      %673 = vmatpush1.msra.mxu0 0.0
      %674 = vmatprep.subr.mxu0 0.0
      %675 = vmatpush1.msra.mxu0 0.0
      %676 = vmatprep.subr.mxu0 0.0
      %677 = vmatpush1.msra.mxu0 0.0
      %678 = vmatprep.subr.mxu0 0.0
      %679 = vmatpush1.msra.mxu0 0.0
      %680 = vmatprep.mubr.f32.mxu0 0.0
      %681 = vmatmul.mubr.f32.gmra.mrb[0].mxu0 %v614
      %v682 = vpop.f32.mrb[0].mxu0
      %v683 = vadd.f32 0.0, %v682
      %v684 = vpop.f32.mrb[0].mxu0
      %685 = vdwg.mxu0
      %v686 = vadd.f32 %v613, %v683
      %v687 = vxor.u32 %v686, 2147483648
      %v688 = vmul.f32 %v687, 1.442695
      %v689 = vpow.pop %v688
      %v690 = vadd.f32 %v689, 1.0
      %v691 = vrcp.pop %v690
      %v692 = vmul.f32 1.0, %v691
      %v693 = vtanh.pop %v686
      %v694 = vmul.f32 %v692, %v595
      %696 = vrot.lane.b32.xlu0 %v693, 32
      %v697 = vpop.permute.xlu0 %696
      %v699 = vmul.f32 %v692, %v697
      %701 = vrot.lane.b32.xlu0 %v699, 32
      %v702 = vpop.permute.xlu0 %701
      %v704 = vadd.f32 %v694, %v702
      %v705 = vtanh.pop %v704
      %707 = vrot.lane.b32.xlu0 %v705, 32
      %v708 = vpop.permute.xlu0 %707
      %v710 = vmul.f32 %v692, %v708
      %712 = vrot.lane.b32.xlu0 %v710, 64
      %v713 = vpop.permute.xlu0 %712
      %s715 = scalar_lea.vmem %s256, %s611
      %716 = vst.msk [vmem:[%s715] sm:$0x3] %vm388, %v713
      %s717 = smul.u32 %s390, 4
      %s718 = smul.u32 %s17, 3
      %s719 = sadd.s32 %s717, %s718
      %s720 = smul.u32 %s719, 2
      %s721 = scalar_lea.vmem %s231, %s720
      %v722 = vld [vmem:[%s721] sm:$0x3]
      %v723 = vsel %vm280, %v713, 0
      %725 = vmatprep.subr.mxu0 0.0
      %726 = vmatpush1.msra.mxu0 %v270
      %727 = vmatprep.subr.mxu0 0.0
      %728 = vmatpush1.msra.mxu0 %v271
      %729 = vmatprep.subr.mxu0 0.0
      %730 = vmatpush1.msra.mxu0 %v272
      %731 = vmatprep.subr.mxu0 0.0
      %732 = vmatpush1.msra.mxu0 %v273
      %733 = vmatprep.subr.mxu0 0.0
      %734 = vmatpush1.msra.mxu0 0.0
      %735 = vmatprep.subr.mxu0 0.0
      %736 = vmatpush1.msra.mxu0 0.0
      %737 = vmatprep.subr.mxu0 0.0
      %738 = vmatpush1.msra.mxu0 0.0
      %739 = vmatprep.subr.mxu0 0.0
      %740 = vmatpush1.msra.mxu0 0.0
      %741 = vmatprep.subr.mxu0 0.0
      %742 = vmatpush1.msra.mxu0 0.0
      %743 = vmatprep.subr.mxu0 0.0
      %744 = vmatpush1.msra.mxu0 0.0
      %745 = vmatprep.subr.mxu0 0.0
      %746 = vmatpush1.msra.mxu0 0.0
      %747 = vmatprep.subr.mxu0 0.0
      %748 = vmatpush1.msra.mxu0 0.0
      %749 = vmatprep.subr.mxu0 0.0
      %750 = vmatpush1.msra.mxu0 0.0
      %751 = vmatprep.subr.mxu0 0.0
      %752 = vmatpush1.msra.mxu0 0.0
      %753 = vmatprep.subr.mxu0 0.0
      %754 = vmatpush1.msra.mxu0 0.0
      %755 = vmatprep.subr.mxu0 0.0
      %756 = vmatpush1.msra.mxu0 0.0
      %757 = vmatprep.subr.mxu0 0.0
      %758 = vmatpush1.msra.mxu0 0.0
      %759 = vmatprep.subr.mxu0 0.0
      %760 = vmatpush1.msra.mxu0 0.0
      %761 = vmatprep.subr.mxu0 0.0
      %762 = vmatpush1.msra.mxu0 0.0
      %763 = vmatprep.subr.mxu0 0.0
      %764 = vmatpush1.msra.mxu0 0.0
      %765 = vmatprep.subr.mxu0 0.0
      %766 = vmatpush1.msra.mxu0 0.0
      %767 = vmatprep.subr.mxu0 0.0
      %768 = vmatpush1.msra.mxu0 0.0
      %769 = vmatprep.subr.mxu0 0.0
      %770 = vmatpush1.msra.mxu0 0.0
      %771 = vmatprep.subr.mxu0 0.0
      %772 = vmatpush1.msra.mxu0 0.0
      %773 = vmatprep.subr.mxu0 0.0
      %774 = vmatpush1.msra.mxu0 0.0
      %775 = vmatprep.subr.mxu0 0.0
      %776 = vmatpush1.msra.mxu0 0.0
      %777 = vmatprep.subr.mxu0 0.0
      %778 = vmatpush1.msra.mxu0 0.0
      %779 = vmatprep.subr.mxu0 0.0
      %780 = vmatpush1.msra.mxu0 0.0
      %781 = vmatprep.subr.mxu0 0.0
      %782 = vmatpush1.msra.mxu0 0.0
      %783 = vmatprep.subr.mxu0 0.0
      %784 = vmatpush1.msra.mxu0 0.0
      %785 = vmatprep.subr.mxu0 0.0
      %786 = vmatpush1.msra.mxu0 0.0
      %787 = vmatprep.subr.mxu0 0.0
      %788 = vmatpush1.msra.mxu0 0.0
      %789 = vmatprep.mubr.f32.mxu0 0.0
      %790 = vmatmul.mubr.f32.gmra.mrb[0].mxu0 %v723
      %v791 = vpop.f32.mrb[0].mxu0
      %v792 = vadd.f32 0.0, %v791
      %v793 = vpop.f32.mrb[0].mxu0
      %794 = vdwg.mxu0
      %v795 = vadd.f32 %v722, %v792
      %v796 = vxor.u32 %v795, 2147483648
      %v797 = vmul.f32 %v796, 1.442695
      %v798 = vpow.pop %v797
      %v799 = vadd.f32 %v798, 1.0
      %v800 = vrcp.pop %v799
      %v801 = vmul.f32 1.0, %v800
      %v802 = vtanh.pop %v795
      %v803 = vmul.f32 %v801, %v704
      %805 = vrot.lane.b32.xlu0 %v802, 32
      %v806 = vpop.permute.xlu0 %805
      %v808 = vmul.f32 %v801, %v806
      %810 = vrot.lane.b32.xlu0 %v808, 32
      %v811 = vpop.permute.xlu0 %810
      %v813 = vadd.f32 %v803, %v811
      %v814 = vtanh.pop %v813
      %816 = vrot.lane.b32.xlu0 %v814, 32
      %v817 = vpop.permute.xlu0 %816
      %v819 = vmul.f32 %v801, %v817
      %821 = vrot.lane.b32.xlu0 %v819, 64
      %v822 = vpop.permute.xlu0 %821
      %s824 = scalar_lea.vmem %s256, %s720
      %825 = vst.msk [vmem:[%s824] sm:$0x3] %vm388, %v822
      %s826 = smul.u32 %s390, 5
      %s827 = smul.u32 %s17, 2
      %s828 = sadd.s32 %s826, %s827
      %s829 = smul.u32 %s828, 2
      %s830 = scalar_lea.vmem %s231, %s829
      %v831 = vld [vmem:[%s830] sm:$0x3]
      %v832 = vsel %vm280, %v822, 0
      %834 = vmatprep.subr.mxu0 0.0
      %835 = vmatpush1.msra.mxu0 %v270
      %836 = vmatprep.subr.mxu0 0.0
      %837 = vmatpush1.msra.mxu0 %v271
      %838 = vmatprep.subr.mxu0 0.0
      %839 = vmatpush1.msra.mxu0 %v272
      %840 = vmatprep.subr.mxu0 0.0
      %841 = vmatpush1.msra.mxu0 %v273
      %842 = vmatprep.subr.mxu0 0.0
      %843 = vmatpush1.msra.mxu0 0.0
      %844 = vmatprep.subr.mxu0 0.0
      %845 = vmatpush1.msra.mxu0 0.0
      %846 = vmatprep.subr.mxu0 0.0
      %847 = vmatpush1.msra.mxu0 0.0
      %848 = vmatprep.subr.mxu0 0.0
      %849 = vmatpush1.msra.mxu0 0.0
      %850 = vmatprep.subr.mxu0 0.0
      %851 = vmatpush1.msra.mxu0 0.0
      %852 = vmatprep.subr.mxu0 0.0
      %853 = vmatpush1.msra.mxu0 0.0
      %854 = vmatprep.subr.mxu0 0.0
      %855 = vmatpush1.msra.mxu0 0.0
      %856 = vmatprep.subr.mxu0 0.0
      %857 = vmatpush1.msra.mxu0 0.0
      %858 = vmatprep.subr.mxu0 0.0
      %859 = vmatpush1.msra.mxu0 0.0
      %860 = vmatprep.subr.mxu0 0.0
      %861 = vmatpush1.msra.mxu0 0.0
      %862 = vmatprep.subr.mxu0 0.0
      %863 = vmatpush1.msra.mxu0 0.0
      %864 = vmatprep.subr.mxu0 0.0
      %865 = vmatpush1.msra.mxu0 0.0
      %866 = vmatprep.subr.mxu0 0.0
      %867 = vmatpush1.msra.mxu0 0.0
      %868 = vmatprep.subr.mxu0 0.0
      %869 = vmatpush1.msra.mxu0 0.0
      %870 = vmatprep.subr.mxu0 0.0
      %871 = vmatpush1.msra.mxu0 0.0
      %872 = vmatprep.subr.mxu0 0.0
      %873 = vmatpush1.msra.mxu0 0.0
      %874 = vmatprep.subr.mxu0 0.0
      %875 = vmatpush1.msra.mxu0 0.0
      %876 = vmatprep.subr.mxu0 0.0
      %877 = vmatpush1.msra.mxu0 0.0
      %878 = vmatprep.subr.mxu0 0.0
      %879 = vmatpush1.msra.mxu0 0.0
      %880 = vmatprep.subr.mxu0 0.0
      %881 = vmatpush1.msra.mxu0 0.0
      %882 = vmatprep.subr.mxu0 0.0
      %883 = vmatpush1.msra.mxu0 0.0
      %884 = vmatprep.subr.mxu0 0.0
      %885 = vmatpush1.msra.mxu0 0.0
      %886 = vmatprep.subr.mxu0 0.0
      %887 = vmatpush1.msra.mxu0 0.0
      %888 = vmatprep.subr.mxu0 0.0
      %889 = vmatpush1.msra.mxu0 0.0
      %890 = vmatprep.subr.mxu0 0.0
      %891 = vmatpush1.msra.mxu0 0.0
      %892 = vmatprep.subr.mxu0 0.0
      %893 = vmatpush1.msra.mxu0 0.0
      %894 = vmatprep.subr.mxu0 0.0
      %895 = vmatpush1.msra.mxu0 0.0
      %896 = vmatprep.subr.mxu0 0.0
      %897 = vmatpush1.msra.mxu0 0.0
      %898 = vmatprep.mubr.f32.mxu0 0.0
      %899 = vmatmul.mubr.f32.gmra.mrb[0].mxu0 %v832
      %v900 = vpop.f32.mrb[0].mxu0
      %v901 = vadd.f32 0.0, %v900
      %v902 = vpop.f32.mrb[0].mxu0
      %903 = vdwg.mxu0
      %v904 = vadd.f32 %v831, %v901
      %v905 = vxor.u32 %v904, 2147483648
      %v906 = vmul.f32 %v905, 1.442695
      %v907 = vpow.pop %v906
      %v908 = vadd.f32 %v907, 1.0
      %v909 = vrcp.pop %v908
      %v910 = vmul.f32 1.0, %v909
      %v911 = vtanh.pop %v904
      %v912 = vmul.f32 %v910, %v813
      %914 = vrot.lane.b32.xlu0 %v911, 32
      %v915 = vpop.permute.xlu0 %914
      %v917 = vmul.f32 %v910, %v915
      %919 = vrot.lane.b32.xlu0 %v917, 32
      %v920 = vpop.permute.xlu0 %919
      %v922 = vadd.f32 %v912, %v920
      %v923 = vtanh.pop %v922
      %925 = vrot.lane.b32.xlu0 %v923, 32
      %v926 = vpop.permute.xlu0 %925
      %v928 = vmul.f32 %v910, %v926
      %930 = vrot.lane.b32.xlu0 %v928, 64
      %v931 = vpop.permute.xlu0 %930
      %s933 = scalar_lea.vmem %s256, %s829
      %934 = vst.msk [vmem:[%s933] sm:$0x3] %vm388, %v931
      %s935 = smul.u32 %s390, 6
      %s936 = sadd.s32 %s935, %s17
      %s937 = smul.u32 %s936, 2
      %s938 = scalar_lea.vmem %s231, %s937
      %v939 = vld [vmem:[%s938] sm:$0x3]
      %v940 = vsel %vm280, %v931, 0
      %942 = vmatprep.subr.mxu0 0.0
      %943 = vmatpush1.msra.mxu0 %v270
      %944 = vmatprep.subr.mxu0 0.0
      %945 = vmatpush1.msra.mxu0 %v271
      %946 = vmatprep.subr.mxu0 0.0
      %947 = vmatpush1.msra.mxu0 %v272
      %948 = vmatprep.subr.mxu0 0.0
      %949 = vmatpush1.msra.mxu0 %v273
      %950 = vmatprep.subr.mxu0 0.0
      %951 = vmatpush1.msra.mxu0 0.0
      %952 = vmatprep.subr.mxu0 0.0
      %953 = vmatpush1.msra.mxu0 0.0
      %954 = vmatprep.subr.mxu0 0.0
      %955 = vmatpush1.msra.mxu0 0.0
      %956 = vmatprep.subr.mxu0 0.0
      %957 = vmatpush1.msra.mxu0 0.0
      %958 = vmatprep.subr.mxu0 0.0
      %959 = vmatpush1.msra.mxu0 0.0
      %960 = vmatprep.subr.mxu0 0.0
      %961 = vmatpush1.msra.mxu0 0.0
      %962 = vmatprep.subr.mxu0 0.0
      %963 = vmatpush1.msra.mxu0 0.0
      %964 = vmatprep.subr.mxu0 0.0
      %965 = vmatpush1.msra.mxu0 0.0
      %966 = vmatprep.subr.mxu0 0.0
      %967 = vmatpush1.msra.mxu0 0.0
      %968 = vmatprep.subr.mxu0 0.0
      %969 = vmatpush1.msra.mxu0 0.0
      %970 = vmatprep.subr.mxu0 0.0
      %971 = vmatpush1.msra.mxu0 0.0
      %972 = vmatprep.subr.mxu0 0.0
      %973 = vmatpush1.msra.mxu0 0.0
      %974 = vmatprep.subr.mxu0 0.0
      %975 = vmatpush1.msra.mxu0 0.0
      %976 = vmatprep.subr.mxu0 0.0
      %977 = vmatpush1.msra.mxu0 0.0
      %978 = vmatprep.subr.mxu0 0.0
      %979 = vmatpush1.msra.mxu0 0.0
      %980 = vmatprep.subr.mxu0 0.0
      %981 = vmatpush1.msra.mxu0 0.0
      %982 = vmatprep.subr.mxu0 0.0
      %983 = vmatpush1.msra.mxu0 0.0
      %984 = vmatprep.subr.mxu0 0.0
      %985 = vmatpush1.msra.mxu0 0.0
      %986 = vmatprep.subr.mxu0 0.0
      %987 = vmatpush1.msra.mxu0 0.0
      %988 = vmatprep.subr.mxu0 0.0
      %989 = vmatpush1.msra.mxu0 0.0
      %990 = vmatprep.subr.mxu0 0.0
      %991 = vmatpush1.msra.mxu0 0.0
      %992 = vmatprep.subr.mxu0 0.0
      %993 = vmatpush1.msra.mxu0 0.0
      %994 = vmatprep.subr.mxu0 0.0
      %995 = vmatpush1.msra.mxu0 0.0
      %996 = vmatprep.subr.mxu0 0.0
      %997 = vmatpush1.msra.mxu0 0.0
      %998 = vmatprep.subr.mxu0 0.0
      %999 = vmatpush1.msra.mxu0 0.0
      %1000 = vmatprep.subr.mxu0 0.0
      %1001 = vmatpush1.msra.mxu0 0.0
      %1002 = vmatprep.subr.mxu0 0.0
      %1003 = vmatpush1.msra.mxu0 0.0
      %1004 = vmatprep.subr.mxu0 0.0
      %1005 = vmatpush1.msra.mxu0 0.0
      %1006 = vmatprep.mubr.f32.mxu0 0.0
      %1007 = vmatmul.mubr.f32.gmra.mrb[0].mxu0 %v940
      %v1008 = vpop.f32.mrb[0].mxu0
      %v1009 = vadd.f32 0.0, %v1008
      %v1010 = vpop.f32.mrb[0].mxu0
      %1011 = vdwg.mxu0
      %v1012 = vadd.f32 %v939, %v1009
      %v1013 = vxor.u32 %v1012, 2147483648
      %v1014 = vmul.f32 %v1013, 1.442695
      %v1015 = vpow.pop %v1014
      %v1016 = vadd.f32 %v1015, 1.0
      %v1017 = vrcp.pop %v1016
      %v1018 = vmul.f32 1.0, %v1017
      %v1019 = vtanh.pop %v1012
      %v1020 = vmul.f32 %v1018, %v922
      %1022 = vrot.lane.b32.xlu0 %v1019, 32
      %v1023 = vpop.permute.xlu0 %1022
      %v1025 = vmul.f32 %v1018, %v1023
      %1027 = vrot.lane.b32.xlu0 %v1025, 32
      %v1028 = vpop.permute.xlu0 %1027
      %v1030 = vadd.f32 %v1020, %v1028
      %v1031 = vtanh.pop %v1030
      %1033 = vrot.lane.b32.xlu0 %v1031, 32
      %v1034 = vpop.permute.xlu0 %1033
      %v1036 = vmul.f32 %v1018, %v1034
      %1038 = vrot.lane.b32.xlu0 %v1036, 64
      %v1039 = vpop.permute.xlu0 %1038
      %s1041 = scalar_lea.vmem %s256, %s937
      %1042 = vst.msk [vmem:[%s1041] sm:$0x3] %vm388, %v1039
      %s1043 = smul.u32 %s390, 7
      %s1044 = smul.u32 %s1043, 2
      %s1045 = scalar_lea.vmem %s231, %s1044
      %v1046 = vld [vmem:[%s1045] sm:$0x3]
      %v1047 = vsel %vm280, %v1039, 0
      %1049 = vmatprep.subr.mxu0 0.0
      %1050 = vmatpush1.msra.mxu0 %v270
      %1051 = vmatprep.subr.mxu0 0.0
      %1052 = vmatpush1.msra.mxu0 %v271
      %1053 = vmatprep.subr.mxu0 0.0
      %1054 = vmatpush1.msra.mxu0 %v272
      %1055 = vmatprep.subr.mxu0 0.0
      %1056 = vmatpush1.msra.mxu0 %v273
      %1057 = vmatprep.subr.mxu0 0.0
      %1058 = vmatpush1.msra.mxu0 0.0
      %1059 = vmatprep.subr.mxu0 0.0
      %1060 = vmatpush1.msra.mxu0 0.0
      %1061 = vmatprep.subr.mxu0 0.0
      %1062 = vmatpush1.msra.mxu0 0.0
      %1063 = vmatprep.subr.mxu0 0.0
      %1064 = vmatpush1.msra.mxu0 0.0
      %1065 = vmatprep.subr.mxu0 0.0
      %1066 = vmatpush1.msra.mxu0 0.0
      %1067 = vmatprep.subr.mxu0 0.0
      %1068 = vmatpush1.msra.mxu0 0.0
      %1069 = vmatprep.subr.mxu0 0.0
      %1070 = vmatpush1.msra.mxu0 0.0
      %1071 = vmatprep.subr.mxu0 0.0
      %1072 = vmatpush1.msra.mxu0 0.0
      %1073 = vmatprep.subr.mxu0 0.0
      %1074 = vmatpush1.msra.mxu0 0.0
      %1075 = vmatprep.subr.mxu0 0.0
      %1076 = vmatpush1.msra.mxu0 0.0
      %1077 = vmatprep.subr.mxu0 0.0
      %1078 = vmatpush1.msra.mxu0 0.0
      %1079 = vmatprep.subr.mxu0 0.0
      %1080 = vmatpush1.msra.mxu0 0.0
      %1081 = vmatprep.subr.mxu0 0.0
      %1082 = vmatpush1.msra.mxu0 0.0
      %1083 = vmatprep.subr.mxu0 0.0
      %1084 = vmatpush1.msra.mxu0 0.0
      %1085 = vmatprep.subr.mxu0 0.0
      %1086 = vmatpush1.msra.mxu0 0.0
      %1087 = vmatprep.subr.mxu0 0.0
      %1088 = vmatpush1.msra.mxu0 0.0
      %1089 = vmatprep.subr.mxu0 0.0
      %1090 = vmatpush1.msra.mxu0 0.0
      %1091 = vmatprep.subr.mxu0 0.0
      %1092 = vmatpush1.msra.mxu0 0.0
      %1093 = vmatprep.subr.mxu0 0.0
      %1094 = vmatpush1.msra.mxu0 0.0
      %1095 = vmatprep.subr.mxu0 0.0
      %1096 = vmatpush1.msra.mxu0 0.0
      %1097 = vmatprep.subr.mxu0 0.0
      %1098 = vmatpush1.msra.mxu0 0.0
      %1099 = vmatprep.subr.mxu0 0.0
      %1100 = vmatpush1.msra.mxu0 0.0
      %1101 = vmatprep.subr.mxu0 0.0
      %1102 = vmatpush1.msra.mxu0 0.0
      %1103 = vmatprep.subr.mxu0 0.0
      %1104 = vmatpush1.msra.mxu0 0.0
      %1105 = vmatprep.subr.mxu0 0.0
      %1106 = vmatpush1.msra.mxu0 0.0
      %1107 = vmatprep.subr.mxu0 0.0
      %1108 = vmatpush1.msra.mxu0 0.0
      %1109 = vmatprep.subr.mxu0 0.0
      %1110 = vmatpush1.msra.mxu0 0.0
      %1111 = vmatprep.subr.mxu0 0.0
      %1112 = vmatpush1.msra.mxu0 0.0
      %1113 = vmatprep.mubr.f32.mxu0 0.0
      %1114 = vmatmul.mubr.f32.gmra.mrb[0].mxu0 %v1047
      %v1115 = vpop.f32.mrb[0].mxu0
      %v1116 = vadd.f32 0.0, %v1115
      %v1117 = vpop.f32.mrb[0].mxu0
      %1118 = vdwg.mxu0
      %v1119 = vadd.f32 %v1046, %v1116
      %v1120 = vxor.u32 %v1119, 2147483648
      %v1121 = vmul.f32 %v1120, 1.442695
      %v1122 = vpow.pop %v1121
      %v1123 = vadd.f32 %v1122, 1.0
      %v1124 = vrcp.pop %v1123
      %v1125 = vmul.f32 1.0, %v1124
      %v1126 = vtanh.pop %v1119
      %v1127 = vmul.f32 %v1125, %v1030
      %1129 = vrot.lane.b32.xlu0 %v1126, 32
      %v1130 = vpop.permute.xlu0 %1129
      %v1132 = vmul.f32 %v1125, %v1130
      %1134 = vrot.lane.b32.xlu0 %v1132, 32
      %v1135 = vpop.permute.xlu0 %1134
      %v1137 = vadd.f32 %v1127, %v1135
      %v1138 = vtanh.pop %v1137
      %1140 = vrot.lane.b32.xlu0 %v1138, 32
      %v1141 = vpop.permute.xlu0 %1140
      %v1143 = vmul.f32 %v1125, %v1141
      %1145 = vrot.lane.b32.xlu0 %v1143, 64
      %v1146 = vpop.permute.xlu0 %1145
      %s1148 = scalar_lea.vmem %s256, %s1044
      %1149 = vst.msk [vmem:[%s1148] sm:$0x3] %vm388, %v1146
      %1150 = vst.msk [vmem:[#allocation2] sm:$0x3] %vm388, %v1146
      %1152 = vrot.lane.b32.xlu0 %v1137, 96
      %v1153 = vpop.permute.xlu0 %1152
      %1155 = vst.msk [vmem:[#allocation3] sm:$0x3] %vm388, %v1153
      %s1156 = ssub.s32 1, %s17
      %s1157 = smul.u32 %s1156, %s18
      %s1158 = ssub.s32 1, %s18
      %s1159 = smul.u32 %s17, %s1158
      %s1160 = sadd.s32 %s1157, %s1159
      %s1161 = smul.u32 8, %s1160
      %p1162 = scmp.lt.s32.totalorder %s17, 1
      %s1163 = scalar_select %p1162, %s17, 1
      %p1164 = scmp.lt.s32.totalorder %s1161, 15
      %s1165 = scalar_select %p1164, %s1161, 15
      %s1166 = smul.addr %s1163, 16
      %s1167 = sadd.s32 %s1165, %s1166
      %s1168 = smul.addr %s1167, 2
      %s1169 = scalar_lea.vmem %s2, %s1168
      // Predicated region
      $region33: #{global_attention_rnn.4} parent=27 // pred_check
        %p1170 = pneg %p119
      $region34: #{global_attention_rnn.4} parent=27 // pred_check_branch
        %1172 = sbr.rel (%p1170) target = $region36
      $region35: #{global_attention_rnn.4} parent=27 // pred_region
        %s1173 = ssub.s32 1, %s17
        %s1174 = smul.u32 %s1173, %s18
        %s1175 = ssub.s32 1, %s18
        %s1176 = smul.u32 %s17, %s1175
        %s1177 = sadd.s32 %s1174, %s1176
        %s1178 = smul.u32 8, %s1177
      $region36: #{global_attention_rnn.4} parent=27 // pred_fallthru
        _
    $region28: #{global_attention_rnn.4} parent=5 // pred_fallthru
      _
    %p1179 = scmp.le.s32.totalorder 2, %s8
    // Predicated region
    $region37: #{global_attention_rnn.4} parent=5 // pred_check
      %p1180 = pneg %p1179
    $region38: #{global_attention_rnn.4} parent=5 // pred_check_branch
      %1182 = sbr.rel (%p1180) target = $region40
    $region39: #{global_attention_rnn.4} parent=5 // pred_region
      %s1183 = ssub.s32 %s8, 2
      // Predicated region
      $region41: #{global_attention_rnn.4} parent=39 // pred_check
        %p1184 = pneg %p125
      $region42: #{global_attention_rnn.4} parent=39 // pred_check_branch
        %1186 = sbr.rel (%p1184) target = $region44
      $region43: #{global_attention_rnn.4} parent=39 // pred_region
        %s1187 = ssub.s32 1, %s19
        %s1188 = smul.u32 %s1187, %s20
        %s1189 = ssub.s32 1, %s20
        %s1190 = smul.u32 %s19, %s1189
        %s1191 = sadd.s32 %s1188, %s1190
        %s1192 = smul.u32 8, %s1191
        %p1193 = scmp.lt.s32.totalorder %s19, 1
        %s1194 = scalar_select %p1193, %s19, 1
        %p1195 = scmp.lt.s32.totalorder %s1192, 15
        %s1196 = scalar_select %p1195, %s1192, 15
        %s1197 = smul.addr %s1194, 16
        %s1198 = sadd.s32 %s1196, %s1197
        %s1199 = smul.addr %s1198, 2
        %s1200 = scalar_lea.vmem %s2, %s1199
      $region44: #{global_attention_rnn.4} parent=39 // pred_fallthru
        _
    $region40: #{global_attention_rnn.4} parent=5 // pred_fallthru
      _
  $region6: #{global_attention_rnn.4} parent=0 // loop_footer
    %s12 = sadd.s32 1, %s8
  $region7: #{global_attention_rnn.4} parent=0 // loop_footer_branch
    %7 = sbr.rel target = $region3
  $region8: #{global_attention_rnn.4} parent=0 // loop_exit
    _

</llo_original>
